<compile_context>
chip_gen: v6e
topology: v6e:2x2x1
jax: 0.10.0
libtpu: 0.0.40
codegen_flags: <defaults>
</compile_context>

<pallas_src>
import functools

import jax
import jax.numpy as jnp
from jax.experimental import pallas as pl
from jax.experimental.pallas import tpu as pltpu

_LANE = 128     # lane width (last dim)
_SUBLANE = 8    # sublane width (second-to-last dim)


def _round_up(n, m):
    return ((n + m - 1) // m) * m


# ---------------------------------------------------------------------------
# Kernel: one batch-row tile through the full fused 3-layer MLP.
# Weights / biases are VMEM-resident across all grid steps.
# ---------------------------------------------------------------------------
def _mlp_kernel(x_ref, w1_ref, b1_ref, w2_ref, b2_ref, w3_ref, b3_ref, o_ref):
    # bf16 MXU inputs, explicit f32 accumulation, f32 epilogue.
    h = jnp.dot(x_ref[...].astype(jnp.bfloat16), w1_ref[...],
                preferred_element_type=jnp.float32) + b1_ref[...]
    h = jnp.maximum(h, 0.2 * h)                       # LeakyReLU(0.2)

    h = jnp.dot(h.astype(jnp.bfloat16), w2_ref[...],
                preferred_element_type=jnp.float32) + b2_ref[...]
    h = jnp.maximum(h, 0.2 * h)                       # LeakyReLU(0.2)

    y = jnp.dot(h.astype(jnp.bfloat16), w3_ref[...],
                preferred_element_type=jnp.float32) + b3_ref[...]
    o_ref[...] = y.astype(o_ref.dtype)


# ---------------------------------------------------------------------------
# Parameters: PyTorch-style init, then a one-time "pack" step that pads the
# feature dims to lane multiples and casts weights to bf16.
# ---------------------------------------------------------------------------
def make_params(key, nin, nout, nh, dtype=jnp.float32):
    """uniform(-1/sqrt(fan_in), 1/sqrt(fan_in)); weights stored as (in, out)."""
    def linear(k, fi, fo):
        kw, kb = jax.random.split(k)
        bound = 1.0 / float(fi) ** 0.5
        w = jax.random.uniform(kw, (fi, fo), dtype, -bound, bound)
        b = jax.random.uniform(kb, (1, fo), dtype, -bound, bound)
        return w, b
    k1, k2, k3 = jax.random.split(key, 3)
    p = {}
    p["w1"], p["b1"] = linear(k1, nin, nh)
    p["w2"], p["b2"] = linear(k2, nh, nh)
    p["w3"], p["b3"] = linear(k3, nh, nout)
    return p


def pack_params(params, weight_dtype=jnp.bfloat16):
    """Zero-pad nh / nout up to multiples of 128 (lane-dense matmul N-dims and
    unmasked output stores) and cast weights to the MXU-native dtype.  Zero
    padding is exact: padded columns stay 0 through bias-add and LeakyReLU and
    are sliced off after the kernel.  Biases stay f32 (epilogue is f32)."""
    w1, b1 = params["w1"], params["b1"]
    w2, b2 = params["w2"], params["b2"]
    w3, b3 = params["w3"], params["b3"]
    nin, nh = w1.shape
    nout = w3.shape[1]
    nh_p = _round_up(nh, _LANE)
    nout_p = _round_up(nout, _LANE)

    def pad(a, rows, cols):
        return jnp.pad(a, ((0, rows - a.shape[0]), (0, cols - a.shape[1])))

    return {
        "w1": pad(w1, nin, nh_p).astype(weight_dtype),
        "b1": pad(b1, 1, nh_p).astype(jnp.float32),
        "w2": pad(w2, nh_p, nh_p).astype(weight_dtype),
        "b2": pad(b2, 1, nh_p).astype(jnp.float32),
        "w3": pad(w3, nh_p, nout_p).astype(weight_dtype),
        "b3": pad(b3, 1, nout_p).astype(jnp.float32),
    }


# ---------------------------------------------------------------------------
# Wrapper: batch-tiled grid, resident weights, lane-dense output.
# ---------------------------------------------------------------------------
def mlp_forward(x, packed, *, nout, block_rows=512, weight_buffers=1):
    """x: (B, nin) f32 -> (B, nout) f32.  `packed` comes from pack_params;
    `nout` is the true (unpadded) output width."""
    B, nin = x.shape
    w1, b1 = packed["w1"], packed["b1"]
    w2, b2 = packed["w2"], packed["b2"]
    w3, b3 = packed["w3"], packed["b3"]
    nh_p = w1.shape[1]
    nout_p = w3.shape[1]
    assert w1.shape[0] == nin and nh_p % _LANE == 0 and nout_p % _LANE == 0

    # Batch tile: large (default 512 rows) to amortize per-grid-step overhead,
    # multiple of 8, capped so resident weights + fused f32 intermediates +
    # double-buffered activation tiles fit a conservative per-core VMEM budget
    # (v7x has only 64 MiB per TensorCore).
    itemsize = x.dtype.itemsize
    tb = min(_round_up(max(block_rows, _SUBLANE), _SUBLANE), _round_up(B, _SUBLANE))
    weight_bytes = sum(int(a.size) * a.dtype.itemsize
                       for a in (w1, b1, w2, b2, w3, b3)) * max(weight_buffers, 1)
    budget = 40 * 1024 * 1024

    def footprint(rows):
        acts = 2 * rows * (nin + nout_p) * itemsize    # double-buffered x / out tiles
        inter = 4 * rows * max(nh_p, nout_p) * 4       # live f32 intermediates (generous)
        return weight_bytes + acts + inter

    while tb > _SUBLANE and footprint(tb) > budget:
        tb = _round_up(tb // 2, _SUBLANE)

    grid = (pl.cdiv(B, tb),)   # ragged last tile: OOB output rows are masked off

    # Constant-index (resident) weight/bias blocks; single-buffer them so the
    # unchanging blocks are not double-buffered in VMEM.
    w_mode = pl.Buffered(weight_buffers) if weight_buffers != 2 else None

    def wspec(shape):
        if w_mode is None:
            return pl.BlockSpec(shape, lambda i: (0, 0))
        return pl.BlockSpec(shape, lambda i: (0, 0), pipeline_mode=w_mode)

    flops = 2 * B * (nin * nh_p + nh_p * nh_p + nh_p * nout_p)
    bytes_accessed = (x.size * itemsize
                      + weight_bytes // max(weight_buffers, 1)
                      + B * nout_p * itemsize)
    vmem_limit = int(min(max(2 * footprint(tb), 32 * 1024 * 1024), 64 * 1024 * 1024))

    out = pl.pallas_call(
        _mlp_kernel,
        out_shape=jax.ShapeDtypeStruct((B, nout_p), x.dtype),
        grid_spec=pltpu.PrefetchScalarGridSpec(
            num_scalar_prefetch=0,
            grid=grid,
            in_specs=[
                pl.BlockSpec((tb, nin), lambda i: (i, 0)),   # activations: tiled over batch
                wspec((nin, nh_p)),                          # W1 (resident, bf16)
                wspec((1, nh_p)),                            # b1 (f32)
                wspec((nh_p, nh_p)),                         # W2
                wspec((1, nh_p)),                            # b2
                wspec((nh_p, nout_p)),                       # W3
                wspec((1, nout_p)),                          # b3
            ],
            out_specs=pl.BlockSpec((tb, nout_p), lambda i: (i, 0)),
        ),
        compiler_params=pltpu.CompilerParams(
            dimension_semantics=("parallel",),   # shard batch tiles across TCs (v7x)
            vmem_limit_bytes=vmem_limit,
        ),
        cost_estimate=pl.CostEstimate(
            flops=int(flops), transcendentals=0, bytes_accessed=int(bytes_accessed)),
    )(x, w1, b1, w2, b2, w3, b3)

    # TODO(synk): for very large nh (weights no longer VMEM-resident) add a
    # reduction grid axis over nh with an f32 accumulator scratch instead of
    # shrinking the batch tile / un-fusing the layers.
    return out[:, :nout]


# ---------------------------------------------------------------------------
# Pure-JAX references for verification.
# ---------------------------------------------------------------------------
def reference_forward(x, params):
    lrelu = lambda v: jnp.maximum(v, 0.2 * v)
    h = lrelu(x @ params["w1"] + params["b1"])
    h = lrelu(h @ params["w2"] + params["b2"])
    return h @ params["w3"] + params["b3"]


def reference_forward_bf16(x, packed, nout):
    """Same math as the kernel (bf16 MXU inputs, f32 accumulation/epilogue)."""
    lrelu = lambda v: jnp.maximum(v, 0.2 * v)
    h = lrelu(jnp.dot(x.astype(jnp.bfloat16), packed["w1"],
                      preferred_element_type=jnp.float32) + packed["b1"])
    h = lrelu(jnp.dot(h.astype(jnp.bfloat16), packed["w2"],
                      preferred_element_type=jnp.float32) + packed["b2"])
    y = jnp.dot(h.astype(jnp.bfloat16), packed["w3"],
                preferred_element_type=jnp.float32) + packed["b3"]
    return y[:, :nout]


if __name__ == "__main__":
    key = jax.random.PRNGKey(0)
    k_x, k_p = jax.random.split(key)

    # Module-consistent small shapes: nin=16, nh=64, nout=32.
    nin, nh, nout = 16, 64, 32
    B = 1200                                   # 3 batch tiles of 512 (last one ragged)
    x = jax.random.normal(k_x, (B, nin), jnp.float32)
    params = make_params(k_p, nin, nout, nh)   # f32, PyTorch-style layout/init
    packed = pack_params(params)               # lane-padded, bf16 weights

    def run(weight_buffers):
        fwd = jax.jit(functools.partial(mlp_forward, nout=nout, block_rows=512,
                                        weight_buffers=weight_buffers))
        return jax.block_until_ready(fwd(x, packed))

    try:
        out = run(1)       # single-buffered resident weights (preferred)
        wb = 1
    except Exception:
        out = run(2)       # fall back to default double-buffering
        wb = 2

    assert out.shape == (B, nout)

    # Exact-semantics reference (same bf16 weights, f32 accumulation).
    ref_bf16 = reference_forward_bf16(x, packed, nout)
    assert jnp.allclose(out, ref_bf16, atol=1e-4, rtol=1e-4)

    # Sanity check vs. the full-f32 PyTorch-equivalent reference (loose
    # tolerance: kernel weights/activations pass through bf16).
    ref_f32 = reference_forward(x, params)
    assert jnp.allclose(out, ref_f32, atol=5e-2, rtol=5e-2)

    # Ragged, smaller-than-one-tile batch (exercises OOB masking, no padding).
    x2 = jax.random.normal(jax.random.PRNGKey(1), (20, nin), jnp.float32)
    out2 = jax.block_until_ready(
        mlp_forward(x2, packed, nout=nout, weight_buffers=wb))
    assert out2.shape == (20, nout)
    assert jnp.allclose(out2, reference_forward_bf16(x2, packed, nout),
                        atol=1e-4, rtol=1e-4)

    print("KERNEL_OK")
</pallas_src>

<mosaic_0001>
module attributes {stable_mosaic.version = 11 : i64} {
  func.func @_mlp_kernel(%arg0: i32, %arg1: memref<512x16xf32, #tpu.memory_space<vmem>>, %arg2: memref<16x128xbf16, #tpu.memory_space<vmem>>, %arg3: memref<1x128xf32, #tpu.memory_space<vmem>>, %arg4: memref<128x128xbf16, #tpu.memory_space<vmem>>, %arg5: memref<1x128xf32, #tpu.memory_space<vmem>>, %arg6: memref<128x128xbf16, #tpu.memory_space<vmem>>, %arg7: memref<1x128xf32, #tpu.memory_space<vmem>>, %arg8: memref<512x128xf32, #tpu.memory_space<vmem>>) attributes {dimension_semantics = [#tpu.dimension_semantics<parallel>], iteration_bounds = array<i64: 3>, scalar_prefetch = 0 : i64, scratch_operands = 0 : i64, tpu.core_type = #tpu.core_type<tc>, window_params = [{transform_indices = @transform_0, window_bounds = array<i64: 512, 16>}, {pipeline_mode = #tpu.pipeline_mode<synchronous>, transform_indices = @transform_1, window_bounds = array<i64: 16, 128>}, {pipeline_mode = #tpu.pipeline_mode<synchronous>, transform_indices = @transform_2, window_bounds = array<i64: 1, 128>}, {pipeline_mode = #tpu.pipeline_mode<synchronous>, transform_indices = @transform_3, window_bounds = array<i64: 128, 128>}, {pipeline_mode = #tpu.pipeline_mode<synchronous>, transform_indices = @transform_4, window_bounds = array<i64: 1, 128>}, {pipeline_mode = #tpu.pipeline_mode<synchronous>, transform_indices = @transform_5, window_bounds = array<i64: 128, 128>}, {pipeline_mode = #tpu.pipeline_mode<synchronous>, transform_indices = @transform_6, window_bounds = array<i64: 1, 128>}, {transform_indices = @transform_7, window_bounds = array<i64: 512, 128>}]} {
    %c0 = arith.constant 0 : index
    %c0_0 = arith.constant 0 : index
    %0 = vector.load %arg1[%c0, %c0_0] : memref<512x16xf32, #tpu.memory_space<vmem>>, vector<512x16xf32>
    %1 = arith.truncf %0 : vector<512x16xf32> to vector<512x16xbf16>
    %c0_1 = arith.constant 0 : index
    %c0_2 = arith.constant 0 : index
    %2 = vector.load %arg2[%c0_1, %c0_2] : memref<16x128xbf16, #tpu.memory_space<vmem>>, vector<16x128xbf16>
    %cst = arith.constant dense<0.000000e+00> : vector<512x128xf32>
    %3 = tpu.matmul %1, %2, %cst {dimension_numbers = #tpu.dot_dimension_numbers<[1], [0], [0], [1], [0, 0, 1, 1], [], []>} : vector<512x16xbf16>, vector<16x128xbf16>, vector<512x128xf32> -> vector<512x128xf32>
    %c0_3 = arith.constant 0 : index
    %c0_4 = arith.constant 0 : index
    %4 = vector.load %arg3[%c0_3, %c0_4] : memref<1x128xf32, #tpu.memory_space<vmem>>, vector<1x128xf32>
    %5 = vector.broadcast %4 : vector<1x128xf32> to vector<512x128xf32>
    %6 = arith.addf %3, %5 : vector<512x128xf32>
    %cst_5 = arith.constant 2.000000e-01 : f32
    %7 = vector.broadcast %cst_5 : f32 to vector<512x128xf32>
    %8 = arith.mulf %7, %6 : vector<512x128xf32>
    %9 = arith.maximumf %6, %8 : vector<512x128xf32>
    %10 = arith.truncf %9 : vector<512x128xf32> to vector<512x128xbf16>
    %c0_6 = arith.constant 0 : index
    %c0_7 = arith.constant 0 : index
    %11 = vector.load %arg4[%c0_6, %c0_7] : memref<128x128xbf16, #tpu.memory_space<vmem>>, vector<128x128xbf16>
    %cst_8 = arith.constant dense<0.000000e+00> : vector<512x128xf32>
    %12 = tpu.matmul %10, %11, %cst_8 {dimension_numbers = #tpu.dot_dimension_numbers<[1], [0], [0], [1], [0, 0, 1, 1], [], []>} : vector<512x128xbf16>, vector<128x128xbf16>, vector<512x128xf32> -> vector<512x128xf32>
    %c0_9 = arith.constant 0 : index
    %c0_10 = arith.constant 0 : index
    %13 = vector.load %arg5[%c0_9, %c0_10] : memref<1x128xf32, #tpu.memory_space<vmem>>, vector<1x128xf32>
    %14 = vector.broadcast %13 : vector<1x128xf32> to vector<512x128xf32>
    %15 = arith.addf %12, %14 : vector<512x128xf32>
    %cst_11 = arith.constant 2.000000e-01 : f32
    %16 = vector.broadcast %cst_11 : f32 to vector<512x128xf32>
    %17 = arith.mulf %16, %15 : vector<512x128xf32>
    %18 = arith.maximumf %15, %17 : vector<512x128xf32>
    %19 = arith.truncf %18 : vector<512x128xf32> to vector<512x128xbf16>
    %c0_12 = arith.constant 0 : index
    %c0_13 = arith.constant 0 : index
    %20 = vector.load %arg6[%c0_12, %c0_13] : memref<128x128xbf16, #tpu.memory_space<vmem>>, vector<128x128xbf16>
    %cst_14 = arith.constant dense<0.000000e+00> : vector<512x128xf32>
    %21 = tpu.matmul %19, %20, %cst_14 {dimension_numbers = #tpu.dot_dimension_numbers<[1], [0], [0], [1], [0, 0, 1, 1], [], []>} : vector<512x128xbf16>, vector<128x128xbf16>, vector<512x128xf32> -> vector<512x128xf32>
    %c0_15 = arith.constant 0 : index
    %c0_16 = arith.constant 0 : index
    %22 = vector.load %arg7[%c0_15, %c0_16] : memref<1x128xf32, #tpu.memory_space<vmem>>, vector<1x128xf32>
    %23 = vector.broadcast %22 : vector<1x128xf32> to vector<512x128xf32>
    %24 = arith.addf %21, %23 : vector<512x128xf32>
    %c0_17 = arith.constant 0 : index
    %c0_18 = arith.constant 0 : index
    %25 = vector.load %arg8[%c0_17, %c0_18] : memref<512x128xf32, #tpu.memory_space<vmem>>, vector<512x128xf32>
    tpu.vector_store %arg8[%c0_17, %c0_18], %24 {strides = array<i32>} : memref<512x128xf32, #tpu.memory_space<vmem>>, vector<512x128xf32>,
    return
  }
  func.func @transform_0(%arg0: i32) -> (i32, i32) {
    %c0_i32 = arith.constant 0 : i32
    %c0_i32_0 = arith.constant 0 : i32
    return %arg0, %c0_i32 : i32, i32
  }
  func.func @transform_1(%arg0: i32) -> (i32, i32) {
    %c0_i32 = arith.constant 0 : i32
    %c0_i32_0 = arith.constant 0 : i32
    %c0_i32_1 = arith.constant 0 : i32
    return %c0_i32, %c0_i32_0 : i32, i32
  }
  func.func @transform_2(%arg0: i32) -> (i32, i32) {
    %c0_i32 = arith.constant 0 : i32
    %c0_i32_0 = arith.constant 0 : i32
    %c0_i32_1 = arith.constant 0 : i32
    return %c0_i32, %c0_i32_0 : i32, i32
  }
  func.func @transform_3(%arg0: i32) -> (i32, i32) {
    %c0_i32 = arith.constant 0 : i32
    %c0_i32_0 = arith.constant 0 : i32
    %c0_i32_1 = arith.constant 0 : i32
    return %c0_i32, %c0_i32_0 : i32, i32
  }
  func.func @transform_4(%arg0: i32) -> (i32, i32) {
    %c0_i32 = arith.constant 0 : i32
    %c0_i32_0 = arith.constant 0 : i32
    %c0_i32_1 = arith.constant 0 : i32
    return %c0_i32, %c0_i32_0 : i32, i32
  }
  func.func @transform_5(%arg0: i32) -> (i32, i32) {
    %c0_i32 = arith.constant 0 : i32
    %c0_i32_0 = arith.constant 0 : i32
    %c0_i32_1 = arith.constant 0 : i32
    return %c0_i32, %c0_i32_0 : i32, i32
  }
  func.func @transform_6(%arg0: i32) -> (i32, i32) {
    %c0_i32 = arith.constant 0 : i32
    %c0_i32_0 = arith.constant 0 : i32
    %c0_i32_1 = arith.constant 0 : i32
    return %c0_i32, %c0_i32_0 : i32, i32
  }
  func.func @transform_7(%arg0: i32) -> (i32, i32) {
    %c0_i32 = arith.constant 0 : i32
    %c0_i32_0 = arith.constant 0 : i32
    return %arg0, %c0_i32 : i32, i32
  }
}

module attributes {stable_mosaic.version = 11 : i64} {
  func.func @_mlp_kernel(%arg0: i32, %arg1: memref<512x16xf32, #tpu.memory_space<vmem>>, %arg2: memref<16x128xbf16, #tpu.memory_space<vmem>>, %arg3: memref<1x128xf32, #tpu.memory_space<vmem>>, %arg4: memref<128x128xbf16, #tpu.memory_space<vmem>>, %arg5: memref<1x128xf32, #tpu.memory_space<vmem>>, %arg6: memref<128x128xbf16, #tpu.memory_space<vmem>>, %arg7: memref<1x128xf32, #tpu.memory_space<vmem>>, %arg8: memref<512x128xf32, #tpu.memory_space<vmem>>) attributes {dimension_semantics = [#tpu.dimension_semantics<parallel>], iteration_bounds = array<i64: 3>, scalar_prefetch = 0 : i64, scratch_operands = 0 : i64, tpu.core_type = #tpu.core_type<tc>, window_params = [{transform_indices = @transform_0, window_bounds = array<i64: 512, 16>}, {pipeline_mode = #tpu.pipeline_mode<synchronous>, transform_indices = @transform_1, window_bounds = array<i64: 16, 128>}, {pipeline_mode = #tpu.pipeline_mode<synchronous>, transform_indices = @transform_2, window_bounds = array<i64: 1, 128>}, {pipeline_mode = #tpu.pipeline_mode<synchronous>, transform_indices = @transform_3, window_bounds = array<i64: 128, 128>}, {pipeline_mode = #tpu.pipeline_mode<synchronous>, transform_indices = @transform_4, window_bounds = array<i64: 1, 128>}, {pipeline_mode = #tpu.pipeline_mode<synchronous>, transform_indices = @transform_5, window_bounds = array<i64: 128, 128>}, {pipeline_mode = #tpu.pipeline_mode<synchronous>, transform_indices = @transform_6, window_bounds = array<i64: 1, 128>}, {transform_indices = @transform_7, window_bounds = array<i64: 512, 128>}]} {
    %c0 = arith.constant 0 : index
    %c0_0 = arith.constant 0 : index
    %0 = vector.load %arg1[%c0, %c0_0] : memref<512x16xf32, #tpu.memory_space<vmem>>, vector<512x16xf32>
    %1 = arith.truncf %0 : vector<512x16xf32> to vector<512x16xbf16>
    %c0_1 = arith.constant 0 : index
    %c0_2 = arith.constant 0 : index
    %2 = vector.load %arg2[%c0_1, %c0_2] : memref<16x128xbf16, #tpu.memory_space<vmem>>, vector<16x128xbf16>
    %cst = arith.constant dense<0.000000e+00> : vector<512x128xf32>
    %3 = tpu.matmul %1, %2, %cst {dimension_numbers = #tpu.dot_dimension_numbers<[1], [0], [0], [1], [0, 0, 1, 1], [], []>} : vector<512x16xbf16>, vector<16x128xbf16>, vector<512x128xf32> -> vector<512x128xf32>
    %c0_3 = arith.constant 0 : index
    %c0_4 = arith.constant 0 : index
    %4 = vector.load %arg3[%c0_3, %c0_4] : memref<1x128xf32, #tpu.memory_space<vmem>>, vector<1x128xf32>
    %5 = vector.broadcast %4 : vector<1x128xf32> to vector<512x128xf32>
    %6 = arith.addf %3, %5 : vector<512x128xf32>
    %cst_5 = arith.constant 2.000000e-01 : f32
    %7 = vector.broadcast %cst_5 : f32 to vector<512x128xf32>
    %8 = arith.mulf %7, %6 : vector<512x128xf32>
    %9 = arith.maximumf %6, %8 : vector<512x128xf32>
    %10 = arith.truncf %9 : vector<512x128xf32> to vector<512x128xbf16>
    %c0_6 = arith.constant 0 : index
    %c0_7 = arith.constant 0 : index
    %11 = vector.load %arg4[%c0_6, %c0_7] : memref<128x128xbf16, #tpu.memory_space<vmem>>, vector<128x128xbf16>
    %cst_8 = arith.constant dense<0.000000e+00> : vector<512x128xf32>
    %12 = tpu.matmul %10, %11, %cst_8 {dimension_numbers = #tpu.dot_dimension_numbers<[1], [0], [0], [1], [0, 0, 1, 1], [], []>} : vector<512x128xbf16>, vector<128x128xbf16>, vector<512x128xf32> -> vector<512x128xf32>
    %c0_9 = arith.constant 0 : index
    %c0_10 = arith.constant 0 : index
    %13 = vector.load %arg5[%c0_9, %c0_10] : memref<1x128xf32, #tpu.memory_space<vmem>>, vector<1x128xf32>
    %14 = vector.broadcast %13 : vector<1x128xf32> to vector<512x128xf32>
    %15 = arith.addf %12, %14 : vector<512x128xf32>
    %cst_11 = arith.constant 2.000000e-01 : f32
    %16 = vector.broadcast %cst_11 : f32 to vector<512x128xf32>
    %17 = arith.mulf %16, %15 : vector<512x128xf32>
    %18 = arith.maximumf %15, %17 : vector<512x128xf32>
    %19 = arith.truncf %18 : vector<512x128xf32> to vector<512x128xbf16>
    %c0_12 = arith.constant 0 : index
    %c0_13 = arith.constant 0 : index
    %20 = vector.load %arg6[%c0_12, %c0_13] : memref<128x128xbf16, #tpu.memory_space<vmem>>, vector<128x128xbf16>
    %cst_14 = arith.constant dense<0.000000e+00> : vector<512x128xf32>
    %21 = tpu.matmul %19, %20, %cst_14 {dimension_numbers = #tpu.dot_dimension_numbers<[1], [0], [0], [1], [0, 0, 1, 1], [], []>} : vector<512x128xbf16>, vector<128x128xbf16>, vector<512x128xf32> -> vector<512x128xf32>
    %c0_15 = arith.constant 0 : index
    %c0_16 = arith.constant 0 : index
    %22 = vector.load %arg7[%c0_15, %c0_16] : memref<1x128xf32, #tpu.memory_space<vmem>>, vector<1x128xf32>
    %23 = vector.broadcast %22 : vector<1x128xf32> to vector<512x128xf32>
    %24 = arith.addf %21, %23 : vector<512x128xf32>
    %c0_17 = arith.constant 0 : index
    %c0_18 = arith.constant 0 : index
    %25 = vector.load %arg8[%c0_17, %c0_18] : memref<512x128xf32, #tpu.memory_space<vmem>>, vector<512x128xf32>
    tpu.vector_store %arg8[%c0_17, %c0_18], %24 {strides = array<i32>} : memref<512x128xf32, #tpu.memory_space<vmem>>, vector<512x128xf32>,
    return
  }
  func.func @transform_0(%arg0: i32) -> (i32, i32) {
    %c0_i32 = arith.constant 0 : i32
    %c0_i32_0 = arith.constant 0 : i32
    return %arg0, %c0_i32 : i32, i32
  }
  func.func @transform_1(%arg0: i32) -> (i32, i32) {
    %c0_i32 = arith.constant 0 : i32
    %c0_i32_0 = arith.constant 0 : i32
    %c0_i32_1 = arith.constant 0 : i32
    return %c0_i32, %c0_i32_0 : i32, i32
  }
  func.func @transform_2(%arg0: i32) -> (i32, i32) {
    %c0_i32 = arith.constant 0 : i32
    %c0_i32_0 = arith.constant 0 : i32
    %c0_i32_1 = arith.constant 0 : i32
    return %c0_i32, %c0_i32_0 : i32, i32
  }
  func.func @transform_3(%arg0: i32) -> (i32, i32) {
    %c0_i32 = arith.constant 0 : i32
    %c0_i32_0 = arith.constant 0 : i32
    %c0_i32_1 = arith.constant 0 : i32
    return %c0_i32, %c0_i32_0 : i32, i32
  }
  func.func @transform_4(%arg0: i32) -> (i32, i32) {
    %c0_i32 = arith.constant 0 : i32
    %c0_i32_0 = arith.constant 0 : i32
    %c0_i32_1 = arith.constant 0 : i32
    return %c0_i32, %c0_i32_0 : i32, i32
  }
  func.func @transform_5(%arg0: i32) -> (i32, i32) {
    %c0_i32 = arith.constant 0 : i32
    %c0_i32_0 = arith.constant 0 : i32
    %c0_i32_1 = arith.constant 0 : i32
    return %c0_i32, %c0_i32_0 : i32, i32
  }
  func.func @transform_6(%arg0: i32) -> (i32, i32) {
    %c0_i32 = arith.constant 0 : i32
    %c0_i32_0 = arith.constant 0 : i32
    %c0_i32_1 = arith.constant 0 : i32
    return %c0_i32, %c0_i32_0 : i32, i32
  }
  func.func @transform_7(%arg0: i32) -> (i32, i32) {
    %c0_i32 = arith.constant 0 : i32
    %c0_i32_0 = arith.constant 0 : i32
    return %arg0, %c0_i32 : i32, i32
  }
}

</mosaic_0001>

<llo_original>
// kernel: mlp_forward.1
$region0: #{mlp_forward.1}
  #allocation0 [shape = 'u32[]', space=smem, size = 0x4, offset = 0x4, fixed_abs, tag = 'smem constant byte address 0x4 - core index']
  #allocation1 [shape = 'u32[144,128]{1,0:T(1,128)}', space=vmem, size = 0x12000, scoped, tag = 'internal scratch']
  %s0 = inlined_call_operand.vmem [shape: f32[1200,16], index: 0, kind: input, shape index: {}]
  %s1 = inlined_call_operand.vmem [shape: bf16[16,128], index: 1, kind: input, shape index: {}]
  %s2 = inlined_call_operand.vmem [shape: f32[1,128], index: 2, kind: input, shape index: {}]
  %s3 = inlined_call_operand.vmem [shape: bf16[128,128], index: 3, kind: input, shape index: {}]
  %s4 = inlined_call_operand.vmem [shape: f32[1,128], index: 4, kind: input, shape index: {}]
  %s5 = inlined_call_operand.vmem [shape: bf16[128,128], index: 5, kind: input, shape index: {}]
  %s6 = inlined_call_operand.vmem [shape: f32[1,128], index: 6, kind: input, shape index: {}]
  %s7 = inlined_call_operand.vmem [shape: f32[1200,128], index: 7, kind: output, shape index: {}]
  %s8 = sld [smem:[#allocation0]]
  $region109: #{mlp_forward.1} parent=0
    _
  %s10 = ssub.s32 1, %s8
  %s11 = scalar_select 0, %s10, %s8
  $region1: #{mlp_forward.1} parent=0
    #allocation2 [shape = 'u8[524288]{0}', space=vmem, size = 0x80000, scoped, tag = 'output window, operand 0']
    loop: start=0, step=1, limit=5
    $region2: #{mlp_forward.1} parent=1 // loop_pre_header
      _
    $region3: #{mlp_forward.1} parent=1 // loop_header
      %s13 = sphi 0, %s17
      %p14 = scmp.ge.s32.totalorder %s13, 5
      %s23 = sphi 0, %s25
      %s26 = sphi 0, %s23
      %s27 = sphi 0, %s26
      %s43 = sphi 0, %s27
      %s47 = sphi 0, %s47
      %s49 = sphi 0, %s47
      %s50 = sphi 0, %s49
      %s64 = sphi 0, %s50
      %s68 = sphi 0, %s68
      %s70 = sphi 0, %s68
      %s71 = sphi 0, %s70
      %s85 = sphi 0, %s71
      %s89 = sphi 0, %s89
      %s91 = sphi 0, %s89
      %s92 = sphi 0, %s91
      %s106 = sphi 0, %s92
      %s110 = sphi 0, %s110
      %s112 = sphi 0, %s110
      %s113 = sphi 0, %s112
      %s127 = sphi 0, %s113
      %s131 = sphi 0, %s131
      %s133 = sphi 0, %s131
      %s134 = sphi 0, %s133
      %s148 = sphi 0, %s134
      %s152 = sphi 0, %s152
      %s154 = sphi 0, %s152
      %s155 = sphi 0, %s154
      %s169 = sphi 0, %s155
      %s175 = sphi 0, %s177
      %s178 = sphi 0, %s175
      %s179 = sphi 0, %s178
      %s195 = sphi 0, %s179
    $region4: #{mlp_forward.1} parent=1 // loop_header_branch
      %16 = sbr.rel (%p14) target = $region8
    $region5: #{mlp_forward.1} parent=1 // loop_body
      %s18 = ssub.s32 %s13, 1
      %s19 = ssub.s32 %s13, 2
      %s20 = sadd.s32 %s13, 1
      %s21 = ssub.s32 %s13, %s20
      %p22 = scmp.eq.s32.totalorder %s21, 0
      %s24 = sadd.s32 %s23, 1
      %s25 = scalar_select %p22, %s23, %s24
      %p28 = pneg %p22
      %p29 = scmp.eq.s32.totalorder %s13, 2
      %p30 = por %p28, %p29
      %p31 = scmp.ne.s32.totalorder %s23, %s26
      %p32 = scmp.eq.s32.totalorder %s13, 0
      %p33 = por %p31, %p32
      %p34 = scmp.ne.s32.totalorder %s23, %s26
      %p35 = scmp.eq.s32.totalorder %s18, 2
      %p36 = por %p34, %p35
      %p37 = scmp.ne.s32.totalorder %s26, %s27
      %p38 = scmp.eq.s32.totalorder %s18, 0
      %p39 = por %p37, %p38
      %p40 = scmp.ne.s32.totalorder %s26, %s27
      %p41 = scmp.eq.s32.totalorder %s19, 2
      %p42 = por %p40, %p41
      %p44 = scmp.ne.s32.totalorder %s27, %s43
      %p45 = scmp.eq.s32.totalorder %s19, 0
      %p46 = por %p44, %p45
      %s48 = sadd.s32 %s47, 1
      %p51 = scmp.eq.s32.totalorder %s13, 2
      %p52 = scmp.ne.s32.totalorder %s47, %s49
      %p53 = scmp.eq.s32.totalorder %s13, 0
      %p54 = por %p52, %p53
      %p55 = scmp.ne.s32.totalorder %s47, %s49
      %p56 = scmp.eq.s32.totalorder %s18, 2
      %p57 = por %p55, %p56
      %p58 = scmp.ne.s32.totalorder %s49, %s50
      %p59 = scmp.eq.s32.totalorder %s18, 0
      %p60 = por %p58, %p59
      %p61 = scmp.ne.s32.totalorder %s49, %s50
      %p62 = scmp.eq.s32.totalorder %s19, 2
      %p63 = por %p61, %p62
      %p65 = scmp.ne.s32.totalorder %s50, %s64
      %p66 = scmp.eq.s32.totalorder %s19, 0
      %p67 = por %p65, %p66
      %s69 = sadd.s32 %s68, 1
      %p72 = scmp.eq.s32.totalorder %s13, 2
      %p73 = scmp.ne.s32.totalorder %s68, %s70
      %p74 = scmp.eq.s32.totalorder %s13, 0
      %p75 = por %p73, %p74
      %p76 = scmp.ne.s32.totalorder %s68, %s70
      %p77 = scmp.eq.s32.totalorder %s18, 2
      %p78 = por %p76, %p77
      %p79 = scmp.ne.s32.totalorder %s70, %s71
      %p80 = scmp.eq.s32.totalorder %s18, 0
      %p81 = por %p79, %p80
      %p82 = scmp.ne.s32.totalorder %s70, %s71
      %p83 = scmp.eq.s32.totalorder %s19, 2
      %p84 = por %p82, %p83
      %p86 = scmp.ne.s32.totalorder %s71, %s85
      %p87 = scmp.eq.s32.totalorder %s19, 0
      %p88 = por %p86, %p87
      %s90 = sadd.s32 %s89, 1
      %p93 = scmp.eq.s32.totalorder %s13, 2
      %p94 = scmp.ne.s32.totalorder %s89, %s91
      %p95 = scmp.eq.s32.totalorder %s13, 0
      %p96 = por %p94, %p95
      %p97 = scmp.ne.s32.totalorder %s89, %s91
      %p98 = scmp.eq.s32.totalorder %s18, 2
      %p99 = por %p97, %p98
      %p100 = scmp.ne.s32.totalorder %s91, %s92
      %p101 = scmp.eq.s32.totalorder %s18, 0
      %p102 = por %p100, %p101
      %p103 = scmp.ne.s32.totalorder %s91, %s92
      %p104 = scmp.eq.s32.totalorder %s19, 2
      %p105 = por %p103, %p104
      %p107 = scmp.ne.s32.totalorder %s92, %s106
      %p108 = scmp.eq.s32.totalorder %s19, 0
      %p109 = por %p107, %p108
      %s111 = sadd.s32 %s110, 1
      %p114 = scmp.eq.s32.totalorder %s13, 2
      %p115 = scmp.ne.s32.totalorder %s110, %s112
      %p116 = scmp.eq.s32.totalorder %s13, 0
      %p117 = por %p115, %p116
      %p118 = scmp.ne.s32.totalorder %s110, %s112
      %p119 = scmp.eq.s32.totalorder %s18, 2
      %p120 = por %p118, %p119
      %p121 = scmp.ne.s32.totalorder %s112, %s113
      %p122 = scmp.eq.s32.totalorder %s18, 0
      %p123 = por %p121, %p122
      %p124 = scmp.ne.s32.totalorder %s112, %s113
      %p125 = scmp.eq.s32.totalorder %s19, 2
      %p126 = por %p124, %p125
      %p128 = scmp.ne.s32.totalorder %s113, %s127
      %p129 = scmp.eq.s32.totalorder %s19, 0
      %p130 = por %p128, %p129
      %s132 = sadd.s32 %s131, 1
      %p135 = scmp.eq.s32.totalorder %s13, 2
      %p136 = scmp.ne.s32.totalorder %s131, %s133
      %p137 = scmp.eq.s32.totalorder %s13, 0
      %p138 = por %p136, %p137
      %p139 = scmp.ne.s32.totalorder %s131, %s133
      %p140 = scmp.eq.s32.totalorder %s18, 2
      %p141 = por %p139, %p140
      %p142 = scmp.ne.s32.totalorder %s133, %s134
      %p143 = scmp.eq.s32.totalorder %s18, 0
      %p144 = por %p142, %p143
      %p145 = scmp.ne.s32.totalorder %s133, %s134
      %p146 = scmp.eq.s32.totalorder %s19, 2
      %p147 = por %p145, %p146
      %p149 = scmp.ne.s32.totalorder %s134, %s148
      %p150 = scmp.eq.s32.totalorder %s19, 0
      %p151 = por %p149, %p150
      %s153 = sadd.s32 %s152, 1
      %p156 = scmp.eq.s32.totalorder %s13, 2
      %p157 = scmp.ne.s32.totalorder %s152, %s154
      %p158 = scmp.eq.s32.totalorder %s13, 0
      %p159 = por %p157, %p158
      %p160 = scmp.ne.s32.totalorder %s152, %s154
      %p161 = scmp.eq.s32.totalorder %s18, 2
      %p162 = por %p160, %p161
      %p163 = scmp.ne.s32.totalorder %s154, %s155
      %p164 = scmp.eq.s32.totalorder %s18, 0
      %p165 = por %p163, %p164
      %p166 = scmp.ne.s32.totalorder %s154, %s155
      %p167 = scmp.eq.s32.totalorder %s19, 2
      %p168 = por %p166, %p167
      %p170 = scmp.ne.s32.totalorder %s155, %s169
      %p171 = scmp.eq.s32.totalorder %s19, 0
      %p172 = por %p170, %p171
      %s173 = ssub.s32 %s13, %s20
      %p174 = scmp.eq.s32.totalorder %s173, 0
      %s176 = sadd.s32 %s175, 1
      %s177 = scalar_select %p174, %s175, %s176
      %p180 = pneg %p174
      %p181 = scmp.eq.s32.totalorder %s13, 2
      %p182 = por %p180, %p181
      %p183 = scmp.ne.s32.totalorder %s175, %s178
      %p184 = scmp.eq.s32.totalorder %s13, 0
      %p185 = por %p183, %p184
      %p186 = scmp.ne.s32.totalorder %s175, %s178
      %p187 = scmp.eq.s32.totalorder %s18, 2
      %p188 = por %p186, %p187
      %p189 = scmp.ne.s32.totalorder %s178, %s179
      %p190 = scmp.eq.s32.totalorder %s18, 0
      %p191 = por %p189, %p190
      %p192 = scmp.ne.s32.totalorder %s178, %s179
      %p193 = scmp.eq.s32.totalorder %s19, 2
      %p194 = por %p192, %p193
      %p196 = scmp.ne.s32.totalorder %s179, %s195
      %p197 = scmp.eq.s32.totalorder %s19, 0
      %p198 = por %p196, %p197
      %p199 = scmp.le.s32.totalorder 1, %s13
      %p200 = scmp.lt.s32.totalorder %s13, 4
      %p201 = pnand %p199, %p200
      %p202 = pneg %p201
      // Predicated region
      $region9: #{mlp_forward.1} parent=5 // pred_check
        _
      $region10: #{mlp_forward.1} parent=5 // pred_check_branch
        %204 = sbr.rel (%p201) target = $region12
      $region11: #{mlp_forward.1} parent=5 // pred_region
        %s205 = ssub.s32 %s13, 1
        // Predicated region
        $region13: #{mlp_forward.1} parent=11 // pred_check
          %p206 = pneg %p60
        $region14: #{mlp_forward.1} parent=11 // pred_check_branch
          %208 = sbr.rel (%p206) target = $region16
        $region15: #{mlp_forward.1} parent=11 // pred_region
          _
        $region16: #{mlp_forward.1} parent=11 // pred_fallthru
          _
        // Predicated region
        $region17: #{mlp_forward.1} parent=11 // pred_check
          %p209 = pneg %p81
        $region18: #{mlp_forward.1} parent=11 // pred_check_branch
          %211 = sbr.rel (%p209) target = $region20
        $region19: #{mlp_forward.1} parent=11 // pred_region
          _
        $region20: #{mlp_forward.1} parent=11 // pred_fallthru
          _
        // Predicated region
        $region21: #{mlp_forward.1} parent=11 // pred_check
          %p212 = pneg %p102
        $region22: #{mlp_forward.1} parent=11 // pred_check_branch
          %214 = sbr.rel (%p212) target = $region24
        $region23: #{mlp_forward.1} parent=11 // pred_region
          _
        $region24: #{mlp_forward.1} parent=11 // pred_fallthru
          _
        // Predicated region
        $region25: #{mlp_forward.1} parent=11 // pred_check
          %p215 = pneg %p123
        $region26: #{mlp_forward.1} parent=11 // pred_check_branch
          %217 = sbr.rel (%p215) target = $region28
        $region27: #{mlp_forward.1} parent=11 // pred_region
          _
        $region28: #{mlp_forward.1} parent=11 // pred_fallthru
          _
        // Predicated region
        $region29: #{mlp_forward.1} parent=11 // pred_check
          %p218 = pneg %p144
        $region30: #{mlp_forward.1} parent=11 // pred_check_branch
          %220 = sbr.rel (%p218) target = $region32
        $region31: #{mlp_forward.1} parent=11 // pred_region
          _
        $region32: #{mlp_forward.1} parent=11 // pred_fallthru
          _
        // Predicated region
        $region33: #{mlp_forward.1} parent=11 // pred_check
          %p221 = pneg %p165
        $region34: #{mlp_forward.1} parent=11 // pred_check_branch
          %223 = sbr.rel (%p221) target = $region36
        $region35: #{mlp_forward.1} parent=11 // pred_region
          _
        $region36: #{mlp_forward.1} parent=11 // pred_fallthru
          _
      $region12: #{mlp_forward.1} parent=5 // pred_fallthru
        _
      %p224 = scmp.lt.s32.totalorder %s13, 3
      // Predicated region
      $region37: #{mlp_forward.1} parent=5 // pred_check
        %p225 = pneg %p224
      $region38: #{mlp_forward.1} parent=5 // pred_check_branch
        %227 = sbr.rel (%p225) target = $region40
      $region39: #{mlp_forward.1} parent=5 // pred_region
        // Predicated region
        $region41: #{mlp_forward.1} parent=39 // pred_check
          %p228 = pneg %p33
        $region42: #{mlp_forward.1} parent=39 // pred_check_branch
          %230 = sbr.rel (%p228) target = $region44
        $region43: #{mlp_forward.1} parent=39 // pred_region
          %s231 = smul.u32 64, %s13
          %s232 = ssub.s32 150, %s231
          %p233 = scmp.lt.s32.totalorder %s232, 64
          %s234 = scalar_select %p233, %s232, 64
          %s235 = smul.u32 128, %s234
          %p236 = scmp.lt.s32.totalorder %s231, 149
          %s237 = scalar_select %p236, %s231, 149
          %s238 = smul.addr %s237, 8
          %s239 = scalar_lea.vmem %s0, %s238
          %s240 = smul.u32 64, %s13
          %s241 = ssub.s32 150, %s240
          %p242 = scmp.lt.s32.totalorder %s241, 64
          %s243 = scalar_select %p242, %s241, 64
          %s244 = smul.u32 128, %s243
        $region44: #{mlp_forward.1} parent=39 // pred_fallthru
          _
      $region40: #{mlp_forward.1} parent=5 // pred_fallthru
        _
      %p245 = scmp.le.s32.totalorder 1, %s13
      %p246 = scmp.lt.s32.totalorder %s13, 4
      %p247 = pnand %p245, %p246
      %p248 = pneg %p247
      // Predicated region
      $region45: #{mlp_forward.1} parent=5 // pred_check
        _
      $region46: #{mlp_forward.1} parent=5 // pred_check_branch
        %250 = sbr.rel (%p247) target = $region48
      $region47: #{mlp_forward.1} parent=5 // pred_region
        %s251 = ssub.s32 %s13, 1
        %s252 = smul.u32 64, %s18
        %s253 = ssub.s32 150, %s252
        %p254 = scmp.lt.s32.totalorder %s253, 64
        %s255 = scalar_select %p254, %s253, 64
        %s256 = smul.u32 128, %s255
        %p257 = scmp.lt.s32.totalorder %s252, 149
        %s258 = scalar_select %p257, %s252, 149
        %s259 = smul.addr %s258, 8
        %s260 = scalar_lea.vmem %s0, %s259
        %p261 = pneg %p39
        %p262 = pneg %p36
        %p263 = pneg %p60
        %p264 = pneg %p57
        %p265 = pneg %p81
        %p266 = pneg %p78
        %p267 = pneg %p102
        %p268 = pneg %p99
        %p269 = pneg %p123
        %p270 = pneg %p120
        %p271 = pneg %p144
        %p272 = pneg %p141
        %p273 = pneg %p165
        %p274 = pneg %p162
        %p275 = pneg %p191
        %p276 = pneg %p188
        %s277 = sand.u32 %s178, 1
        %s278 = sand.u32 %s178, 1
        %s279 = smul.addr %s278, 512
        %s280 = scalar_lea.vmem [#allocation2], %s279
        %s281 = smul.u32 64, %s18
        %s282 = ssub.s32 150, %s281
        %p283 = scmp.lt.s32.totalorder %s282, 64
        %s284 = scalar_select %p283, %s282, 64
        %s285 = smul.u32 128, %s284
        %p286 = scmp.lt.s32.totalorder %s281, 149
        %s287 = scalar_select %p286, %s281, 149
        %s288 = smul.addr %s287, 8
        %s289 = scalar_lea.vmem %s0, %s288
        %s290 = smul.u32 64, %s18
        %s291 = ssub.s32 150, %s290
        %p292 = scmp.lt.s32.totalorder %s291, 64
        %s293 = scalar_select %p292, %s291, 64
        %s294 = smul.u32 128, %s293
        %s295 = smul.u32 64, %s18
        %s296 = ssub.s32 150, %s295
        %p297 = scmp.lt.s32.totalorder %s296, 64
        %s298 = scalar_select %p297, %s296, 64
        %s299 = smul.u32 128, %s298
        %v301 = vld [vmem:[%s289] sm:$0xff]
        %v302 = vld [vmem:[%s289 + $0x8] sm:$0xff]
        %v303 = vld [vmem:[%s289 + $0x10] sm:$0xff]
        %v304 = vld [vmem:[%s289 + $0x18] sm:$0xff]
        %v305 = vld [vmem:[%s289 + $0x20] sm:$0xff]
        %v306 = vld [vmem:[%s289 + $0x28] sm:$0xff]
        %v307 = vld [vmem:[%s289 + $0x30] sm:$0xff]
        %v308 = vld [vmem:[%s289 + $0x38] sm:$0xff]
        %v309 = vld [vmem:[%s289 + $0x40] sm:$0xff]
        %v310 = vld [vmem:[%s289 + $0x48] sm:$0xff]
        %v311 = vld [vmem:[%s289 + $0x50] sm:$0xff]
        %v312 = vld [vmem:[%s289 + $0x58] sm:$0xff]
        %v313 = vld [vmem:[%s289 + $0x60] sm:$0xff]
        %v314 = vld [vmem:[%s289 + $0x68] sm:$0xff]
        %v315 = vld [vmem:[%s289 + $0x70] sm:$0xff]
        %v316 = vld [vmem:[%s289 + $0x78] sm:$0xff]
        %v317 = vld [vmem:[%s289 + $0x80] sm:$0xff]
        %v318 = vld [vmem:[%s289 + $0x88] sm:$0xff]
        %v319 = vld [vmem:[%s289 + $0x90] sm:$0xff]
        %v320 = vld [vmem:[%s289 + $0x98] sm:$0xff]
        %v321 = vld [vmem:[%s289 + $0xa0] sm:$0xff]
        %v322 = vld [vmem:[%s289 + $0xa8] sm:$0xff]
        %v323 = vld [vmem:[%s289 + $0xb0] sm:$0xff]
        %v324 = vld [vmem:[%s289 + $0xb8] sm:$0xff]
        %v325 = vld [vmem:[%s289 + $0xc0] sm:$0xff]
        %v326 = vld [vmem:[%s289 + $0xc8] sm:$0xff]
        %v327 = vld [vmem:[%s289 + $0xd0] sm:$0xff]
        %v328 = vld [vmem:[%s289 + $0xd8] sm:$0xff]
        %v329 = vld [vmem:[%s289 + $0xe0] sm:$0xff]
        %v330 = vld [vmem:[%s289 + $0xe8] sm:$0xff]
        %v331 = vld [vmem:[%s289 + $0xf0] sm:$0xff]
        %v332 = vld [vmem:[%s289 + $0xf8] sm:$0xff]
        %v333 = vld [vmem:[%s289 + $0x100] sm:$0xff]
        %v334 = vld [vmem:[%s289 + $0x108] sm:$0xff]
        %v335 = vld [vmem:[%s289 + $0x110] sm:$0xff]
        %v336 = vld [vmem:[%s289 + $0x118] sm:$0xff]
        %v337 = vld [vmem:[%s289 + $0x120] sm:$0xff]
        %v338 = vld [vmem:[%s289 + $0x128] sm:$0xff]
        %v339 = vld [vmem:[%s289 + $0x130] sm:$0xff]
        %v340 = vld [vmem:[%s289 + $0x138] sm:$0xff]
        %v341 = vld [vmem:[%s289 + $0x140] sm:$0xff]
        %v342 = vld [vmem:[%s289 + $0x148] sm:$0xff]
        %v343 = vld [vmem:[%s289 + $0x150] sm:$0xff]
        %v344 = vld [vmem:[%s289 + $0x158] sm:$0xff]
        %v345 = vld [vmem:[%s289 + $0x160] sm:$0xff]
        %v346 = vld [vmem:[%s289 + $0x168] sm:$0xff]
        %v347 = vld [vmem:[%s289 + $0x170] sm:$0xff]
        %v348 = vld [vmem:[%s289 + $0x178] sm:$0xff]
        %v349 = vld [vmem:[%s289 + $0x180] sm:$0xff]
        %v350 = vld [vmem:[%s289 + $0x188] sm:$0xff]
        %v351 = vld [vmem:[%s289 + $0x190] sm:$0xff]
        %v352 = vld [vmem:[%s289 + $0x198] sm:$0xff]
        %v353 = vld [vmem:[%s289 + $0x1a0] sm:$0xff]
        %v354 = vld [vmem:[%s289 + $0x1a8] sm:$0xff]
        %v355 = vld [vmem:[%s289 + $0x1b0] sm:$0xff]
        %v356 = vld [vmem:[%s289 + $0x1b8] sm:$0xff]
        %v357 = vld [vmem:[%s289 + $0x1c0] sm:$0xff]
        %v358 = vld [vmem:[%s289 + $0x1c8] sm:$0xff]
        %v359 = vld [vmem:[%s289 + $0x1d0] sm:$0xff]
        %v360 = vld [vmem:[%s289 + $0x1d8] sm:$0xff]
        %v361 = vld [vmem:[%s289 + $0x1e0] sm:$0xff]
        %v362 = vld [vmem:[%s289 + $0x1e8] sm:$0xff]
        %v363 = vld [vmem:[%s289 + $0x1f0] sm:$0xff]
        %v364 = vld [vmem:[%s289 + $0x1f8] sm:$0xff]
        %v365 = vpack.c.bf16 %v302, %v301
        %v366 = vpack.c.bf16 %v304, %v303
        %v367 = vpack.c.bf16 %v306, %v305
        %v368 = vpack.c.bf16 %v308, %v307
        %v369 = vpack.c.bf16 %v310, %v309
        %v370 = vpack.c.bf16 %v312, %v311
        %v371 = vpack.c.bf16 %v314, %v313
        %v372 = vpack.c.bf16 %v316, %v315
        %v373 = vpack.c.bf16 %v318, %v317
        %v374 = vpack.c.bf16 %v320, %v319
        %v375 = vpack.c.bf16 %v322, %v321
        %v376 = vpack.c.bf16 %v324, %v323
        %v377 = vpack.c.bf16 %v326, %v325
        %v378 = vpack.c.bf16 %v328, %v327
        %v379 = vpack.c.bf16 %v330, %v329
        %v380 = vpack.c.bf16 %v332, %v331
        %v381 = vpack.c.bf16 %v334, %v333
        %v382 = vpack.c.bf16 %v336, %v335
        %v383 = vpack.c.bf16 %v338, %v337
        %v384 = vpack.c.bf16 %v340, %v339
        %v385 = vpack.c.bf16 %v342, %v341
        %v386 = vpack.c.bf16 %v344, %v343
        %v387 = vpack.c.bf16 %v346, %v345
        %v388 = vpack.c.bf16 %v348, %v347
        %v389 = vpack.c.bf16 %v350, %v349
        %v390 = vpack.c.bf16 %v352, %v351
        %v391 = vpack.c.bf16 %v354, %v353
        %v392 = vpack.c.bf16 %v356, %v355
        %v393 = vpack.c.bf16 %v358, %v357
        %v394 = vpack.c.bf16 %v360, %v359
        %v395 = vpack.c.bf16 %v362, %v361
        %v396 = vpack.c.bf16 %v364, %v363
        %v397 = vld [vmem:[%s1] sm:$0xf]
        %v398 = vld [vmem:[%s1 + $0x4] sm:$0xf]
        %v399 = vld [vmem:[%s2] sm:$0x1]
        %v401 = vlaneseq
        %v402 = vshrl.u32 %v401, 7
        %v403 = vsub.s32 0, %v402
        %v404 = vrot.slane %v399, %v403
        %v408 = vunpack.c.l.b16 %v397
        %v409 = vunpack.c.l.b16 %v398
        %v410 = vpack.c.b16 %v409, %v408
        %vm412 = vcmask 130048
        %v414 = vsel %vm412, %v365, 0
        %v417 = vsel %vm412, %v366, 0
        %v420 = vsel %vm412, %v367, 0
        %v423 = vsel %vm412, %v368, 0
        %v426 = vsel %vm412, %v369, 0
        %v429 = vsel %vm412, %v370, 0
        %v432 = vsel %vm412, %v371, 0
        %v435 = vsel %vm412, %v372, 0
        %v438 = vsel %vm412, %v373, 0
        %v441 = vsel %vm412, %v374, 0
        %v444 = vsel %vm412, %v375, 0
        %v447 = vsel %vm412, %v376, 0
        %v450 = vsel %vm412, %v377, 0
        %v453 = vsel %vm412, %v378, 0
        %v456 = vsel %vm412, %v379, 0
        %v459 = vsel %vm412, %v380, 0
        %v462 = vsel %vm412, %v381, 0
        %v465 = vsel %vm412, %v382, 0
        %v468 = vsel %vm412, %v383, 0
        %v471 = vsel %vm412, %v384, 0
        %v474 = vsel %vm412, %v385, 0
        %v477 = vsel %vm412, %v386, 0
        %v480 = vsel %vm412, %v387, 0
        %v483 = vsel %vm412, %v388, 0
        %v486 = vsel %vm412, %v389, 0
        %v489 = vsel %vm412, %v390, 0
        %v492 = vsel %vm412, %v391, 0
        %v495 = vsel %vm412, %v392, 0
        %v498 = vsel %vm412, %v393, 0
        %v501 = vsel %vm412, %v394, 0
        %v504 = vsel %vm412, %v395, 0
        %v507 = vsel %vm412, %v396, 0
        %509 = vmatprep.subr.bf16.mxu0 0
        %510 = vmatpush1.bf16.msra.mxu0 0
        %511 = vmatprep.subr.bf16.mxu0 0
        %512 = vmatpush1.bf16.msra.mxu0 0
        %513 = vmatprep.subr.bf16.mxu0 0
        %514 = vmatpush1.bf16.msra.mxu0 0
        %515 = vmatprep.subr.bf16.mxu0 0
        %516 = vmatpush1.bf16.msra.mxu0 0
        %517 = vmatprep.subr.bf16.mxu0 0
        %518 = vmatpush1.bf16.msra.mxu0 0
        %519 = vmatprep.subr.bf16.mxu0 0
        %520 = vmatpush1.bf16.msra.mxu0 0
        %521 = vmatprep.subr.bf16.mxu0 0
        %522 = vmatpush1.bf16.msra.mxu0 0
        %523 = vmatprep.subr.bf16.mxu0 0
        %524 = vmatpush1.bf16.msra.mxu0 %v410
        %525 = vmatprep.subr.bf16.mxu0 0
        %526 = vmatpush2.bf16.msra.mxu0 0
        %527 = vmatprep.subr.bf16.mxu0 0
        %528 = vmatpush2.bf16.msra.mxu0 0
        %529 = vmatprep.subr.bf16.mxu0 0
        %530 = vmatpush2.bf16.msra.mxu0 0
        %531 = vmatprep.subr.bf16.mxu0 0
        %532 = vmatpush2.bf16.msra.mxu0 0
        %533 = vmatprep.subr.bf16.mxu0 0
        %534 = vmatpush2.bf16.msra.mxu0 0
        %535 = vmatprep.subr.bf16.mxu0 0
        %536 = vmatpush2.bf16.msra.mxu0 0
        %537 = vmatprep.subr.bf16.mxu0 0
        %538 = vmatpush2.bf16.msra.mxu0 0
        %539 = vmatprep.subr.bf16.mxu0 0
        %540 = vmatpush2.bf16.msra.mxu0 0
        %541 = vmatprep.mubr.bf16.mxu0 0
        %542 = vmatmul.mubr.bf16.gmra.mxu0 %v414
        %v543 = vpop.f32.mrf.mxu0
        %v544 = vadd.f32 %v404, %v543
        %v545 = vpop.f32.mrf.mxu0
        %v546 = vpop.f32.mrf.mxu0
        %v547 = vadd.f32 %v404, %v546
        %v548 = vpop.f32.mrf.mxu0
        %549 = vmatprep.mubr.bf16.mxu0 0
        %550 = vmatmul.mubr.bf16.gmra.mxu0 %v417
        %v551 = vpop.f32.mrf.mxu0
        %v552 = vadd.f32 %v404, %v551
        %v553 = vpop.f32.mrf.mxu0
        %v554 = vpop.f32.mrf.mxu0
        %v555 = vadd.f32 %v404, %v554
        %v556 = vpop.f32.mrf.mxu0
        %557 = vmatprep.mubr.bf16.mxu0 0
        %558 = vmatmul.mubr.bf16.gmra.mxu0 %v420
        %v559 = vpop.f32.mrf.mxu0
        %v560 = vadd.f32 %v404, %v559
        %v561 = vpop.f32.mrf.mxu0
        %v562 = vpop.f32.mrf.mxu0
        %v563 = vadd.f32 %v404, %v562
        %v564 = vpop.f32.mrf.mxu0
        %565 = vmatprep.mubr.bf16.mxu0 0
        %566 = vmatmul.mubr.bf16.gmra.mxu0 %v423
        %v567 = vpop.f32.mrf.mxu0
        %v568 = vadd.f32 %v404, %v567
        %v569 = vpop.f32.mrf.mxu0
        %v570 = vpop.f32.mrf.mxu0
        %v571 = vadd.f32 %v404, %v570
        %v572 = vpop.f32.mrf.mxu0
        %573 = vmatprep.mubr.bf16.mxu0 0
        %574 = vmatmul.mubr.bf16.gmra.mxu0 %v426
        %v575 = vpop.f32.mrf.mxu0
        %v576 = vadd.f32 %v404, %v575
        %v577 = vpop.f32.mrf.mxu0
        %v578 = vpop.f32.mrf.mxu0
        %v579 = vadd.f32 %v404, %v578
        %v580 = vpop.f32.mrf.mxu0
        %581 = vmatprep.mubr.bf16.mxu0 0
        %582 = vmatmul.mubr.bf16.gmra.mxu0 %v429
        %v583 = vpop.f32.mrf.mxu0
        %v584 = vadd.f32 %v404, %v583
        %v585 = vpop.f32.mrf.mxu0
        %v586 = vpop.f32.mrf.mxu0
        %v587 = vadd.f32 %v404, %v586
        %v588 = vpop.f32.mrf.mxu0
        %589 = vmatprep.mubr.bf16.mxu0 0
        %590 = vmatmul.mubr.bf16.gmra.mxu0 %v432
        %v591 = vpop.f32.mrf.mxu0
        %v592 = vadd.f32 %v404, %v591
        %v593 = vpop.f32.mrf.mxu0
        %v594 = vpop.f32.mrf.mxu0
        %v595 = vadd.f32 %v404, %v594
        %v596 = vpop.f32.mrf.mxu0
        %597 = vmatprep.mubr.bf16.mxu0 0
        %598 = vmatmul.mubr.bf16.gmra.mxu0 %v435
        %v599 = vpop.f32.mrf.mxu0
        %v600 = vadd.f32 %v404, %v599
        %v601 = vpop.f32.mrf.mxu0
        %v602 = vpop.f32.mrf.mxu0
        %v603 = vadd.f32 %v404, %v602
        %v604 = vpop.f32.mrf.mxu0
        %605 = vmatprep.mubr.bf16.mxu0 0
        %606 = vmatmul.mubr.bf16.gmra.mxu0 %v438
        %v607 = vpop.f32.mrf.mxu0
        %v608 = vadd.f32 %v404, %v607
        %v609 = vpop.f32.mrf.mxu0
        %v610 = vpop.f32.mrf.mxu0
        %v611 = vadd.f32 %v404, %v610
        %v612 = vpop.f32.mrf.mxu0
        %613 = vmatprep.mubr.bf16.mxu0 0
        %614 = vmatmul.mubr.bf16.gmra.mxu0 %v441
        %v615 = vpop.f32.mrf.mxu0
        %v616 = vadd.f32 %v404, %v615
        %v617 = vpop.f32.mrf.mxu0
        %v618 = vpop.f32.mrf.mxu0
        %v619 = vadd.f32 %v404, %v618
        %v620 = vpop.f32.mrf.mxu0
        %621 = vmatprep.mubr.bf16.mxu0 0
        %622 = vmatmul.mubr.bf16.gmra.mxu0 %v444
        %v623 = vpop.f32.mrf.mxu0
        %v624 = vadd.f32 %v404, %v623
        %v625 = vpop.f32.mrf.mxu0
        %v626 = vpop.f32.mrf.mxu0
        %v627 = vadd.f32 %v404, %v626
        %v628 = vpop.f32.mrf.mxu0
        %629 = vmatprep.mubr.bf16.mxu0 0
        %630 = vmatmul.mubr.bf16.gmra.mxu0 %v447
        %v631 = vpop.f32.mrf.mxu0
        %v632 = vadd.f32 %v404, %v631
        %v633 = vpop.f32.mrf.mxu0
        %v634 = vpop.f32.mrf.mxu0
        %v635 = vadd.f32 %v404, %v634
        %v636 = vpop.f32.mrf.mxu0
        %637 = vmatprep.mubr.bf16.mxu0 0
        %638 = vmatmul.mubr.bf16.gmra.mxu0 %v450
        %v639 = vpop.f32.mrf.mxu0
        %v640 = vadd.f32 %v404, %v639
        %v641 = vpop.f32.mrf.mxu0
        %v642 = vpop.f32.mrf.mxu0
        %v643 = vadd.f32 %v404, %v642
        %v644 = vpop.f32.mrf.mxu0
        %645 = vmatprep.mubr.bf16.mxu0 0
        %646 = vmatmul.mubr.bf16.gmra.mxu0 %v453
        %v647 = vpop.f32.mrf.mxu0
        %v648 = vadd.f32 %v404, %v647
        %v649 = vpop.f32.mrf.mxu0
        %v650 = vpop.f32.mrf.mxu0
        %v651 = vadd.f32 %v404, %v650
        %v652 = vpop.f32.mrf.mxu0
        %653 = vmatprep.mubr.bf16.mxu0 0
        %654 = vmatmul.mubr.bf16.gmra.mxu0 %v456
        %v655 = vpop.f32.mrf.mxu0
        %v656 = vadd.f32 %v404, %v655
        %v657 = vpop.f32.mrf.mxu0
        %v658 = vpop.f32.mrf.mxu0
        %v659 = vadd.f32 %v404, %v658
        %v660 = vpop.f32.mrf.mxu0
        %661 = vmatprep.mubr.bf16.mxu0 0
        %662 = vmatmul.mubr.bf16.gmra.mxu0 %v459
        %v663 = vpop.f32.mrf.mxu0
        %v664 = vadd.f32 %v404, %v663
        %v665 = vpop.f32.mrf.mxu0
        %v666 = vpop.f32.mrf.mxu0
        %v667 = vadd.f32 %v404, %v666
        %v668 = vpop.f32.mrf.mxu0
        %669 = vmatprep.mubr.bf16.mxu0 0
        %670 = vmatmul.mubr.bf16.gmra.mxu0 %v462
        %v671 = vpop.f32.mrf.mxu0
        %v672 = vadd.f32 %v404, %v671
        %v673 = vpop.f32.mrf.mxu0
        %v674 = vpop.f32.mrf.mxu0
        %v675 = vadd.f32 %v404, %v674
        %v676 = vpop.f32.mrf.mxu0
        %677 = vmatprep.mubr.bf16.mxu0 0
        %678 = vmatmul.mubr.bf16.gmra.mxu0 %v465
        %v679 = vpop.f32.mrf.mxu0
        %v680 = vadd.f32 %v404, %v679
        %v681 = vpop.f32.mrf.mxu0
        %v682 = vpop.f32.mrf.mxu0
        %v683 = vadd.f32 %v404, %v682
        %v684 = vpop.f32.mrf.mxu0
        %685 = vmatprep.mubr.bf16.mxu0 0
        %686 = vmatmul.mubr.bf16.gmra.mxu0 %v468
        %v687 = vpop.f32.mrf.mxu0
        %v688 = vadd.f32 %v404, %v687
        %v689 = vpop.f32.mrf.mxu0
        %v690 = vpop.f32.mrf.mxu0
        %v691 = vadd.f32 %v404, %v690
        %v692 = vpop.f32.mrf.mxu0
        %693 = vmatprep.mubr.bf16.mxu0 0
        %694 = vmatmul.mubr.bf16.gmra.mxu0 %v471
        %v695 = vpop.f32.mrf.mxu0
        %v696 = vadd.f32 %v404, %v695
        %v697 = vpop.f32.mrf.mxu0
        %v698 = vpop.f32.mrf.mxu0
        %v699 = vadd.f32 %v404, %v698
        %v700 = vpop.f32.mrf.mxu0
        %701 = vmatprep.mubr.bf16.mxu0 0
        %702 = vmatmul.mubr.bf16.gmra.mxu0 %v474
        %v703 = vpop.f32.mrf.mxu0
        %v704 = vadd.f32 %v404, %v703
        %v705 = vpop.f32.mrf.mxu0
        %v706 = vpop.f32.mrf.mxu0
        %v707 = vadd.f32 %v404, %v706
        %v708 = vpop.f32.mrf.mxu0
        %709 = vmatprep.mubr.bf16.mxu0 0
        %710 = vmatmul.mubr.bf16.gmra.mxu0 %v477
        %v711 = vpop.f32.mrf.mxu0
        %v712 = vadd.f32 %v404, %v711
        %v713 = vpop.f32.mrf.mxu0
        %v714 = vpop.f32.mrf.mxu0
        %v715 = vadd.f32 %v404, %v714
        %v716 = vpop.f32.mrf.mxu0
        %717 = vmatprep.mubr.bf16.mxu0 0
        %718 = vmatmul.mubr.bf16.gmra.mxu0 %v480
        %v719 = vpop.f32.mrf.mxu0
        %v720 = vadd.f32 %v404, %v719
        %v721 = vpop.f32.mrf.mxu0
        %v722 = vpop.f32.mrf.mxu0
        %v723 = vadd.f32 %v404, %v722
        %v724 = vpop.f32.mrf.mxu0
        %725 = vmatprep.mubr.bf16.mxu0 0
        %726 = vmatmul.mubr.bf16.gmra.mxu0 %v483
        %v727 = vpop.f32.mrf.mxu0
        %v728 = vadd.f32 %v404, %v727
        %v729 = vpop.f32.mrf.mxu0
        %v730 = vpop.f32.mrf.mxu0
        %v731 = vadd.f32 %v404, %v730
        %v732 = vpop.f32.mrf.mxu0
        %733 = vmatprep.mubr.bf16.mxu0 0
        %734 = vmatmul.mubr.bf16.gmra.mxu0 %v486
        %v735 = vpop.f32.mrf.mxu0
        %v736 = vadd.f32 %v404, %v735
        %v737 = vpop.f32.mrf.mxu0
        %v738 = vpop.f32.mrf.mxu0
        %v739 = vadd.f32 %v404, %v738
        %v740 = vpop.f32.mrf.mxu0
        %741 = vmatprep.mubr.bf16.mxu0 0
        %742 = vmatmul.mubr.bf16.gmra.mxu0 %v489
        %v743 = vpop.f32.mrf.mxu0
        %v744 = vadd.f32 %v404, %v743
        %v745 = vpop.f32.mrf.mxu0
        %v746 = vpop.f32.mrf.mxu0
        %v747 = vadd.f32 %v404, %v746
        %v748 = vpop.f32.mrf.mxu0
        %749 = vmatprep.mubr.bf16.mxu0 0
        %750 = vmatmul.mubr.bf16.gmra.mxu0 %v492
        %v751 = vpop.f32.mrf.mxu0
        %v752 = vadd.f32 %v404, %v751
        %v753 = vpop.f32.mrf.mxu0
        %v754 = vpop.f32.mrf.mxu0
        %v755 = vadd.f32 %v404, %v754
        %v756 = vpop.f32.mrf.mxu0
        %757 = vmatprep.mubr.bf16.mxu0 0
        %758 = vmatmul.mubr.bf16.gmra.mxu0 %v495
        %v759 = vpop.f32.mrf.mxu0
        %v760 = vadd.f32 %v404, %v759
        %v761 = vpop.f32.mrf.mxu0
        %v762 = vpop.f32.mrf.mxu0
        %v763 = vadd.f32 %v404, %v762
        %v764 = vpop.f32.mrf.mxu0
        %765 = vmatprep.mubr.bf16.mxu0 0
        %766 = vmatmul.mubr.bf16.gmra.mxu0 %v498
        %v767 = vpop.f32.mrf.mxu0
        %v768 = vadd.f32 %v404, %v767
        %v769 = vpop.f32.mrf.mxu0
        %v770 = vpop.f32.mrf.mxu0
        %v771 = vadd.f32 %v404, %v770
        %v772 = vpop.f32.mrf.mxu0
        %773 = vmatprep.mubr.bf16.mxu0 0
        %774 = vmatmul.mubr.bf16.gmra.mxu0 %v501
        %v775 = vpop.f32.mrf.mxu0
        %v776 = vadd.f32 %v404, %v775
        %v777 = vpop.f32.mrf.mxu0
        %v778 = vpop.f32.mrf.mxu0
        %v779 = vadd.f32 %v404, %v778
        %v780 = vpop.f32.mrf.mxu0
        %781 = vmatprep.mubr.bf16.mxu0 0
        %782 = vmatmul.mubr.bf16.gmra.mxu0 %v504
        %v783 = vpop.f32.mrf.mxu0
        %v784 = vadd.f32 %v404, %v783
        %v785 = vpop.f32.mrf.mxu0
        %v786 = vpop.f32.mrf.mxu0
        %v787 = vadd.f32 %v404, %v786
        %v788 = vpop.f32.mrf.mxu0
        %789 = vmatprep.mubr.bf16.mxu0 0
        %790 = vmatmul.mubr.bf16.gmra.mxu0 %v507
        %v791 = vpop.f32.mrf.mxu0
        %v792 = vadd.f32 %v404, %v791
        %v793 = vpop.f32.mrf.mxu0
        %v794 = vpop.f32.mrf.mxu0
        %v795 = vadd.f32 %v404, %v794
        %v796 = vpop.f32.mrf.mxu0
        %797 = vdwg.mxu0
        %v798 = vmul.f32 %v544, 0.2
        %v799 = vmul.f32 %v547, 0.2
        %v800 = vmul.f32 %v552, 0.2
        %v801 = vmul.f32 %v555, 0.2
        %v802 = vmul.f32 %v560, 0.2
        %v803 = vmul.f32 %v563, 0.2
        %v804 = vmul.f32 %v568, 0.2
        %v805 = vmul.f32 %v571, 0.2
        %v806 = vmul.f32 %v576, 0.2
        %v807 = vmul.f32 %v579, 0.2
        %v808 = vmul.f32 %v584, 0.2
        %v809 = vmul.f32 %v587, 0.2
        %v810 = vmul.f32 %v592, 0.2
        %v811 = vmul.f32 %v595, 0.2
        %v812 = vmul.f32 %v600, 0.2
        %v813 = vmul.f32 %v603, 0.2
        %v814 = vmul.f32 %v608, 0.2
        %v815 = vmul.f32 %v611, 0.2
        %v816 = vmul.f32 %v616, 0.2
        %v817 = vmul.f32 %v619, 0.2
        %v818 = vmul.f32 %v624, 0.2
        %v819 = vmul.f32 %v627, 0.2
        %v820 = vmul.f32 %v632, 0.2
        %v821 = vmul.f32 %v635, 0.2
        %v822 = vmul.f32 %v640, 0.2
        %v823 = vmul.f32 %v643, 0.2
        %v824 = vmul.f32 %v648, 0.2
        %v825 = vmul.f32 %v651, 0.2
        %v826 = vmul.f32 %v656, 0.2
        %v827 = vmul.f32 %v659, 0.2
        %v828 = vmul.f32 %v664, 0.2
        %v829 = vmul.f32 %v667, 0.2
        %v830 = vmul.f32 %v672, 0.2
        %v831 = vmul.f32 %v675, 0.2
        %v832 = vmul.f32 %v680, 0.2
        %v833 = vmul.f32 %v683, 0.2
        %v834 = vmul.f32 %v688, 0.2
        %v835 = vmul.f32 %v691, 0.2
        %v836 = vmul.f32 %v696, 0.2
        %v837 = vmul.f32 %v699, 0.2
        %v838 = vmul.f32 %v704, 0.2
        %v839 = vmul.f32 %v707, 0.2
        %v840 = vmul.f32 %v712, 0.2
        %v841 = vmul.f32 %v715, 0.2
        %v842 = vmul.f32 %v720, 0.2
        %v843 = vmul.f32 %v723, 0.2
        %v844 = vmul.f32 %v728, 0.2
        %v845 = vmul.f32 %v731, 0.2
        %v846 = vmul.f32 %v736, 0.2
        %v847 = vmul.f32 %v739, 0.2
        %v848 = vmul.f32 %v744, 0.2
        %v849 = vmul.f32 %v747, 0.2
        %v850 = vmul.f32 %v752, 0.2
        %v851 = vmul.f32 %v755, 0.2
        %v852 = vmul.f32 %v760, 0.2
        %v853 = vmul.f32 %v763, 0.2
        %v854 = vmul.f32 %v768, 0.2
        %v855 = vmul.f32 %v771, 0.2
        %v856 = vmul.f32 %v776, 0.2
        %v857 = vmul.f32 %v779, 0.2
        %v858 = vmul.f32 %v784, 0.2
        %v859 = vmul.f32 %v787, 0.2
        %v860 = vmul.f32 %v792, 0.2
        %v861 = vmul.f32 %v795, 0.2
        %v862 = vmax.f32 %v544, %v798
        %v863 = vmax.f32 %v547, %v799
        %v864 = vmax.f32 %v552, %v800
        %v865 = vmax.f32 %v555, %v801
        %v866 = vmax.f32 %v560, %v802
        %v867 = vmax.f32 %v563, %v803
        %v868 = vmax.f32 %v568, %v804
        %v869 = vmax.f32 %v571, %v805
        %v870 = vmax.f32 %v576, %v806
        %v871 = vmax.f32 %v579, %v807
        %v872 = vmax.f32 %v584, %v808
        %v873 = vmax.f32 %v587, %v809
        %v874 = vmax.f32 %v592, %v810
        %v875 = vmax.f32 %v595, %v811
        %v876 = vmax.f32 %v600, %v812
        %v877 = vmax.f32 %v603, %v813
        %v878 = vmax.f32 %v608, %v814
        %v879 = vmax.f32 %v611, %v815
        %v880 = vmax.f32 %v616, %v816
        %v881 = vmax.f32 %v619, %v817
        %v882 = vmax.f32 %v624, %v818
        %v883 = vmax.f32 %v627, %v819
        %v884 = vmax.f32 %v632, %v820
        %v885 = vmax.f32 %v635, %v821
        %v886 = vmax.f32 %v640, %v822
        %v887 = vmax.f32 %v643, %v823
        %v888 = vmax.f32 %v648, %v824
        %v889 = vmax.f32 %v651, %v825
        %v890 = vmax.f32 %v656, %v826
        %v891 = vmax.f32 %v659, %v827
        %v892 = vmax.f32 %v664, %v828
        %v893 = vmax.f32 %v667, %v829
        %v894 = vmax.f32 %v672, %v830
        %v895 = vmax.f32 %v675, %v831
        %v896 = vmax.f32 %v680, %v832
        %v897 = vmax.f32 %v683, %v833
        %v898 = vmax.f32 %v688, %v834
        %v899 = vmax.f32 %v691, %v835
        %v900 = vmax.f32 %v696, %v836
        %v901 = vmax.f32 %v699, %v837
        %v902 = vmax.f32 %v704, %v838
        %v903 = vmax.f32 %v707, %v839
        %v904 = vmax.f32 %v712, %v840
        %v905 = vmax.f32 %v715, %v841
        %v906 = vmax.f32 %v720, %v842
        %v907 = vmax.f32 %v723, %v843
        %v908 = vmax.f32 %v728, %v844
        %v909 = vmax.f32 %v731, %v845
        %v910 = vmax.f32 %v736, %v846
        %v911 = vmax.f32 %v739, %v847
        %v912 = vmax.f32 %v744, %v848
        %v913 = vmax.f32 %v747, %v849
        %v914 = vmax.f32 %v752, %v850
        %v915 = vmax.f32 %v755, %v851
        %v916 = vmax.f32 %v760, %v852
        %v917 = vmax.f32 %v763, %v853
        %v918 = vmax.f32 %v768, %v854
        %v919 = vmax.f32 %v771, %v855
        %v920 = vmax.f32 %v776, %v856
        %v921 = vmax.f32 %v779, %v857
        %v922 = vmax.f32 %v784, %v858
        %v923 = vmax.f32 %v787, %v859
        %v924 = vmax.f32 %v792, %v860
        %v925 = vmax.f32 %v795, %v861
        %v926 = vpack.c.bf16 %v863, %v862
        %v927 = vpack.c.bf16 %v865, %v864
        %v928 = vpack.c.bf16 %v867, %v866
        %v929 = vpack.c.bf16 %v869, %v868
        %v930 = vpack.c.bf16 %v871, %v870
        %v931 = vpack.c.bf16 %v873, %v872
        %v932 = vpack.c.bf16 %v875, %v874
        %v933 = vpack.c.bf16 %v877, %v876
        %v934 = vpack.c.bf16 %v879, %v878
        %v935 = vpack.c.bf16 %v881, %v880
        %v936 = vpack.c.bf16 %v883, %v882
        %v937 = vpack.c.bf16 %v885, %v884
        %v938 = vpack.c.bf16 %v887, %v886
        %v939 = vpack.c.bf16 %v889, %v888
        %v940 = vpack.c.bf16 %v891, %v890
        %v941 = vpack.c.bf16 %v893, %v892
        %v942 = vpack.c.bf16 %v895, %v894
        %v943 = vpack.c.bf16 %v897, %v896
        %v944 = vpack.c.bf16 %v899, %v898
        %v945 = vpack.c.bf16 %v901, %v900
        %v946 = vpack.c.bf16 %v903, %v902
        %v947 = vpack.c.bf16 %v905, %v904
        %v948 = vpack.c.bf16 %v907, %v906
        %v949 = vpack.c.bf16 %v909, %v908
        %v950 = vpack.c.bf16 %v911, %v910
        %v951 = vpack.c.bf16 %v913, %v912
        %v952 = vpack.c.bf16 %v915, %v914
        %v953 = vpack.c.bf16 %v917, %v916
        %v954 = vpack.c.bf16 %v919, %v918
        %v955 = vpack.c.bf16 %v921, %v920
        %v956 = vpack.c.bf16 %v923, %v922
        %v957 = vpack.c.bf16 %v925, %v924
        %v958 = vld [vmem:[%s3] sm:$0xf]
        %v959 = vld [vmem:[%s3 + $0x4] sm:$0xf]
        %v960 = vld [vmem:[%s3 + $0x8] sm:$0xf]
        %v961 = vld [vmem:[%s3 + $0xc] sm:$0xf]
        %v962 = vld [vmem:[%s3 + $0x10] sm:$0xf]
        %v963 = vld [vmem:[%s3 + $0x14] sm:$0xf]
        %v964 = vld [vmem:[%s3 + $0x18] sm:$0xf]
        %v965 = vld [vmem:[%s3 + $0x1c] sm:$0xf]
        %v966 = vld [vmem:[%s3 + $0x20] sm:$0xf]
        %v967 = vld [vmem:[%s3 + $0x24] sm:$0xf]
        %v968 = vld [vmem:[%s3 + $0x28] sm:$0xf]
        %v969 = vld [vmem:[%s3 + $0x2c] sm:$0xf]
        %v970 = vld [vmem:[%s3 + $0x30] sm:$0xf]
        %v971 = vld [vmem:[%s3 + $0x34] sm:$0xf]
        %v972 = vld [vmem:[%s3 + $0x38] sm:$0xf]
        %v973 = vld [vmem:[%s3 + $0x3c] sm:$0xf]
        %v974 = vld [vmem:[%s4] sm:$0x1]
        %v976 = vlaneseq
        %v977 = vshrl.u32 %v976, 7
        %v978 = vsub.s32 0, %v977
        %v979 = vrot.slane %v974, %v978
        %v997 = vunpack.c.l.b16 %v958
        %v998 = vunpack.c.l.b16 %v959
        %v999 = vunpack.c.l.b16 %v960
        %v1000 = vunpack.c.l.b16 %v961
        %v1001 = vunpack.c.l.b16 %v962
        %v1002 = vunpack.c.l.b16 %v963
        %v1003 = vunpack.c.l.b16 %v964
        %v1004 = vunpack.c.l.b16 %v965
        %v1005 = vunpack.c.l.b16 %v966
        %v1006 = vunpack.c.l.b16 %v967
        %v1007 = vunpack.c.l.b16 %v968
        %v1008 = vunpack.c.l.b16 %v969
        %v1009 = vunpack.c.l.b16 %v970
        %v1010 = vunpack.c.l.b16 %v971
        %v1011 = vunpack.c.l.b16 %v972
        %v1012 = vunpack.c.l.b16 %v973
        %v1013 = vpack.c.b16 %v998, %v997
        %v1014 = vpack.c.b16 %v1000, %v999
        %v1015 = vpack.c.b16 %v1002, %v1001
        %v1016 = vpack.c.b16 %v1004, %v1003
        %v1017 = vpack.c.b16 %v1006, %v1005
        %v1018 = vpack.c.b16 %v1008, %v1007
        %v1019 = vpack.c.b16 %v1010, %v1009
        %v1020 = vpack.c.b16 %v1012, %v1011
        %1029 = vmatprep.subr.bf16.mxu0 0
        %1030 = vmatpush1.bf16.msra.mxu0 %v1020
        %1031 = vmatprep.subr.bf16.mxu0 0
        %1032 = vmatpush1.bf16.msra.mxu0 %v1019
        %1033 = vmatprep.subr.bf16.mxu0 0
        %1034 = vmatpush1.bf16.msra.mxu0 %v1018
        %1035 = vmatprep.subr.bf16.mxu0 0
        %1036 = vmatpush1.bf16.msra.mxu0 %v1017
        %1037 = vmatprep.subr.bf16.mxu0 0
        %1038 = vmatpush1.bf16.msra.mxu0 %v1016
        %1039 = vmatprep.subr.bf16.mxu0 0
        %1040 = vmatpush1.bf16.msra.mxu0 %v1015
        %1041 = vmatprep.subr.bf16.mxu0 0
        %1042 = vmatpush1.bf16.msra.mxu0 %v1014
        %1043 = vmatprep.subr.bf16.mxu0 0
        %1044 = vmatpush1.bf16.msra.mxu0 %v1013
        %1045 = vmatprep.subr.bf16.mxu0 0
        %1046 = vmatpush2.bf16.msra.mxu0 0
        %1047 = vmatprep.subr.bf16.mxu0 0
        %1048 = vmatpush2.bf16.msra.mxu0 0
        %1049 = vmatprep.subr.bf16.mxu0 0
        %1050 = vmatpush2.bf16.msra.mxu0 0
        %1051 = vmatprep.subr.bf16.mxu0 0
        %1052 = vmatpush2.bf16.msra.mxu0 0
        %1053 = vmatprep.subr.bf16.mxu0 0
        %1054 = vmatpush2.bf16.msra.mxu0 0
        %1055 = vmatprep.subr.bf16.mxu0 0
        %1056 = vmatpush2.bf16.msra.mxu0 0
        %1057 = vmatprep.subr.bf16.mxu0 0
        %1058 = vmatpush2.bf16.msra.mxu0 0
        %1059 = vmatprep.subr.bf16.mxu0 0
        %1060 = vmatpush2.bf16.msra.mxu0 0
        %1061 = vmatprep.mubr.bf16.mxu0 0
        %1062 = vmatmul.mubr.bf16.gmra.mxu0 %v926
        %v1063 = vpop.f32.mrf.mxu0
        %v1064 = vadd.f32 %v979, %v1063
        %v1065 = vpop.f32.mrf.mxu0
        %v1066 = vpop.f32.mrf.mxu0
        %v1067 = vadd.f32 %v979, %v1066
        %v1068 = vpop.f32.mrf.mxu0
        %1069 = vmatprep.mubr.bf16.mxu0 0
        %1070 = vmatmul.mubr.bf16.gmra.mxu0 %v927
        %v1071 = vpop.f32.mrf.mxu0
        %v1072 = vadd.f32 %v979, %v1071
        %v1073 = vpop.f32.mrf.mxu0
        %v1074 = vpop.f32.mrf.mxu0
        %v1075 = vadd.f32 %v979, %v1074
        %v1076 = vpop.f32.mrf.mxu0
        %1077 = vmatprep.mubr.bf16.mxu0 0
        %1078 = vmatmul.mubr.bf16.gmra.mxu0 %v928
        %v1079 = vpop.f32.mrf.mxu0
        %v1080 = vadd.f32 %v979, %v1079
        %v1081 = vpop.f32.mrf.mxu0
        %v1082 = vpop.f32.mrf.mxu0
        %v1083 = vadd.f32 %v979, %v1082
        %v1084 = vpop.f32.mrf.mxu0
        %1085 = vmatprep.mubr.bf16.mxu0 0
        %1086 = vmatmul.mubr.bf16.gmra.mxu0 %v929
        %v1087 = vpop.f32.mrf.mxu0
        %v1088 = vadd.f32 %v979, %v1087
        %v1089 = vpop.f32.mrf.mxu0
        %v1090 = vpop.f32.mrf.mxu0
        %v1091 = vadd.f32 %v979, %v1090
        %v1092 = vpop.f32.mrf.mxu0
        %1093 = vmatprep.mubr.bf16.mxu0 0
        %1094 = vmatmul.mubr.bf16.gmra.mxu0 %v930
        %v1095 = vpop.f32.mrf.mxu0
        %v1096 = vadd.f32 %v979, %v1095
        %v1097 = vpop.f32.mrf.mxu0
        %v1098 = vpop.f32.mrf.mxu0
        %v1099 = vadd.f32 %v979, %v1098
        %v1100 = vpop.f32.mrf.mxu0
        %1101 = vmatprep.mubr.bf16.mxu0 0
        %1102 = vmatmul.mubr.bf16.gmra.mxu0 %v931
        %v1103 = vpop.f32.mrf.mxu0
        %v1104 = vadd.f32 %v979, %v1103
        %v1105 = vpop.f32.mrf.mxu0
        %v1106 = vpop.f32.mrf.mxu0
        %v1107 = vadd.f32 %v979, %v1106
        %v1108 = vpop.f32.mrf.mxu0
        %1109 = vmatprep.mubr.bf16.mxu0 0
        %1110 = vmatmul.mubr.bf16.gmra.mxu0 %v932
        %v1111 = vpop.f32.mrf.mxu0
        %v1112 = vadd.f32 %v979, %v1111
        %v1113 = vpop.f32.mrf.mxu0
        %v1114 = vpop.f32.mrf.mxu0
        %v1115 = vadd.f32 %v979, %v1114
        %v1116 = vpop.f32.mrf.mxu0
        %1117 = vmatprep.mubr.bf16.mxu0 0
        %1118 = vmatmul.mubr.bf16.gmra.mxu0 %v933
        %v1119 = vpop.f32.mrf.mxu0
        %v1120 = vadd.f32 %v979, %v1119
        %v1121 = vpop.f32.mrf.mxu0
        %v1122 = vpop.f32.mrf.mxu0
        %v1123 = vadd.f32 %v979, %v1122
        %v1124 = vpop.f32.mrf.mxu0
        %1125 = vmatprep.mubr.bf16.mxu0 0
        %1126 = vmatmul.mubr.bf16.gmra.mxu0 %v934
        %v1127 = vpop.f32.mrf.mxu0
        %v1128 = vadd.f32 %v979, %v1127
        %v1129 = vpop.f32.mrf.mxu0
        %v1130 = vpop.f32.mrf.mxu0
        %v1131 = vadd.f32 %v979, %v1130
        %v1132 = vpop.f32.mrf.mxu0
        %1133 = vmatprep.mubr.bf16.mxu0 0
        %1134 = vmatmul.mubr.bf16.gmra.mxu0 %v935
        %v1135 = vpop.f32.mrf.mxu0
        %v1136 = vadd.f32 %v979, %v1135
        %v1137 = vpop.f32.mrf.mxu0
        %v1138 = vpop.f32.mrf.mxu0
        %v1139 = vadd.f32 %v979, %v1138
        %v1140 = vpop.f32.mrf.mxu0
        %1141 = vmatprep.mubr.bf16.mxu0 0
        %1142 = vmatmul.mubr.bf16.gmra.mxu0 %v936
        %v1143 = vpop.f32.mrf.mxu0
        %v1144 = vadd.f32 %v979, %v1143
        %v1145 = vpop.f32.mrf.mxu0
        %v1146 = vpop.f32.mrf.mxu0
        %v1147 = vadd.f32 %v979, %v1146
        %v1148 = vpop.f32.mrf.mxu0
        %1149 = vmatprep.mubr.bf16.mxu0 0
        %1150 = vmatmul.mubr.bf16.gmra.mxu0 %v937
        %v1151 = vpop.f32.mrf.mxu0
        %v1152 = vadd.f32 %v979, %v1151
        %v1153 = vpop.f32.mrf.mxu0
        %v1154 = vpop.f32.mrf.mxu0
        %v1155 = vadd.f32 %v979, %v1154
        %v1156 = vpop.f32.mrf.mxu0
        %1157 = vmatprep.mubr.bf16.mxu0 0
        %1158 = vmatmul.mubr.bf16.gmra.mxu0 %v938
        %v1159 = vpop.f32.mrf.mxu0
        %v1160 = vadd.f32 %v979, %v1159
        %v1161 = vpop.f32.mrf.mxu0
        %v1162 = vpop.f32.mrf.mxu0
        %v1163 = vadd.f32 %v979, %v1162
        %v1164 = vpop.f32.mrf.mxu0
        %1165 = vmatprep.mubr.bf16.mxu0 0
        %1166 = vmatmul.mubr.bf16.gmra.mxu0 %v939
        %v1167 = vpop.f32.mrf.mxu0
        %v1168 = vadd.f32 %v979, %v1167
        %v1169 = vpop.f32.mrf.mxu0
        %v1170 = vpop.f32.mrf.mxu0
        %v1171 = vadd.f32 %v979, %v1170
        %v1172 = vpop.f32.mrf.mxu0
        %1173 = vmatprep.mubr.bf16.mxu0 0
        %1174 = vmatmul.mubr.bf16.gmra.mxu0 %v940
        %v1175 = vpop.f32.mrf.mxu0
        %v1176 = vadd.f32 %v979, %v1175
        %v1177 = vpop.f32.mrf.mxu0
        %v1178 = vpop.f32.mrf.mxu0
        %v1179 = vadd.f32 %v979, %v1178
        %v1180 = vpop.f32.mrf.mxu0
        %1181 = vmatprep.mubr.bf16.mxu0 0
        %1182 = vmatmul.mubr.bf16.gmra.mxu0 %v941
        %v1183 = vpop.f32.mrf.mxu0
        %v1184 = vadd.f32 %v979, %v1183
        %v1185 = vpop.f32.mrf.mxu0
        %v1186 = vpop.f32.mrf.mxu0
        %v1187 = vadd.f32 %v979, %v1186
        %v1188 = vpop.f32.mrf.mxu0
        %1189 = vmatprep.mubr.bf16.mxu0 0
        %1190 = vmatmul.mubr.bf16.gmra.mxu0 %v942
        %v1191 = vpop.f32.mrf.mxu0
        %v1192 = vadd.f32 %v979, %v1191
        %v1193 = vpop.f32.mrf.mxu0
        %v1194 = vpop.f32.mrf.mxu0
        %v1195 = vadd.f32 %v979, %v1194
        %v1196 = vpop.f32.mrf.mxu0
        %1197 = vmatprep.mubr.bf16.mxu0 0
        %1198 = vmatmul.mubr.bf16.gmra.mxu0 %v943
        %v1199 = vpop.f32.mrf.mxu0
        %v1200 = vadd.f32 %v979, %v1199
        %v1201 = vpop.f32.mrf.mxu0
        %v1202 = vpop.f32.mrf.mxu0
        %v1203 = vadd.f32 %v979, %v1202
        %v1204 = vpop.f32.mrf.mxu0
        %1205 = vmatprep.mubr.bf16.mxu0 0
        %1206 = vmatmul.mubr.bf16.gmra.mxu0 %v944
        %v1207 = vpop.f32.mrf.mxu0
        %v1208 = vadd.f32 %v979, %v1207
        %v1209 = vpop.f32.mrf.mxu0
        %v1210 = vpop.f32.mrf.mxu0
        %v1211 = vadd.f32 %v979, %v1210
        %v1212 = vpop.f32.mrf.mxu0
        %1213 = vmatprep.mubr.bf16.mxu0 0
        %1214 = vmatmul.mubr.bf16.gmra.mxu0 %v945
        %v1215 = vpop.f32.mrf.mxu0
        %v1216 = vadd.f32 %v979, %v1215
        %v1217 = vpop.f32.mrf.mxu0
        %v1218 = vpop.f32.mrf.mxu0
        %v1219 = vadd.f32 %v979, %v1218
        %v1220 = vpop.f32.mrf.mxu0
        %1221 = vmatprep.mubr.bf16.mxu0 0
        %1222 = vmatmul.mubr.bf16.gmra.mxu0 %v946
        %v1223 = vpop.f32.mrf.mxu0
        %v1224 = vadd.f32 %v979, %v1223
        %v1225 = vpop.f32.mrf.mxu0
        %v1226 = vpop.f32.mrf.mxu0
        %v1227 = vadd.f32 %v979, %v1226
        %v1228 = vpop.f32.mrf.mxu0
        %1229 = vmatprep.mubr.bf16.mxu0 0
        %1230 = vmatmul.mubr.bf16.gmra.mxu0 %v947
        %v1231 = vpop.f32.mrf.mxu0
        %v1232 = vadd.f32 %v979, %v1231
        %v1233 = vpop.f32.mrf.mxu0
        %v1234 = vpop.f32.mrf.mxu0
        %v1235 = vadd.f32 %v979, %v1234
        %v1236 = vpop.f32.mrf.mxu0
        %1237 = vmatprep.mubr.bf16.mxu0 0
        %1238 = vmatmul.mubr.bf16.gmra.mxu0 %v948
        %v1239 = vpop.f32.mrf.mxu0
        %v1240 = vadd.f32 %v979, %v1239
        %v1241 = vpop.f32.mrf.mxu0
        %v1242 = vpop.f32.mrf.mxu0
        %v1243 = vadd.f32 %v979, %v1242
        %v1244 = vpop.f32.mrf.mxu0
        %1245 = vmatprep.mubr.bf16.mxu0 0
        %1246 = vmatmul.mubr.bf16.gmra.mxu0 %v949
        %v1247 = vpop.f32.mrf.mxu0
        %v1248 = vadd.f32 %v979, %v1247
        %v1249 = vpop.f32.mrf.mxu0
        %v1250 = vpop.f32.mrf.mxu0
        %v1251 = vadd.f32 %v979, %v1250
        %v1252 = vpop.f32.mrf.mxu0
        %1253 = vmatprep.mubr.bf16.mxu0 0
        %1254 = vmatmul.mubr.bf16.gmra.mxu0 %v950
        %v1255 = vpop.f32.mrf.mxu0
        %v1256 = vadd.f32 %v979, %v1255
        %v1257 = vpop.f32.mrf.mxu0
        %v1258 = vpop.f32.mrf.mxu0
        %v1259 = vadd.f32 %v979, %v1258
        %v1260 = vpop.f32.mrf.mxu0
        %1261 = vmatprep.mubr.bf16.mxu0 0
        %1262 = vmatmul.mubr.bf16.gmra.mxu0 %v951
        %v1263 = vpop.f32.mrf.mxu0
        %v1264 = vadd.f32 %v979, %v1263
        %v1265 = vpop.f32.mrf.mxu0
        %v1266 = vpop.f32.mrf.mxu0
        %v1267 = vadd.f32 %v979, %v1266
        %v1268 = vpop.f32.mrf.mxu0
        %1269 = vmatprep.mubr.bf16.mxu0 0
        %1270 = vmatmul.mubr.bf16.gmra.mxu0 %v952
        %v1271 = vpop.f32.mrf.mxu0
        %v1272 = vadd.f32 %v979, %v1271
        %v1273 = vpop.f32.mrf.mxu0
        %v1274 = vpop.f32.mrf.mxu0
        %v1275 = vadd.f32 %v979, %v1274
        %v1276 = vpop.f32.mrf.mxu0
        %1277 = vmatprep.mubr.bf16.mxu0 0
        %1278 = vmatmul.mubr.bf16.gmra.mxu0 %v953
        %v1279 = vpop.f32.mrf.mxu0
        %v1280 = vadd.f32 %v979, %v1279
        %v1281 = vpop.f32.mrf.mxu0
        %v1282 = vpop.f32.mrf.mxu0
        %v1283 = vadd.f32 %v979, %v1282
        %v1284 = vpop.f32.mrf.mxu0
        %1285 = vmatprep.mubr.bf16.mxu0 0
        %1286 = vmatmul.mubr.bf16.gmra.mxu0 %v954
        %v1287 = vpop.f32.mrf.mxu0
        %v1288 = vadd.f32 %v979, %v1287
        %v1289 = vpop.f32.mrf.mxu0
        %v1290 = vpop.f32.mrf.mxu0
        %v1291 = vadd.f32 %v979, %v1290
        %v1292 = vpop.f32.mrf.mxu0
        %1293 = vmatprep.mubr.bf16.mxu0 0
        %1294 = vmatmul.mubr.bf16.gmra.mxu0 %v955
        %v1295 = vpop.f32.mrf.mxu0
        %v1296 = vadd.f32 %v979, %v1295
        %v1297 = vpop.f32.mrf.mxu0
        %v1298 = vpop.f32.mrf.mxu0
        %v1299 = vadd.f32 %v979, %v1298
        %v1300 = vpop.f32.mrf.mxu0
        %1301 = vmatprep.mubr.bf16.mxu0 0
        %1302 = vmatmul.mubr.bf16.gmra.mxu0 %v956
        %v1303 = vpop.f32.mrf.mxu0
        %v1304 = vadd.f32 %v979, %v1303
        %v1305 = vpop.f32.mrf.mxu0
        %v1306 = vpop.f32.mrf.mxu0
        %v1307 = vadd.f32 %v979, %v1306
        %v1308 = vpop.f32.mrf.mxu0
        %1309 = vmatprep.mubr.bf16.mxu0 0
        %1310 = vmatmul.mubr.bf16.gmra.mxu0 %v957
        %v1311 = vpop.f32.mrf.mxu0
        %v1312 = vadd.f32 %v979, %v1311
        %v1313 = vpop.f32.mrf.mxu0
        %v1314 = vpop.f32.mrf.mxu0
        %v1315 = vadd.f32 %v979, %v1314
        %v1316 = vpop.f32.mrf.mxu0
        %1317 = vdwg.mxu0
        %v1318 = vmul.f32 %v1064, 0.2
        %v1319 = vmul.f32 %v1067, 0.2
        %v1320 = vmul.f32 %v1072, 0.2
        %v1321 = vmul.f32 %v1075, 0.2
        %v1322 = vmul.f32 %v1080, 0.2
        %v1323 = vmul.f32 %v1083, 0.2
        %v1324 = vmul.f32 %v1088, 0.2
        %v1325 = vmul.f32 %v1091, 0.2
        %v1326 = vmul.f32 %v1096, 0.2
        %v1327 = vmul.f32 %v1099, 0.2
        %v1328 = vmul.f32 %v1104, 0.2
        %v1329 = vmul.f32 %v1107, 0.2
        %v1330 = vmul.f32 %v1112, 0.2
        %v1331 = vmul.f32 %v1115, 0.2
        %v1332 = vmul.f32 %v1120, 0.2
        %v1333 = vmul.f32 %v1123, 0.2
        %v1334 = vmul.f32 %v1128, 0.2
        %v1335 = vmul.f32 %v1131, 0.2
        %v1336 = vmul.f32 %v1136, 0.2
        %v1337 = vmul.f32 %v1139, 0.2
        %v1338 = vmul.f32 %v1144, 0.2
        %v1339 = vmul.f32 %v1147, 0.2
        %v1340 = vmul.f32 %v1152, 0.2
        %v1341 = vmul.f32 %v1155, 0.2
        %v1342 = vmul.f32 %v1160, 0.2
        %v1343 = vmul.f32 %v1163, 0.2
        %v1344 = vmul.f32 %v1168, 0.2
        %v1345 = vmul.f32 %v1171, 0.2
        %v1346 = vmul.f32 %v1176, 0.2
        %v1347 = vmul.f32 %v1179, 0.2
        %v1348 = vmul.f32 %v1184, 0.2
        %v1349 = vmul.f32 %v1187, 0.2
        %v1350 = vmul.f32 %v1192, 0.2
        %v1351 = vmul.f32 %v1195, 0.2
        %v1352 = vmul.f32 %v1200, 0.2
        %v1353 = vmul.f32 %v1203, 0.2
        %v1354 = vmul.f32 %v1208, 0.2
        %v1355 = vmul.f32 %v1211, 0.2
        %v1356 = vmul.f32 %v1216, 0.2
        %v1357 = vmul.f32 %v1219, 0.2
        %v1358 = vmul.f32 %v1224, 0.2
        %v1359 = vmul.f32 %v1227, 0.2
        %v1360 = vmul.f32 %v1232, 0.2
        %v1361 = vmul.f32 %v1235, 0.2
        %v1362 = vmul.f32 %v1240, 0.2
        %v1363 = vmul.f32 %v1243, 0.2
        %v1364 = vmul.f32 %v1248, 0.2
        %v1365 = vmul.f32 %v1251, 0.2
        %v1366 = vmul.f32 %v1256, 0.2
        %v1367 = vmul.f32 %v1259, 0.2
        %v1368 = vmul.f32 %v1264, 0.2
        %v1369 = vmul.f32 %v1267, 0.2
        %v1370 = vmul.f32 %v1272, 0.2
        %v1371 = vmul.f32 %v1275, 0.2
        %v1372 = vmul.f32 %v1280, 0.2
        %v1373 = vmul.f32 %v1283, 0.2
        %v1374 = vmul.f32 %v1288, 0.2
        %v1375 = vmul.f32 %v1291, 0.2
        %v1376 = vmul.f32 %v1296, 0.2
        %v1377 = vmul.f32 %v1299, 0.2
        %v1378 = vmul.f32 %v1304, 0.2
        %v1379 = vmul.f32 %v1307, 0.2
        %v1380 = vmul.f32 %v1312, 0.2
        %v1381 = vmul.f32 %v1315, 0.2
        %v1382 = vmax.f32 %v1064, %v1318
        %v1383 = vmax.f32 %v1067, %v1319
        %v1384 = vmax.f32 %v1072, %v1320
        %v1385 = vmax.f32 %v1075, %v1321
        %v1386 = vmax.f32 %v1080, %v1322
        %v1387 = vmax.f32 %v1083, %v1323
        %v1388 = vmax.f32 %v1088, %v1324
        %v1389 = vmax.f32 %v1091, %v1325
        %v1390 = vmax.f32 %v1096, %v1326
        %v1391 = vmax.f32 %v1099, %v1327
        %v1392 = vmax.f32 %v1104, %v1328
        %v1393 = vmax.f32 %v1107, %v1329
        %v1394 = vmax.f32 %v1112, %v1330
        %v1395 = vmax.f32 %v1115, %v1331
        %v1396 = vmax.f32 %v1120, %v1332
        %v1397 = vmax.f32 %v1123, %v1333
        %v1398 = vmax.f32 %v1128, %v1334
        %v1399 = vmax.f32 %v1131, %v1335
        %v1400 = vmax.f32 %v1136, %v1336
        %v1401 = vmax.f32 %v1139, %v1337
        %v1402 = vmax.f32 %v1144, %v1338
        %v1403 = vmax.f32 %v1147, %v1339
        %v1404 = vmax.f32 %v1152, %v1340
        %v1405 = vmax.f32 %v1155, %v1341
        %v1406 = vmax.f32 %v1160, %v1342
        %v1407 = vmax.f32 %v1163, %v1343
        %v1408 = vmax.f32 %v1168, %v1344
        %v1409 = vmax.f32 %v1171, %v1345
        %v1410 = vmax.f32 %v1176, %v1346
        %v1411 = vmax.f32 %v1179, %v1347
        %v1412 = vmax.f32 %v1184, %v1348
        %v1413 = vmax.f32 %v1187, %v1349
        %v1414 = vmax.f32 %v1192, %v1350
        %v1415 = vmax.f32 %v1195, %v1351
        %v1416 = vmax.f32 %v1200, %v1352
        %v1417 = vmax.f32 %v1203, %v1353
        %v1418 = vmax.f32 %v1208, %v1354
        %v1419 = vmax.f32 %v1211, %v1355
        %v1420 = vmax.f32 %v1216, %v1356
        %v1421 = vmax.f32 %v1219, %v1357
        %v1422 = vmax.f32 %v1224, %v1358
        %v1423 = vmax.f32 %v1227, %v1359
        %v1424 = vmax.f32 %v1232, %v1360
        %v1425 = vmax.f32 %v1235, %v1361
        %v1426 = vmax.f32 %v1240, %v1362
        %v1427 = vmax.f32 %v1243, %v1363
        %v1428 = vmax.f32 %v1248, %v1364
        %v1429 = vmax.f32 %v1251, %v1365
        %v1430 = vmax.f32 %v1256, %v1366
        %v1431 = vmax.f32 %v1259, %v1367
        %v1432 = vmax.f32 %v1264, %v1368
        %v1433 = vmax.f32 %v1267, %v1369
        %v1434 = vmax.f32 %v1272, %v1370
        %v1435 = vmax.f32 %v1275, %v1371
        %v1436 = vmax.f32 %v1280, %v1372
        %v1437 = vmax.f32 %v1283, %v1373
        %v1438 = vmax.f32 %v1288, %v1374
        %v1439 = vmax.f32 %v1291, %v1375
        %v1440 = vmax.f32 %v1296, %v1376
        %v1441 = vmax.f32 %v1299, %v1377
        %v1442 = vmax.f32 %v1304, %v1378
        %v1443 = vmax.f32 %v1307, %v1379
        %v1444 = vmax.f32 %v1312, %v1380
        %v1445 = vmax.f32 %v1315, %v1381
        %v1446 = vpack.c.bf16 %v1383, %v1382
        %v1447 = vpack.c.bf16 %v1385, %v1384
        %v1448 = vpack.c.bf16 %v1387, %v1386
        %v1449 = vpack.c.bf16 %v1389, %v1388
        %v1450 = vpack.c.bf16 %v1391, %v1390
        %v1451 = vpack.c.bf16 %v1393, %v1392
        %v1452 = vpack.c.bf16 %v1395, %v1394
        %v1453 = vpack.c.bf16 %v1397, %v1396
        %v1454 = vpack.c.bf16 %v1399, %v1398
        %v1455 = vpack.c.bf16 %v1401, %v1400
        %v1456 = vpack.c.bf16 %v1403, %v1402
        %v1457 = vpack.c.bf16 %v1405, %v1404
        %v1458 = vpack.c.bf16 %v1407, %v1406
        %v1459 = vpack.c.bf16 %v1409, %v1408
        %v1460 = vpack.c.bf16 %v1411, %v1410
        %v1461 = vpack.c.bf16 %v1413, %v1412
        %v1462 = vpack.c.bf16 %v1415, %v1414
        %v1463 = vpack.c.bf16 %v1417, %v1416
        %v1464 = vpack.c.bf16 %v1419, %v1418
        %v1465 = vpack.c.bf16 %v1421, %v1420
        %v1466 = vpack.c.bf16 %v1423, %v1422
        %v1467 = vpack.c.bf16 %v1425, %v1424
        %v1468 = vpack.c.bf16 %v1427, %v1426
        %v1469 = vpack.c.bf16 %v1429, %v1428
        %v1470 = vpack.c.bf16 %v1431, %v1430
        %v1471 = vpack.c.bf16 %v1433, %v1432
        %v1472 = vpack.c.bf16 %v1435, %v1434
        %v1473 = vpack.c.bf16 %v1437, %v1436
        %v1474 = vpack.c.bf16 %v1439, %v1438
        %v1475 = vpack.c.bf16 %v1441, %v1440
        %v1476 = vpack.c.bf16 %v1443, %v1442
        %v1477 = vpack.c.bf16 %v1445, %v1444
        %v1478 = vld [vmem:[%s5] sm:$0xf]
        %v1479 = vld [vmem:[%s5 + $0x4] sm:$0xf]
        %v1480 = vld [vmem:[%s5 + $0x8] sm:$0xf]
        %v1481 = vld [vmem:[%s5 + $0xc] sm:$0xf]
        %v1482 = vld [vmem:[%s5 + $0x10] sm:$0xf]
        %v1483 = vld [vmem:[%s5 + $0x14] sm:$0xf]
        %v1484 = vld [vmem:[%s5 + $0x18] sm:$0xf]
        %v1485 = vld [vmem:[%s5 + $0x1c] sm:$0xf]
        %v1486 = vld [vmem:[%s5 + $0x20] sm:$0xf]
        %v1487 = vld [vmem:[%s5 + $0x24] sm:$0xf]
        %v1488 = vld [vmem:[%s5 + $0x28] sm:$0xf]
        %v1489 = vld [vmem:[%s5 + $0x2c] sm:$0xf]
        %v1490 = vld [vmem:[%s5 + $0x30] sm:$0xf]
        %v1491 = vld [vmem:[%s5 + $0x34] sm:$0xf]
        %v1492 = vld [vmem:[%s5 + $0x38] sm:$0xf]
        %v1493 = vld [vmem:[%s5 + $0x3c] sm:$0xf]
        %v1494 = vld [vmem:[%s6] sm:$0x1]
        %v1496 = vlaneseq
        %v1497 = vshrl.u32 %v1496, 7
        %v1498 = vsub.s32 0, %v1497
        %v1499 = vrot.slane %v1494, %v1498
        %v1517 = vunpack.c.l.b16 %v1478
        %v1518 = vunpack.c.l.b16 %v1479
        %v1519 = vunpack.c.l.b16 %v1480
        %v1520 = vunpack.c.l.b16 %v1481
        %v1521 = vunpack.c.l.b16 %v1482
        %v1522 = vunpack.c.l.b16 %v1483
        %v1523 = vunpack.c.l.b16 %v1484
        %v1524 = vunpack.c.l.b16 %v1485
        %v1525 = vunpack.c.l.b16 %v1486
        %v1526 = vunpack.c.l.b16 %v1487
        %v1527 = vunpack.c.l.b16 %v1488
        %v1528 = vunpack.c.l.b16 %v1489
        %v1529 = vunpack.c.l.b16 %v1490
        %v1530 = vunpack.c.l.b16 %v1491
        %v1531 = vunpack.c.l.b16 %v1492
        %v1532 = vunpack.c.l.b16 %v1493
        %v1533 = vpack.c.b16 %v1518, %v1517
        %v1534 = vpack.c.b16 %v1520, %v1519
        %v1535 = vpack.c.b16 %v1522, %v1521
        %v1536 = vpack.c.b16 %v1524, %v1523
        %v1537 = vpack.c.b16 %v1526, %v1525
        %v1538 = vpack.c.b16 %v1528, %v1527
        %v1539 = vpack.c.b16 %v1530, %v1529
        %v1540 = vpack.c.b16 %v1532, %v1531
        %1549 = vmatprep.subr.bf16.mxu0 0
        %1550 = vmatpush1.bf16.msra.mxu0 %v1540
        %1551 = vmatprep.subr.bf16.mxu0 0
        %1552 = vmatpush1.bf16.msra.mxu0 %v1539
        %1553 = vmatprep.subr.bf16.mxu0 0
        %1554 = vmatpush1.bf16.msra.mxu0 %v1538
        %1555 = vmatprep.subr.bf16.mxu0 0
        %1556 = vmatpush1.bf16.msra.mxu0 %v1537
        %1557 = vmatprep.subr.bf16.mxu0 0
        %1558 = vmatpush1.bf16.msra.mxu0 %v1536
        %1559 = vmatprep.subr.bf16.mxu0 0
        %1560 = vmatpush1.bf16.msra.mxu0 %v1535
        %1561 = vmatprep.subr.bf16.mxu0 0
        %1562 = vmatpush1.bf16.msra.mxu0 %v1534
        %1563 = vmatprep.subr.bf16.mxu0 0
        %1564 = vmatpush1.bf16.msra.mxu0 %v1533
        %1565 = vmatprep.subr.bf16.mxu0 0
        %1566 = vmatpush2.bf16.msra.mxu0 0
        %1567 = vmatprep.subr.bf16.mxu0 0
        %1568 = vmatpush2.bf16.msra.mxu0 0
        %1569 = vmatprep.subr.bf16.mxu0 0
        %1570 = vmatpush2.bf16.msra.mxu0 0
        %1571 = vmatprep.subr.bf16.mxu0 0
        %1572 = vmatpush2.bf16.msra.mxu0 0
        %1573 = vmatprep.subr.bf16.mxu0 0
        %1574 = vmatpush2.bf16.msra.mxu0 0
        %1575 = vmatprep.subr.bf16.mxu0 0
        %1576 = vmatpush2.bf16.msra.mxu0 0
        %1577 = vmatprep.subr.bf16.mxu0 0
        %1578 = vmatpush2.bf16.msra.mxu0 0
        %1579 = vmatprep.subr.bf16.mxu0 0
        %1580 = vmatpush2.bf16.msra.mxu0 0
        %1581 = vmatprep.mubr.bf16.mxu0 0
        %1582 = vmatmul.mubr.bf16.gmra.mxu0 %v1446
        %v1583 = vpop.f32.mrf.mxu0
        %v1584 = vadd.f32 %v1499, %v1583
        %v1585 = vpop.f32.mrf.mxu0
        %v1586 = vpop.f32.mrf.mxu0
        %v1587 = vadd.f32 %v1499, %v1586
        %v1588 = vpop.f32.mrf.mxu0
        %1589 = vmatprep.mubr.bf16.mxu0 0
        %1590 = vmatmul.mubr.bf16.gmra.mxu0 %v1447
        %v1591 = vpop.f32.mrf.mxu0
        %v1592 = vadd.f32 %v1499, %v1591
        %v1593 = vpop.f32.mrf.mxu0
        %v1594 = vpop.f32.mrf.mxu0
        %v1595 = vadd.f32 %v1499, %v1594
        %v1596 = vpop.f32.mrf.mxu0
        %1597 = vmatprep.mubr.bf16.mxu0 0
        %1598 = vmatmul.mubr.bf16.gmra.mxu0 %v1448
        %v1599 = vpop.f32.mrf.mxu0
        %v1600 = vadd.f32 %v1499, %v1599
        %v1601 = vpop.f32.mrf.mxu0
        %v1602 = vpop.f32.mrf.mxu0
        %v1603 = vadd.f32 %v1499, %v1602
        %v1604 = vpop.f32.mrf.mxu0
        %1605 = vmatprep.mubr.bf16.mxu0 0
        %1606 = vmatmul.mubr.bf16.gmra.mxu0 %v1449
        %v1607 = vpop.f32.mrf.mxu0
        %v1608 = vadd.f32 %v1499, %v1607
        %v1609 = vpop.f32.mrf.mxu0
        %v1610 = vpop.f32.mrf.mxu0
        %v1611 = vadd.f32 %v1499, %v1610
        %v1612 = vpop.f32.mrf.mxu0
        %1613 = vmatprep.mubr.bf16.mxu0 0
        %1614 = vmatmul.mubr.bf16.gmra.mxu0 %v1450
        %v1615 = vpop.f32.mrf.mxu0
        %v1616 = vadd.f32 %v1499, %v1615
        %v1617 = vpop.f32.mrf.mxu0
        %v1618 = vpop.f32.mrf.mxu0
        %v1619 = vadd.f32 %v1499, %v1618
        %v1620 = vpop.f32.mrf.mxu0
        %1621 = vmatprep.mubr.bf16.mxu0 0
        %1622 = vmatmul.mubr.bf16.gmra.mxu0 %v1451
        %v1623 = vpop.f32.mrf.mxu0
        %v1624 = vadd.f32 %v1499, %v1623
        %v1625 = vpop.f32.mrf.mxu0
        %v1626 = vpop.f32.mrf.mxu0
        %v1627 = vadd.f32 %v1499, %v1626
        %v1628 = vpop.f32.mrf.mxu0
        %1629 = vmatprep.mubr.bf16.mxu0 0
        %1630 = vmatmul.mubr.bf16.gmra.mxu0 %v1452
        %v1631 = vpop.f32.mrf.mxu0
        %v1632 = vadd.f32 %v1499, %v1631
        %v1633 = vpop.f32.mrf.mxu0
        %v1634 = vpop.f32.mrf.mxu0
        %v1635 = vadd.f32 %v1499, %v1634
        %v1636 = vpop.f32.mrf.mxu0
        %1637 = vmatprep.mubr.bf16.mxu0 0
        %1638 = vmatmul.mubr.bf16.gmra.mxu0 %v1453
        %v1639 = vpop.f32.mrf.mxu0
        %v1640 = vadd.f32 %v1499, %v1639
        %v1641 = vpop.f32.mrf.mxu0
        %v1642 = vpop.f32.mrf.mxu0
        %v1643 = vadd.f32 %v1499, %v1642
        %v1644 = vpop.f32.mrf.mxu0
        %1645 = vmatprep.mubr.bf16.mxu0 0
        %1646 = vmatmul.mubr.bf16.gmra.mxu0 %v1454
        %v1647 = vpop.f32.mrf.mxu0
        %v1648 = vadd.f32 %v1499, %v1647
        %v1649 = vpop.f32.mrf.mxu0
        %v1650 = vpop.f32.mrf.mxu0
        %v1651 = vadd.f32 %v1499, %v1650
        %v1652 = vpop.f32.mrf.mxu0
        %1653 = vmatprep.mubr.bf16.mxu0 0
        %1654 = vmatmul.mubr.bf16.gmra.mxu0 %v1455
        %v1655 = vpop.f32.mrf.mxu0
        %v1656 = vadd.f32 %v1499, %v1655
        %v1657 = vpop.f32.mrf.mxu0
        %v1658 = vpop.f32.mrf.mxu0
        %v1659 = vadd.f32 %v1499, %v1658
        %v1660 = vpop.f32.mrf.mxu0
        %1661 = vmatprep.mubr.bf16.mxu0 0
        %1662 = vmatmul.mubr.bf16.gmra.mxu0 %v1456
        %v1663 = vpop.f32.mrf.mxu0
        %v1664 = vadd.f32 %v1499, %v1663
        %v1665 = vpop.f32.mrf.mxu0
        %v1666 = vpop.f32.mrf.mxu0
        %v1667 = vadd.f32 %v1499, %v1666
        %v1668 = vpop.f32.mrf.mxu0
        %1669 = vmatprep.mubr.bf16.mxu0 0
        %1670 = vmatmul.mubr.bf16.gmra.mxu0 %v1457
        %v1671 = vpop.f32.mrf.mxu0
        %v1672 = vadd.f32 %v1499, %v1671
        %v1673 = vpop.f32.mrf.mxu0
        %v1674 = vpop.f32.mrf.mxu0
        %v1675 = vadd.f32 %v1499, %v1674
        %v1676 = vpop.f32.mrf.mxu0
        %1677 = vmatprep.mubr.bf16.mxu0 0
        %1678 = vmatmul.mubr.bf16.gmra.mxu0 %v1458
        %v1679 = vpop.f32.mrf.mxu0
        %v1680 = vadd.f32 %v1499, %v1679
        %v1681 = vpop.f32.mrf.mxu0
        %v1682 = vpop.f32.mrf.mxu0
        %v1683 = vadd.f32 %v1499, %v1682
        %v1684 = vpop.f32.mrf.mxu0
        %1685 = vmatprep.mubr.bf16.mxu0 0
        %1686 = vmatmul.mubr.bf16.gmra.mxu0 %v1459
        %v1687 = vpop.f32.mrf.mxu0
        %v1688 = vadd.f32 %v1499, %v1687
        %v1689 = vpop.f32.mrf.mxu0
        %v1690 = vpop.f32.mrf.mxu0
        %v1691 = vadd.f32 %v1499, %v1690
        %v1692 = vpop.f32.mrf.mxu0
        %1693 = vmatprep.mubr.bf16.mxu0 0
        %1694 = vmatmul.mubr.bf16.gmra.mxu0 %v1460
        %v1695 = vpop.f32.mrf.mxu0
        %v1696 = vadd.f32 %v1499, %v1695
        %v1697 = vpop.f32.mrf.mxu0
        %v1698 = vpop.f32.mrf.mxu0
        %v1699 = vadd.f32 %v1499, %v1698
        %v1700 = vpop.f32.mrf.mxu0
        %1701 = vmatprep.mubr.bf16.mxu0 0
        %1702 = vmatmul.mubr.bf16.gmra.mxu0 %v1461
        %v1703 = vpop.f32.mrf.mxu0
        %v1704 = vadd.f32 %v1499, %v1703
        %v1705 = vpop.f32.mrf.mxu0
        %v1706 = vpop.f32.mrf.mxu0
        %v1707 = vadd.f32 %v1499, %v1706
        %v1708 = vpop.f32.mrf.mxu0
        %1709 = vmatprep.mubr.bf16.mxu0 0
        %1710 = vmatmul.mubr.bf16.gmra.mxu0 %v1462
        %v1711 = vpop.f32.mrf.mxu0
        %v1712 = vadd.f32 %v1499, %v1711
        %v1713 = vpop.f32.mrf.mxu0
        %v1714 = vpop.f32.mrf.mxu0
        %v1715 = vadd.f32 %v1499, %v1714
        %v1716 = vpop.f32.mrf.mxu0
        %1717 = vmatprep.mubr.bf16.mxu0 0
        %1718 = vmatmul.mubr.bf16.gmra.mxu0 %v1463
        %v1719 = vpop.f32.mrf.mxu0
        %v1720 = vadd.f32 %v1499, %v1719
        %v1721 = vpop.f32.mrf.mxu0
        %v1722 = vpop.f32.mrf.mxu0
        %v1723 = vadd.f32 %v1499, %v1722
        %v1724 = vpop.f32.mrf.mxu0
        %1725 = vmatprep.mubr.bf16.mxu0 0
        %1726 = vmatmul.mubr.bf16.gmra.mxu0 %v1464
        %v1727 = vpop.f32.mrf.mxu0
        %v1728 = vadd.f32 %v1499, %v1727
        %v1729 = vpop.f32.mrf.mxu0
        %v1730 = vpop.f32.mrf.mxu0
        %v1731 = vadd.f32 %v1499, %v1730
        %v1732 = vpop.f32.mrf.mxu0
        %1733 = vmatprep.mubr.bf16.mxu0 0
        %1734 = vmatmul.mubr.bf16.gmra.mxu0 %v1465
        %v1735 = vpop.f32.mrf.mxu0
        %v1736 = vadd.f32 %v1499, %v1735
        %v1737 = vpop.f32.mrf.mxu0
        %v1738 = vpop.f32.mrf.mxu0
        %v1739 = vadd.f32 %v1499, %v1738
        %v1740 = vpop.f32.mrf.mxu0
        %1741 = vmatprep.mubr.bf16.mxu0 0
        %1742 = vmatmul.mubr.bf16.gmra.mxu0 %v1466
        %v1743 = vpop.f32.mrf.mxu0
        %v1744 = vadd.f32 %v1499, %v1743
        %v1745 = vpop.f32.mrf.mxu0
        %v1746 = vpop.f32.mrf.mxu0
        %v1747 = vadd.f32 %v1499, %v1746
        %v1748 = vpop.f32.mrf.mxu0
        %1749 = vmatprep.mubr.bf16.mxu0 0
        %1750 = vmatmul.mubr.bf16.gmra.mxu0 %v1467
        %v1751 = vpop.f32.mrf.mxu0
        %v1752 = vadd.f32 %v1499, %v1751
        %v1753 = vpop.f32.mrf.mxu0
        %v1754 = vpop.f32.mrf.mxu0
        %v1755 = vadd.f32 %v1499, %v1754
        %v1756 = vpop.f32.mrf.mxu0
        %1757 = vmatprep.mubr.bf16.mxu0 0
        %1758 = vmatmul.mubr.bf16.gmra.mxu0 %v1468
        %v1759 = vpop.f32.mrf.mxu0
        %v1760 = vadd.f32 %v1499, %v1759
        %v1761 = vpop.f32.mrf.mxu0
        %v1762 = vpop.f32.mrf.mxu0
        %v1763 = vadd.f32 %v1499, %v1762
        %v1764 = vpop.f32.mrf.mxu0
        %1765 = vmatprep.mubr.bf16.mxu0 0
        %1766 = vmatmul.mubr.bf16.gmra.mxu0 %v1469
        %v1767 = vpop.f32.mrf.mxu0
        %v1768 = vadd.f32 %v1499, %v1767
        %v1769 = vpop.f32.mrf.mxu0
        %v1770 = vpop.f32.mrf.mxu0
        %v1771 = vadd.f32 %v1499, %v1770
        %v1772 = vpop.f32.mrf.mxu0
        %1773 = vmatprep.mubr.bf16.mxu0 0
        %1774 = vmatmul.mubr.bf16.gmra.mxu0 %v1470
        %v1775 = vpop.f32.mrf.mxu0
        %v1776 = vadd.f32 %v1499, %v1775
        %v1777 = vpop.f32.mrf.mxu0
        %v1778 = vpop.f32.mrf.mxu0
        %v1779 = vadd.f32 %v1499, %v1778
        %v1780 = vpop.f32.mrf.mxu0
        %1781 = vmatprep.mubr.bf16.mxu0 0
        %1782 = vmatmul.mubr.bf16.gmra.mxu0 %v1471
        %v1783 = vpop.f32.mrf.mxu0
        %v1784 = vadd.f32 %v1499, %v1783
        %v1785 = vpop.f32.mrf.mxu0
        %v1786 = vpop.f32.mrf.mxu0
        %v1787 = vadd.f32 %v1499, %v1786
        %v1788 = vpop.f32.mrf.mxu0
        %1789 = vmatprep.mubr.bf16.mxu0 0
        %1790 = vmatmul.mubr.bf16.gmra.mxu0 %v1472
        %v1791 = vpop.f32.mrf.mxu0
        %v1792 = vadd.f32 %v1499, %v1791
        %v1793 = vpop.f32.mrf.mxu0
        %v1794 = vpop.f32.mrf.mxu0
        %v1795 = vadd.f32 %v1499, %v1794
        %v1796 = vpop.f32.mrf.mxu0
        %1797 = vmatprep.mubr.bf16.mxu0 0
        %1798 = vmatmul.mubr.bf16.gmra.mxu0 %v1473
        %v1799 = vpop.f32.mrf.mxu0
        %v1800 = vadd.f32 %v1499, %v1799
        %v1801 = vpop.f32.mrf.mxu0
        %v1802 = vpop.f32.mrf.mxu0
        %v1803 = vadd.f32 %v1499, %v1802
        %v1804 = vpop.f32.mrf.mxu0
        %1805 = vmatprep.mubr.bf16.mxu0 0
        %1806 = vmatmul.mubr.bf16.gmra.mxu0 %v1474
        %v1807 = vpop.f32.mrf.mxu0
        %v1808 = vadd.f32 %v1499, %v1807
        %v1809 = vpop.f32.mrf.mxu0
        %v1810 = vpop.f32.mrf.mxu0
        %v1811 = vadd.f32 %v1499, %v1810
        %v1812 = vpop.f32.mrf.mxu0
        %1813 = vmatprep.mubr.bf16.mxu0 0
        %1814 = vmatmul.mubr.bf16.gmra.mxu0 %v1475
        %v1815 = vpop.f32.mrf.mxu0
        %v1816 = vadd.f32 %v1499, %v1815
        %v1817 = vpop.f32.mrf.mxu0
        %v1818 = vpop.f32.mrf.mxu0
        %v1819 = vadd.f32 %v1499, %v1818
        %v1820 = vpop.f32.mrf.mxu0
        %1821 = vmatprep.mubr.bf16.mxu0 0
        %1822 = vmatmul.mubr.bf16.gmra.mxu0 %v1476
        %v1823 = vpop.f32.mrf.mxu0
        %v1824 = vadd.f32 %v1499, %v1823
        %v1825 = vpop.f32.mrf.mxu0
        %v1826 = vpop.f32.mrf.mxu0
        %v1827 = vadd.f32 %v1499, %v1826
        %v1828 = vpop.f32.mrf.mxu0
        %1829 = vmatprep.mubr.bf16.mxu0 0
        %1830 = vmatmul.mubr.bf16.gmra.mxu0 %v1477
        %v1831 = vpop.f32.mrf.mxu0
        %v1832 = vadd.f32 %v1499, %v1831
        %v1833 = vpop.f32.mrf.mxu0
        %v1834 = vpop.f32.mrf.mxu0
        %v1835 = vadd.f32 %v1499, %v1834
        %v1836 = vpop.f32.mrf.mxu0
        %1837 = vdwg.mxu0
        %1838 = vst [vmem:[%s280] sm:$0xff] %v1584
        %1839 = vst [vmem:[%s280 + $0x8] sm:$0xff] %v1587
        %1840 = vst [vmem:[%s280 + $0x10] sm:$0xff] %v1592
        %1841 = vst [vmem:[%s280 + $0x18] sm:$0xff] %v1595
        %1842 = vst [vmem:[%s280 + $0x20] sm:$0xff] %v1600
        %1843 = vst [vmem:[%s280 + $0x28] sm:$0xff] %v1603
        %1844 = vst [vmem:[%s280 + $0x30] sm:$0xff] %v1608
        %1845 = vst [vmem:[%s280 + $0x38] sm:$0xff] %v1611
        %1846 = vst [vmem:[%s280 + $0x40] sm:$0xff] %v1616
        %1847 = vst [vmem:[%s280 + $0x48] sm:$0xff] %v1619
        %1848 = vst [vmem:[%s280 + $0x50] sm:$0xff] %v1624
        %1849 = vst [vmem:[%s280 + $0x58] sm:$0xff] %v1627
        %1850 = vst [vmem:[%s280 + $0x60] sm:$0xff] %v1632
        %1851 = vst [vmem:[%s280 + $0x68] sm:$0xff] %v1635
        %1852 = vst [vmem:[%s280 + $0x70] sm:$0xff] %v1640
        %1853 = vst [vmem:[%s280 + $0x78] sm:$0xff] %v1643
        %1854 = vst [vmem:[%s280 + $0x80] sm:$0xff] %v1648
        %1855 = vst [vmem:[%s280 + $0x88] sm:$0xff] %v1651
        %1856 = vst [vmem:[%s280 + $0x90] sm:$0xff] %v1656
        %1857 = vst [vmem:[%s280 + $0x98] sm:$0xff] %v1659
        %1858 = vst [vmem:[%s280 + $0xa0] sm:$0xff] %v1664
        %1859 = vst [vmem:[%s280 + $0xa8] sm:$0xff] %v1667
        %1860 = vst [vmem:[%s280 + $0xb0] sm:$0xff] %v1672
        %1861 = vst [vmem:[%s280 + $0xb8] sm:$0xff] %v1675
        %1862 = vst [vmem:[%s280 + $0xc0] sm:$0xff] %v1680
        %1863 = vst [vmem:[%s280 + $0xc8] sm:$0xff] %v1683
        %1864 = vst [vmem:[%s280 + $0xd0] sm:$0xff] %v1688
        %1865 = vst [vmem:[%s280 + $0xd8] sm:$0xff] %v1691
        %1866 = vst [vmem:[%s280 + $0xe0] sm:$0xff] %v1696
        %1867 = vst [vmem:[%s280 + $0xe8] sm:$0xff] %v1699
        %1868 = vst [vmem:[%s280 + $0xf0] sm:$0xff] %v1704
        %1869 = vst [vmem:[%s280 + $0xf8] sm:$0xff] %v1707
        %1870 = vst [vmem:[%s280 + $0x100] sm:$0xff] %v1712
        %1871 = vst [vmem:[%s280 + $0x108] sm:$0xff] %v1715
        %1872 = vst [vmem:[%s280 + $0x110] sm:$0xff] %v1720
        %1873 = vst [vmem:[%s280 + $0x118] sm:$0xff] %v1723
        %1874 = vst [vmem:[%s280 + $0x120] sm:$0xff] %v1728
        %1875 = vst [vmem:[%s280 + $0x128] sm:$0xff] %v1731
        %1876 = vst [vmem:[%s280 + $0x130] sm:$0xff] %v1736
        %1877 = vst [vmem:[%s280 + $0x138] sm:$0xff] %v1739
        %1878 = vst [vmem:[%s280 + $0x140] sm:$0xff] %v1744
        %1879 = vst [vmem:[%s280 + $0x148] sm:$0xff] %v1747
        %1880 = vst [vmem:[%s280 + $0x150] sm:$0xff] %v1752
        %1881 = vst [vmem:[%s280 + $0x158] sm:$0xff] %v1755
        %1882 = vst [vmem:[%s280 + $0x160] sm:$0xff] %v1760
        %1883 = vst [vmem:[%s280 + $0x168] sm:$0xff] %v1763
        %1884 = vst [vmem:[%s280 + $0x170] sm:$0xff] %v1768
        %1885 = vst [vmem:[%s280 + $0x178] sm:$0xff] %v1771
        %1886 = vst [vmem:[%s280 + $0x180] sm:$0xff] %v1776
        %1887 = vst [vmem:[%s280 + $0x188] sm:$0xff] %v1779
        %1888 = vst [vmem:[%s280 + $0x190] sm:$0xff] %v1784
        %1889 = vst [vmem:[%s280 + $0x198] sm:$0xff] %v1787
        %1890 = vst [vmem:[%s280 + $0x1a0] sm:$0xff] %v1792
        %1891 = vst [vmem:[%s280 + $0x1a8] sm:$0xff] %v1795
        %1892 = vst [vmem:[%s280 + $0x1b0] sm:$0xff] %v1800
        %1893 = vst [vmem:[%s280 + $0x1b8] sm:$0xff] %v1803
        %1894 = vst [vmem:[%s280 + $0x1c0] sm:$0xff] %v1808
        %1895 = vst [vmem:[%s280 + $0x1c8] sm:$0xff] %v1811
        %1896 = vst [vmem:[%s280 + $0x1d0] sm:$0xff] %v1816
        %1897 = vst [vmem:[%s280 + $0x1d8] sm:$0xff] %v1819
        %1898 = vst [vmem:[%s280 + $0x1e0] sm:$0xff] %v1824
        %1899 = vst [vmem:[%s280 + $0x1e8] sm:$0xff] %v1827
        %1900 = vst [vmem:[%s280 + $0x1f0] sm:$0xff] %v1832
        %1901 = vst [vmem:[%s280 + $0x1f8] sm:$0xff] %v1835
        %s1902 = sand.u32 %s178, 1
        %s1903 = sand.u32 %s178, 1
        %s1904 = smul.addr %s1903, 512
        %s1905 = scalar_lea.vmem [#allocation2], %s1904
        // Predicated region
        $region49: #{mlp_forward.1} parent=47 // pred_check
          %p1906 = pneg %p188
        $region50: #{mlp_forward.1} parent=47 // pred_check_branch
          %1908 = sbr.rel (%p1906) target = $region52
        $region51: #{mlp_forward.1} parent=47 // pred_region
          %s1909 = smul.u32 64, %s18
          %s1910 = ssub.s32 150, %s1909
          %p1911 = scmp.lt.s32.totalorder %s1910, 64
          %s1912 = scalar_select %p1911, %s1910, 64
          %s1913 = smul.u32 128, %s1912
          %p1914 = scmp.ne.s32.totalorder 0, %s1913
          %s1915 = smul.addr %s1909, 8
          %s1916 = scalar_lea.vmem %s7, %s1915
          // Predicated region
          $region53: #{mlp_forward.1} parent=51 // pred_check
            %p1917 = pneg %p1914
          $region54: #{mlp_forward.1} parent=51 // pred_check_branch
            %1919 = sbr.rel (%p1917) target = $region56
          $region55: #{mlp_forward.1} parent=51 // pred_region
            // Predicated region
            $region57: #{mlp_forward.1} parent=55 // pred_check
              _
            $region58: #{mlp_forward.1} parent=55 // pred_check_branch
              %1921 = sbr.rel (0) target = $region60
            $region59: #{mlp_forward.1} parent=55 // pred_region
              // Predicated region
              $region79: #{mlp_forward.1} parent=59 // pred_check
                _
              $region80: #{mlp_forward.1} parent=59 // pred_check_branch
                %2097 = sbr.rel (0) target = $region82
              $region81: #{mlp_forward.1} parent=59 // pred_region
                %s2098 = sshrl.u32 %s1912, 6
                // While loop
                $region83: #{mlp_forward.1} parent=81 // loop_pre_header
                  _
                $region84: #{mlp_forward.1} parent=81 // loop_header
                  %s2100 = sphi 0, %s2102
                  %p2101 = scmp.ge.s32.totalorder %s2100, %s2098
                  %s2105 = sphi 0, %s2238
                  %s2106 = sphi %s1905, %s2241
                  %s2107 = sphi %s1916, %s2242
                $region85: #{mlp_forward.1} parent=81 // loop_header_branch
                  %2104 = sbr.rel (%p2101) target = $region89
                $region86: #{mlp_forward.1} parent=81 // loop_body
                  %v2108 = vld [vmem:[%s2106] sm:$0xff]
                  %2109 = vst [vmem:[%s2107] sm:$0xff] %v2108
                  %v2110 = vld [vmem:[%s2106 + $0x8] sm:$0xff]
                  %2111 = vst [vmem:[%s2107 + $0x8] sm:$0xff] %v2110
                  %v2112 = vld [vmem:[%s2106 + $0x10] sm:$0xff]
                  %2113 = vst [vmem:[%s2107 + $0x10] sm:$0xff] %v2112
                  %v2114 = vld [vmem:[%s2106 + $0x18] sm:$0xff]
                  %2115 = vst [vmem:[%s2107 + $0x18] sm:$0xff] %v2114
                  %v2116 = vld [vmem:[%s2106 + $0x20] sm:$0xff]
                  %2117 = vst [vmem:[%s2107 + $0x20] sm:$0xff] %v2116
                  %v2118 = vld [vmem:[%s2106 + $0x28] sm:$0xff]
                  %2119 = vst [vmem:[%s2107 + $0x28] sm:$0xff] %v2118
                  %v2120 = vld [vmem:[%s2106 + $0x30] sm:$0xff]
                  %2121 = vst [vmem:[%s2107 + $0x30] sm:$0xff] %v2120
                  %v2122 = vld [vmem:[%s2106 + $0x38] sm:$0xff]
                  %2123 = vst [vmem:[%s2107 + $0x38] sm:$0xff] %v2122
                  %v2124 = vld [vmem:[%s2106 + $0x40] sm:$0xff]
                  %2125 = vst [vmem:[%s2107 + $0x40] sm:$0xff] %v2124
                  %v2126 = vld [vmem:[%s2106 + $0x48] sm:$0xff]
                  %2127 = vst [vmem:[%s2107 + $0x48] sm:$0xff] %v2126
                  %v2128 = vld [vmem:[%s2106 + $0x50] sm:$0xff]
                  %2129 = vst [vmem:[%s2107 + $0x50] sm:$0xff] %v2128
                  %v2130 = vld [vmem:[%s2106 + $0x58] sm:$0xff]
                  %2131 = vst [vmem:[%s2107 + $0x58] sm:$0xff] %v2130
                  %v2132 = vld [vmem:[%s2106 + $0x60] sm:$0xff]
                  %2133 = vst [vmem:[%s2107 + $0x60] sm:$0xff] %v2132
                  %v2134 = vld [vmem:[%s2106 + $0x68] sm:$0xff]
                  %2135 = vst [vmem:[%s2107 + $0x68] sm:$0xff] %v2134
                  %v2136 = vld [vmem:[%s2106 + $0x70] sm:$0xff]
                  %2137 = vst [vmem:[%s2107 + $0x70] sm:$0xff] %v2136
                  %v2138 = vld [vmem:[%s2106 + $0x78] sm:$0xff]
                  %2139 = vst [vmem:[%s2107 + $0x78] sm:$0xff] %v2138
                  %v2140 = vld [vmem:[%s2106 + $0x80] sm:$0xff]
                  %2141 = vst [vmem:[%s2107 + $0x80] sm:$0xff] %v2140
                  %v2142 = vld [vmem:[%s2106 + $0x88] sm:$0xff]
                  %2143 = vst [vmem:[%s2107 + $0x88] sm:$0xff] %v2142
                  %v2144 = vld [vmem:[%s2106 + $0x90] sm:$0xff]
                  %2145 = vst [vmem:[%s2107 + $0x90] sm:$0xff] %v2144
                  %v2146 = vld [vmem:[%s2106 + $0x98] sm:$0xff]
                  %2147 = vst [vmem:[%s2107 + $0x98] sm:$0xff] %v2146
                  %v2148 = vld [vmem:[%s2106 + $0xa0] sm:$0xff]
                  %2149 = vst [vmem:[%s2107 + $0xa0] sm:$0xff] %v2148
                  %v2150 = vld [vmem:[%s2106 + $0xa8] sm:$0xff]
                  %2151 = vst [vmem:[%s2107 + $0xa8] sm:$0xff] %v2150
                  %v2152 = vld [vmem:[%s2106 + $0xb0] sm:$0xff]
                  %2153 = vst [vmem:[%s2107 + $0xb0] sm:$0xff] %v2152
                  %v2154 = vld [vmem:[%s2106 + $0xb8] sm:$0xff]
                  %2155 = vst [vmem:[%s2107 + $0xb8] sm:$0xff] %v2154
                  %v2156 = vld [vmem:[%s2106 + $0xc0] sm:$0xff]
                  %2157 = vst [vmem:[%s2107 + $0xc0] sm:$0xff] %v2156
                  %v2158 = vld [vmem:[%s2106 + $0xc8] sm:$0xff]
                  %2159 = vst [vmem:[%s2107 + $0xc8] sm:$0xff] %v2158
                  %v2160 = vld [vmem:[%s2106 + $0xd0] sm:$0xff]
                  %2161 = vst [vmem:[%s2107 + $0xd0] sm:$0xff] %v2160
                  %v2162 = vld [vmem:[%s2106 + $0xd8] sm:$0xff]
                  %2163 = vst [vmem:[%s2107 + $0xd8] sm:$0xff] %v2162
                  %v2164 = vld [vmem:[%s2106 + $0xe0] sm:$0xff]
                  %2165 = vst [vmem:[%s2107 + $0xe0] sm:$0xff] %v2164
                  %v2166 = vld [vmem:[%s2106 + $0xe8] sm:$0xff]
                  %2167 = vst [vmem:[%s2107 + $0xe8] sm:$0xff] %v2166
                  %v2168 = vld [vmem:[%s2106 + $0xf0] sm:$0xff]
                  %2169 = vst [vmem:[%s2107 + $0xf0] sm:$0xff] %v2168
                  %v2170 = vld [vmem:[%s2106 + $0xf8] sm:$0xff]
                  %2171 = vst [vmem:[%s2107 + $0xf8] sm:$0xff] %v2170
                  %v2172 = vld [vmem:[%s2106 + $0x100] sm:$0xff]
                  %2173 = vst [vmem:[%s2107 + $0x100] sm:$0xff] %v2172
                  %v2174 = vld [vmem:[%s2106 + $0x108] sm:$0xff]
                  %2175 = vst [vmem:[%s2107 + $0x108] sm:$0xff] %v2174
                  %v2176 = vld [vmem:[%s2106 + $0x110] sm:$0xff]
                  %2177 = vst [vmem:[%s2107 + $0x110] sm:$0xff] %v2176
                  %v2178 = vld [vmem:[%s2106 + $0x118] sm:$0xff]
                  %2179 = vst [vmem:[%s2107 + $0x118] sm:$0xff] %v2178
                  %v2180 = vld [vmem:[%s2106 + $0x120] sm:$0xff]
                  %2181 = vst [vmem:[%s2107 + $0x120] sm:$0xff] %v2180
                  %v2182 = vld [vmem:[%s2106 + $0x128] sm:$0xff]
                  %2183 = vst [vmem:[%s2107 + $0x128] sm:$0xff] %v2182
                  %v2184 = vld [vmem:[%s2106 + $0x130] sm:$0xff]
                  %2185 = vst [vmem:[%s2107 + $0x130] sm:$0xff] %v2184
                  %v2186 = vld [vmem:[%s2106 + $0x138] sm:$0xff]
                  %2187 = vst [vmem:[%s2107 + $0x138] sm:$0xff] %v2186
                  %v2188 = vld [vmem:[%s2106 + $0x140] sm:$0xff]
                  %2189 = vst [vmem:[%s2107 + $0x140] sm:$0xff] %v2188
                  %v2190 = vld [vmem:[%s2106 + $0x148] sm:$0xff]
                  %2191 = vst [vmem:[%s2107 + $0x148] sm:$0xff] %v2190
                  %v2192 = vld [vmem:[%s2106 + $0x150] sm:$0xff]
                  %2193 = vst [vmem:[%s2107 + $0x150] sm:$0xff] %v2192
                  %v2194 = vld [vmem:[%s2106 + $0x158] sm:$0xff]
                  %2195 = vst [vmem:[%s2107 + $0x158] sm:$0xff] %v2194
                  %v2196 = vld [vmem:[%s2106 + $0x160] sm:$0xff]
                  %2197 = vst [vmem:[%s2107 + $0x160] sm:$0xff] %v2196
                  %v2198 = vld [vmem:[%s2106 + $0x168] sm:$0xff]
                  %2199 = vst [vmem:[%s2107 + $0x168] sm:$0xff] %v2198
                  %v2200 = vld [vmem:[%s2106 + $0x170] sm:$0xff]
                  %2201 = vst [vmem:[%s2107 + $0x170] sm:$0xff] %v2200
                  %v2202 = vld [vmem:[%s2106 + $0x178] sm:$0xff]
                  %2203 = vst [vmem:[%s2107 + $0x178] sm:$0xff] %v2202
                  %v2204 = vld [vmem:[%s2106 + $0x180] sm:$0xff]
                  %2205 = vst [vmem:[%s2107 + $0x180] sm:$0xff] %v2204
                  %v2206 = vld [vmem:[%s2106 + $0x188] sm:$0xff]
                  %2207 = vst [vmem:[%s2107 + $0x188] sm:$0xff] %v2206
                  %v2208 = vld [vmem:[%s2106 + $0x190] sm:$0xff]
                  %2209 = vst [vmem:[%s2107 + $0x190] sm:$0xff] %v2208
                  %v2210 = vld [vmem:[%s2106 + $0x198] sm:$0xff]
                  %2211 = vst [vmem:[%s2107 + $0x198] sm:$0xff] %v2210
                  %v2212 = vld [vmem:[%s2106 + $0x1a0] sm:$0xff]
                  %2213 = vst [vmem:[%s2107 + $0x1a0] sm:$0xff] %v2212
                  %v2214 = vld [vmem:[%s2106 + $0x1a8] sm:$0xff]
                  %2215 = vst [vmem:[%s2107 + $0x1a8] sm:$0xff] %v2214
                  %v2216 = vld [vmem:[%s2106 + $0x1b0] sm:$0xff]
                  %2217 = vst [vmem:[%s2107 + $0x1b0] sm:$0xff] %v2216
                  %v2218 = vld [vmem:[%s2106 + $0x1b8] sm:$0xff]
                  %2219 = vst [vmem:[%s2107 + $0x1b8] sm:$0xff] %v2218
                  %v2220 = vld [vmem:[%s2106 + $0x1c0] sm:$0xff]
                  %2221 = vst [vmem:[%s2107 + $0x1c0] sm:$0xff] %v2220
                  %v2222 = vld [vmem:[%s2106 + $0x1c8] sm:$0xff]
                  %2223 = vst [vmem:[%s2107 + $0x1c8] sm:$0xff] %v2222
                  %v2224 = vld [vmem:[%s2106 + $0x1d0] sm:$0xff]
                  %2225 = vst [vmem:[%s2107 + $0x1d0] sm:$0xff] %v2224
                  %v2226 = vld [vmem:[%s2106 + $0x1d8] sm:$0xff]
                  %2227 = vst [vmem:[%s2107 + $0x1d8] sm:$0xff] %v2226
                  %v2228 = vld [vmem:[%s2106 + $0x1e0] sm:$0xff]
                  %2229 = vst [vmem:[%s2107 + $0x1e0] sm:$0xff] %v2228
                  %v2230 = vld [vmem:[%s2106 + $0x1e8] sm:$0xff]
                  %2231 = vst [vmem:[%s2107 + $0x1e8] sm:$0xff] %v2230
                  %v2232 = vld [vmem:[%s2106 + $0x1f0] sm:$0xff]
                  %2233 = vst [vmem:[%s2107 + $0x1f0] sm:$0xff] %v2232
                  %v2234 = vld [vmem:[%s2106 + $0x1f8] sm:$0xff]
                  %2235 = vst [vmem:[%s2107 + $0x1f8] sm:$0xff] %v2234
                  %s2236 = sadd.s32 1, %s2105
                  %p2237 = scmp.ge.s32.totalorder %s2236, %s2098
                  %s2238 = scalar_select %p2237, 0, %s2236
                  %s2239 = smul.u32 %s2238, 512
                  %s2240 = smul.u32 %s2238, 512
                  %s2241 = scalar_lea.vmem %s1905, %s2239 [#allocation2]
                  %s2242 = scalar_lea.vmem %s1916, %s2240
                $region87: #{mlp_forward.1} parent=81 // loop_footer
                  %s2102 = sadd.s32 %s2100, 1
                $region88: #{mlp_forward.1} parent=81 // loop_footer_branch
                  %2099 = sbr.rel target = $region84
                $region89: #{mlp_forward.1} parent=81 // loop_exit
                  _
                %s2243 = sshrl.u32 %s1912, 6
                %s2244 = sand.u32 %s1912, 63
                %s2245 = smul.u32 %s2243, 64
                %s2246 = smul.u32 8, %s2245
                %s2247 = scalar_lea.vmem %s1905, %s2246 [#allocation2]
                %s2248 = smul.u32 8, %s2245
                %s2249 = scalar_lea.vmem %s1916, %s2248
                // While loop
                $region90: #{mlp_forward.1} parent=81 // loop_pre_header
                  _
                $region91: #{mlp_forward.1} parent=81 // loop_header
                  %s2251 = sphi 0, %s2253
                  %p2252 = scmp.ge.s32.totalorder %s2251, %s2244
                  %s2256 = sphi 0, %s2263
                  %s2257 = sphi %s2247, %s2266
                  %s2258 = sphi %s2249, %s2267
                $region92: #{mlp_forward.1} parent=81 // loop_header_branch
                  %2255 = sbr.rel (%p2252) target = $region96
                $region93: #{mlp_forward.1} parent=81 // loop_body
                  %v2259 = vld [vmem:[%s2257] sm:$0xff]
                  %2260 = vst [vmem:[%s2258] sm:$0xff] %v2259
                  %s2261 = sadd.s32 1, %s2256
                  %p2262 = scmp.ge.s32.totalorder %s2261, %s2244
                  %s2263 = scalar_select %p2262, 0, %s2261
                  %s2264 = smul.u32 %s2263, 8
                  %s2265 = smul.u32 %s2263, 8
                  %s2266 = scalar_lea.vmem %s2247, %s2264 [#allocation2]
                  %s2267 = scalar_lea.vmem %s2249, %s2265
                $region94: #{mlp_forward.1} parent=81 // loop_footer
                  %s2253 = sadd.s32 %s2251, 1
                $region95: #{mlp_forward.1} parent=81 // loop_footer_branch
                  %2250 = sbr.rel target = $region91
                $region96: #{mlp_forward.1} parent=81 // loop_exit
                  _
              $region82: #{mlp_forward.1} parent=59 // pred_fallthru
                _
              // Predicated region
              $region97: #{mlp_forward.1} parent=59 // pred_check
                _
              $region98: #{mlp_forward.1} parent=59 // pred_check_branch
                %2269 = sbr.rel target = $region100
              $region99: #{mlp_forward.1} parent=59 // pred_region
                _
              $region100: #{mlp_forward.1} parent=59 // pred_fallthru
                _
            $region60: #{mlp_forward.1} parent=55 // pred_fallthru
              _
            // Predicated region
            $region61: #{mlp_forward.1} parent=55 // pred_check
              _
            $region62: #{mlp_forward.1} parent=55 // pred_check_branch
              %1923 = sbr.rel target = $region64
            $region63: #{mlp_forward.1} parent=55 // pred_region
              %s1925 = ssub.s32 256, 1
              %s1926 = sshrl.u32 %s1912, 6
              // While loop
              $region65: #{mlp_forward.1} parent=63 // loop_pre_header
                _
              $region66: #{mlp_forward.1} parent=63 // loop_header
                %s1928 = sphi 0, %s1930
                %p1929 = scmp.ge.s32.totalorder %s1928, %s1926
                %s1933 = sphi 0, %s2066
                %s1934 = sphi %s1905, %s2069
                %s1935 = sphi %s1916, %s2070
              $region67: #{mlp_forward.1} parent=63 // loop_header_branch
                %1932 = sbr.rel (%p1929) target = $region71
              $region68: #{mlp_forward.1} parent=63 // loop_body
                %v1936 = vld [vmem:[%s1934] sm:%s1925]
                %1937 = vst [vmem:[%s1935] sm:%s1925] %v1936
                %v1938 = vld [vmem:[%s1934 + $0x8] sm:%s1925]
                %1939 = vst [vmem:[%s1935 + $0x8] sm:%s1925] %v1938
                %v1940 = vld [vmem:[%s1934 + $0x10] sm:%s1925]
                %1941 = vst [vmem:[%s1935 + $0x10] sm:%s1925] %v1940
                %v1942 = vld [vmem:[%s1934 + $0x18] sm:%s1925]
                %1943 = vst [vmem:[%s1935 + $0x18] sm:%s1925] %v1942
                %v1944 = vld [vmem:[%s1934 + $0x20] sm:%s1925]
                %1945 = vst [vmem:[%s1935 + $0x20] sm:%s1925] %v1944
                %v1946 = vld [vmem:[%s1934 + $0x28] sm:%s1925]
                %1947 = vst [vmem:[%s1935 + $0x28] sm:%s1925] %v1946
                %v1948 = vld [vmem:[%s1934 + $0x30] sm:%s1925]
                %1949 = vst [vmem:[%s1935 + $0x30] sm:%s1925] %v1948
                %v1950 = vld [vmem:[%s1934 + $0x38] sm:%s1925]
                %1951 = vst [vmem:[%s1935 + $0x38] sm:%s1925] %v1950
                %v1952 = vld [vmem:[%s1934 + $0x40] sm:%s1925]
                %1953 = vst [vmem:[%s1935 + $0x40] sm:%s1925] %v1952
                %v1954 = vld [vmem:[%s1934 + $0x48] sm:%s1925]
                %1955 = vst [vmem:[%s1935 + $0x48] sm:%s1925] %v1954
                %v1956 = vld [vmem:[%s1934 + $0x50] sm:%s1925]
                %1957 = vst [vmem:[%s1935 + $0x50] sm:%s1925] %v1956
                %v1958 = vld [vmem:[%s1934 + $0x58] sm:%s1925]
                %1959 = vst [vmem:[%s1935 + $0x58] sm:%s1925] %v1958
                %v1960 = vld [vmem:[%s1934 + $0x60] sm:%s1925]
                %1961 = vst [vmem:[%s1935 + $0x60] sm:%s1925] %v1960
                %v1962 = vld [vmem:[%s1934 + $0x68] sm:%s1925]
                %1963 = vst [vmem:[%s1935 + $0x68] sm:%s1925] %v1962
                %v1964 = vld [vmem:[%s1934 + $0x70] sm:%s1925]
                %1965 = vst [vmem:[%s1935 + $0x70] sm:%s1925] %v1964
                %v1966 = vld [vmem:[%s1934 + $0x78] sm:%s1925]
                %1967 = vst [vmem:[%s1935 + $0x78] sm:%s1925] %v1966
                %v1968 = vld [vmem:[%s1934 + $0x80] sm:%s1925]
                %1969 = vst [vmem:[%s1935 + $0x80] sm:%s1925] %v1968
                %v1970 = vld [vmem:[%s1934 + $0x88] sm:%s1925]
                %1971 = vst [vmem:[%s1935 + $0x88] sm:%s1925] %v1970
                %v1972 = vld [vmem:[%s1934 + $0x90] sm:%s1925]
                %1973 = vst [vmem:[%s1935 + $0x90] sm:%s1925] %v1972
                %v1974 = vld [vmem:[%s1934 + $0x98] sm:%s1925]
                %1975 = vst [vmem:[%s1935 + $0x98] sm:%s1925] %v1974
                %v1976 = vld [vmem:[%s1934 + $0xa0] sm:%s1925]
                %1977 = vst [vmem:[%s1935 + $0xa0] sm:%s1925] %v1976
                %v1978 = vld [vmem:[%s1934 + $0xa8] sm:%s1925]
                %1979 = vst [vmem:[%s1935 + $0xa8] sm:%s1925] %v1978
                %v1980 = vld [vmem:[%s1934 + $0xb0] sm:%s1925]
                %1981 = vst [vmem:[%s1935 + $0xb0] sm:%s1925] %v1980
                %v1982 = vld [vmem:[%s1934 + $0xb8] sm:%s1925]
                %1983 = vst [vmem:[%s1935 + $0xb8] sm:%s1925] %v1982
                %v1984 = vld [vmem:[%s1934 + $0xc0] sm:%s1925]
                %1985 = vst [vmem:[%s1935 + $0xc0] sm:%s1925] %v1984
                %v1986 = vld [vmem:[%s1934 + $0xc8] sm:%s1925]
                %1987 = vst [vmem:[%s1935 + $0xc8] sm:%s1925] %v1986
                %v1988 = vld [vmem:[%s1934 + $0xd0] sm:%s1925]
                %1989 = vst [vmem:[%s1935 + $0xd0] sm:%s1925] %v1988
                %v1990 = vld [vmem:[%s1934 + $0xd8] sm:%s1925]
                %1991 = vst [vmem:[%s1935 + $0xd8] sm:%s1925] %v1990
                %v1992 = vld [vmem:[%s1934 + $0xe0] sm:%s1925]
                %1993 = vst [vmem:[%s1935 + $0xe0] sm:%s1925] %v1992
                %v1994 = vld [vmem:[%s1934 + $0xe8] sm:%s1925]
                %1995 = vst [vmem:[%s1935 + $0xe8] sm:%s1925] %v1994
                %v1996 = vld [vmem:[%s1934 + $0xf0] sm:%s1925]
                %1997 = vst [vmem:[%s1935 + $0xf0] sm:%s1925] %v1996
                %v1998 = vld [vmem:[%s1934 + $0xf8] sm:%s1925]
                %1999 = vst [vmem:[%s1935 + $0xf8] sm:%s1925] %v1998
                %v2000 = vld [vmem:[%s1934 + $0x100] sm:%s1925]
                %2001 = vst [vmem:[%s1935 + $0x100] sm:%s1925] %v2000
                %v2002 = vld [vmem:[%s1934 + $0x108] sm:%s1925]
                %2003 = vst [vmem:[%s1935 + $0x108] sm:%s1925] %v2002
                %v2004 = vld [vmem:[%s1934 + $0x110] sm:%s1925]
                %2005 = vst [vmem:[%s1935 + $0x110] sm:%s1925] %v2004
                %v2006 = vld [vmem:[%s1934 + $0x118] sm:%s1925]
                %2007 = vst [vmem:[%s1935 + $0x118] sm:%s1925] %v2006
                %v2008 = vld [vmem:[%s1934 + $0x120] sm:%s1925]
                %2009 = vst [vmem:[%s1935 + $0x120] sm:%s1925] %v2008
                %v2010 = vld [vmem:[%s1934 + $0x128] sm:%s1925]
                %2011 = vst [vmem:[%s1935 + $0x128] sm:%s1925] %v2010
                %v2012 = vld [vmem:[%s1934 + $0x130] sm:%s1925]
                %2013 = vst [vmem:[%s1935 + $0x130] sm:%s1925] %v2012
                %v2014 = vld [vmem:[%s1934 + $0x138] sm:%s1925]
                %2015 = vst [vmem:[%s1935 + $0x138] sm:%s1925] %v2014
                %v2016 = vld [vmem:[%s1934 + $0x140] sm:%s1925]
                %2017 = vst [vmem:[%s1935 + $0x140] sm:%s1925] %v2016
                %v2018 = vld [vmem:[%s1934 + $0x148] sm:%s1925]
                %2019 = vst [vmem:[%s1935 + $0x148] sm:%s1925] %v2018
                %v2020 = vld [vmem:[%s1934 + $0x150] sm:%s1925]
                %2021 = vst [vmem:[%s1935 + $0x150] sm:%s1925] %v2020
                %v2022 = vld [vmem:[%s1934 + $0x158] sm:%s1925]
                %2023 = vst [vmem:[%s1935 + $0x158] sm:%s1925] %v2022
                %v2024 = vld [vmem:[%s1934 + $0x160] sm:%s1925]
                %2025 = vst [vmem:[%s1935 + $0x160] sm:%s1925] %v2024
                %v2026 = vld [vmem:[%s1934 + $0x168] sm:%s1925]
                %2027 = vst [vmem:[%s1935 + $0x168] sm:%s1925] %v2026
                %v2028 = vld [vmem:[%s1934 + $0x170] sm:%s1925]
                %2029 = vst [vmem:[%s1935 + $0x170] sm:%s1925] %v2028
                %v2030 = vld [vmem:[%s1934 + $0x178] sm:%s1925]
                %2031 = vst [vmem:[%s1935 + $0x178] sm:%s1925] %v2030
                %v2032 = vld [vmem:[%s1934 + $0x180] sm:%s1925]
                %2033 = vst [vmem:[%s1935 + $0x180] sm:%s1925] %v2032
                %v2034 = vld [vmem:[%s1934 + $0x188] sm:%s1925]
                %2035 = vst [vmem:[%s1935 + $0x188] sm:%s1925] %v2034
                %v2036 = vld [vmem:[%s1934 + $0x190] sm:%s1925]
                %2037 = vst [vmem:[%s1935 + $0x190] sm:%s1925] %v2036
                %v2038 = vld [vmem:[%s1934 + $0x198] sm:%s1925]
                %2039 = vst [vmem:[%s1935 + $0x198] sm:%s1925] %v2038
                %v2040 = vld [vmem:[%s1934 + $0x1a0] sm:%s1925]
                %2041 = vst [vmem:[%s1935 + $0x1a0] sm:%s1925] %v2040
                %v2042 = vld [vmem:[%s1934 + $0x1a8] sm:%s1925]
                %2043 = vst [vmem:[%s1935 + $0x1a8] sm:%s1925] %v2042
                %v2044 = vld [vmem:[%s1934 + $0x1b0] sm:%s1925]
                %2045 = vst [vmem:[%s1935 + $0x1b0] sm:%s1925] %v2044
                %v2046 = vld [vmem:[%s1934 + $0x1b8] sm:%s1925]
                %2047 = vst [vmem:[%s1935 + $0x1b8] sm:%s1925] %v2046
                %v2048 = vld [vmem:[%s1934 + $0x1c0] sm:%s1925]
                %2049 = vst [vmem:[%s1935 + $0x1c0] sm:%s1925] %v2048
                %v2050 = vld [vmem:[%s1934 + $0x1c8] sm:%s1925]
                %2051 = vst [vmem:[%s1935 + $0x1c8] sm:%s1925] %v2050
                %v2052 = vld [vmem:[%s1934 + $0x1d0] sm:%s1925]
                %2053 = vst [vmem:[%s1935 + $0x1d0] sm:%s1925] %v2052
                %v2054 = vld [vmem:[%s1934 + $0x1d8] sm:%s1925]
                %2055 = vst [vmem:[%s1935 + $0x1d8] sm:%s1925] %v2054
                %v2056 = vld [vmem:[%s1934 + $0x1e0] sm:%s1925]
                %2057 = vst [vmem:[%s1935 + $0x1e0] sm:%s1925] %v2056
                %v2058 = vld [vmem:[%s1934 + $0x1e8] sm:%s1925]
                %2059 = vst [vmem:[%s1935 + $0x1e8] sm:%s1925] %v2058
                %v2060 = vld [vmem:[%s1934 + $0x1f0] sm:%s1925]
                %2061 = vst [vmem:[%s1935 + $0x1f0] sm:%s1925] %v2060
                %v2062 = vld [vmem:[%s1934 + $0x1f8] sm:%s1925]
                %2063 = vst [vmem:[%s1935 + $0x1f8] sm:%s1925] %v2062
                %s2064 = sadd.s32 1, %s1933
                %p2065 = scmp.ge.s32.totalorder %s2064, %s1926
                %s2066 = scalar_select %p2065, 0, %s2064
                %s2067 = smul.u32 %s2066, 512
                %s2068 = smul.u32 %s2066, 512
                %s2069 = scalar_lea.vmem %s1905, %s2067 [#allocation2]
                %s2070 = scalar_lea.vmem %s1916, %s2068
              $region69: #{mlp_forward.1} parent=63 // loop_footer
                %s1930 = sadd.s32 %s1928, 1
              $region70: #{mlp_forward.1} parent=63 // loop_footer_branch
                %1927 = sbr.rel target = $region66
              $region71: #{mlp_forward.1} parent=63 // loop_exit
                _
              %s2071 = sshrl.u32 %s1912, 6
              %s2072 = sand.u32 %s1912, 63
              %s2073 = smul.u32 %s2071, 64
              %s2074 = smul.u32 8, %s2073
              %s2075 = scalar_lea.vmem %s1905, %s2074 [#allocation2]
              %s2076 = smul.u32 8, %s2073
              %s2077 = scalar_lea.vmem %s1916, %s2076
              // While loop
              $region72: #{mlp_forward.1} parent=63 // loop_pre_header
                _
              $region73: #{mlp_forward.1} parent=63 // loop_header
                %s2079 = sphi 0, %s2081
                %p2080 = scmp.ge.s32.totalorder %s2079, %s2072
                %s2084 = sphi 0, %s2091
                %s2085 = sphi %s2075, %s2094
                %s2086 = sphi %s2077, %s2095
              $region74: #{mlp_forward.1} parent=63 // loop_header_branch
                %2083 = sbr.rel (%p2080) target = $region78
              $region75: #{mlp_forward.1} parent=63 // loop_body
                %v2087 = vld [vmem:[%s2085] sm:%s1925]
                %2088 = vst [vmem:[%s2086] sm:%s1925] %v2087
                %s2089 = sadd.s32 1, %s2084
                %p2090 = scmp.ge.s32.totalorder %s2089, %s2072
                %s2091 = scalar_select %p2090, 0, %s2089
                %s2092 = smul.u32 %s2091, 8
                %s2093 = smul.u32 %s2091, 8
                %s2094 = scalar_lea.vmem %s2075, %s2092 [#allocation2]
                %s2095 = scalar_lea.vmem %s2077, %s2093
              $region76: #{mlp_forward.1} parent=63 // loop_footer
                %s2081 = sadd.s32 %s2079, 1
              $region77: #{mlp_forward.1} parent=63 // loop_footer_branch
                %2078 = sbr.rel target = $region73
              $region78: #{mlp_forward.1} parent=63 // loop_exit
                _
            $region64: #{mlp_forward.1} parent=55 // pred_fallthru
              _
          $region56: #{mlp_forward.1} parent=51 // pred_fallthru
            _
          %2270 = vnop
        $region52: #{mlp_forward.1} parent=47 // pred_fallthru
          _
      $region48: #{mlp_forward.1} parent=5 // pred_fallthru
        _
      %p2271 = scmp.le.s32.totalorder 2, %s13
      // Predicated region
      $region101: #{mlp_forward.1} parent=5 // pred_check
        %p2272 = pneg %p2271
      $region102: #{mlp_forward.1} parent=5 // pred_check_branch
        %2274 = sbr.rel (%p2272) target = $region104
      $region103: #{mlp_forward.1} parent=5 // pred_region
        %s2275 = ssub.s32 %s13, 2
        // Predicated region
        $region105: #{mlp_forward.1} parent=103 // pred_check
          %p2276 = pneg %p194
        $region106: #{mlp_forward.1} parent=103 // pred_check_branch
          %2278 = sbr.rel (%p2276) target = $region108
        $region107: #{mlp_forward.1} parent=103 // pred_region
          %s2279 = sand.u32 %s179, 1
          %s2280 = sand.u32 %s179, 1
          %s2281 = smul.addr %s2280, 512
          %s2282 = scalar_lea.vmem [#allocation2], %s2281
        $region108: #{mlp_forward.1} parent=103 // pred_fallthru
          _
      $region104: #{mlp_forward.1} parent=5 // pred_fallthru
        _
    $region6: #{mlp_forward.1} parent=1 // loop_footer
      %s17 = sadd.s32 1, %s13
    $region7: #{mlp_forward.1} parent=1 // loop_footer_branch
      %12 = sbr.rel target = $region3
    $region8: #{mlp_forward.1} parent=1 // loop_exit
      _

// kernel: mlp_forward.1
$region0: #{mlp_forward.1}
  #allocation0 [shape = 'u32[]', space=smem, size = 0x4, offset = 0x4, fixed_abs, tag = 'smem constant byte address 0x4 - core index']
  #allocation1 [shape = 'u32[144,128]{1,0:T(1,128)}', space=vmem, size = 0x12000, scoped, tag = 'internal scratch']
  %s0 = inlined_call_operand.vmem [shape: f32[1200,16], index: 0, kind: input, shape index: {}]
  %s1 = inlined_call_operand.vmem [shape: bf16[16,128], index: 1, kind: input, shape index: {}]
  %s2 = inlined_call_operand.vmem [shape: f32[1,128], index: 2, kind: input, shape index: {}]
  %s3 = inlined_call_operand.vmem [shape: bf16[128,128], index: 3, kind: input, shape index: {}]
  %s4 = inlined_call_operand.vmem [shape: f32[1,128], index: 4, kind: input, shape index: {}]
  %s5 = inlined_call_operand.vmem [shape: bf16[128,128], index: 5, kind: input, shape index: {}]
  %s6 = inlined_call_operand.vmem [shape: f32[1,128], index: 6, kind: input, shape index: {}]
  %s7 = inlined_call_operand.vmem [shape: f32[1200,128], index: 7, kind: output, shape index: {}]
  %s8 = sld [smem:[#allocation0]]
  $region109: #{mlp_forward.1} parent=0
    _
  %s10 = ssub.s32 1, %s8
  %s11 = scalar_select 0, %s10, %s8
  $region1: #{mlp_forward.1} parent=0
    #allocation2 [shape = 'u8[524288]{0}', space=vmem, size = 0x80000, scoped, tag = 'output window, operand 0']
    loop: start=0, step=1, limit=5
    $region2: #{mlp_forward.1} parent=1 // loop_pre_header
      _
    $region3: #{mlp_forward.1} parent=1 // loop_header
      %s13 = sphi 0, %s17
      %p14 = scmp.ge.s32.totalorder %s13, 5
      %s23 = sphi 0, %s25
      %s26 = sphi 0, %s23
      %s27 = sphi 0, %s26
      %s43 = sphi 0, %s27
      %s47 = sphi 0, %s47
      %s49 = sphi 0, %s47
      %s50 = sphi 0, %s49
      %s64 = sphi 0, %s50
      %s68 = sphi 0, %s68
      %s70 = sphi 0, %s68
      %s71 = sphi 0, %s70
      %s85 = sphi 0, %s71
      %s89 = sphi 0, %s89
      %s91 = sphi 0, %s89
      %s92 = sphi 0, %s91
      %s106 = sphi 0, %s92
      %s110 = sphi 0, %s110
      %s112 = sphi 0, %s110
      %s113 = sphi 0, %s112
      %s127 = sphi 0, %s113
      %s131 = sphi 0, %s131
      %s133 = sphi 0, %s131
      %s134 = sphi 0, %s133
      %s148 = sphi 0, %s134
      %s152 = sphi 0, %s152
      %s154 = sphi 0, %s152
      %s155 = sphi 0, %s154
      %s169 = sphi 0, %s155
      %s175 = sphi 0, %s177
      %s178 = sphi 0, %s175
      %s179 = sphi 0, %s178
      %s195 = sphi 0, %s179
    $region4: #{mlp_forward.1} parent=1 // loop_header_branch
      %16 = sbr.rel (%p14) target = $region8
    $region5: #{mlp_forward.1} parent=1 // loop_body
      %s18 = ssub.s32 %s13, 1
      %s19 = ssub.s32 %s13, 2
      %s20 = sadd.s32 %s13, 1
      %s21 = ssub.s32 %s13, %s20
      %p22 = scmp.eq.s32.totalorder %s21, 0
      %s24 = sadd.s32 %s23, 1
      %s25 = scalar_select %p22, %s23, %s24
      %p28 = pneg %p22
      %p29 = scmp.eq.s32.totalorder %s13, 2
      %p30 = por %p28, %p29
      %p31 = scmp.ne.s32.totalorder %s23, %s26
      %p32 = scmp.eq.s32.totalorder %s13, 0
      %p33 = por %p31, %p32
      %p34 = scmp.ne.s32.totalorder %s23, %s26
      %p35 = scmp.eq.s32.totalorder %s18, 2
      %p36 = por %p34, %p35
      %p37 = scmp.ne.s32.totalorder %s26, %s27
      %p38 = scmp.eq.s32.totalorder %s18, 0
      %p39 = por %p37, %p38
      %p40 = scmp.ne.s32.totalorder %s26, %s27
      %p41 = scmp.eq.s32.totalorder %s19, 2
      %p42 = por %p40, %p41
      %p44 = scmp.ne.s32.totalorder %s27, %s43
      %p45 = scmp.eq.s32.totalorder %s19, 0
      %p46 = por %p44, %p45
      %s48 = sadd.s32 %s47, 1
      %p51 = scmp.eq.s32.totalorder %s13, 2
      %p52 = scmp.ne.s32.totalorder %s47, %s49
      %p53 = scmp.eq.s32.totalorder %s13, 0
      %p54 = por %p52, %p53
      %p55 = scmp.ne.s32.totalorder %s47, %s49
      %p56 = scmp.eq.s32.totalorder %s18, 2
      %p57 = por %p55, %p56
      %p58 = scmp.ne.s32.totalorder %s49, %s50
      %p59 = scmp.eq.s32.totalorder %s18, 0
      %p60 = por %p58, %p59
      %p61 = scmp.ne.s32.totalorder %s49, %s50
      %p62 = scmp.eq.s32.totalorder %s19, 2
      %p63 = por %p61, %p62
      %p65 = scmp.ne.s32.totalorder %s50, %s64
      %p66 = scmp.eq.s32.totalorder %s19, 0
      %p67 = por %p65, %p66
      %s69 = sadd.s32 %s68, 1
      %p72 = scmp.eq.s32.totalorder %s13, 2
      %p73 = scmp.ne.s32.totalorder %s68, %s70
      %p74 = scmp.eq.s32.totalorder %s13, 0
      %p75 = por %p73, %p74
      %p76 = scmp.ne.s32.totalorder %s68, %s70
      %p77 = scmp.eq.s32.totalorder %s18, 2
      %p78 = por %p76, %p77
      %p79 = scmp.ne.s32.totalorder %s70, %s71
      %p80 = scmp.eq.s32.totalorder %s18, 0
      %p81 = por %p79, %p80
      %p82 = scmp.ne.s32.totalorder %s70, %s71
      %p83 = scmp.eq.s32.totalorder %s19, 2
      %p84 = por %p82, %p83
      %p86 = scmp.ne.s32.totalorder %s71, %s85
      %p87 = scmp.eq.s32.totalorder %s19, 0
      %p88 = por %p86, %p87
      %s90 = sadd.s32 %s89, 1
      %p93 = scmp.eq.s32.totalorder %s13, 2
      %p94 = scmp.ne.s32.totalorder %s89, %s91
      %p95 = scmp.eq.s32.totalorder %s13, 0
      %p96 = por %p94, %p95
      %p97 = scmp.ne.s32.totalorder %s89, %s91
      %p98 = scmp.eq.s32.totalorder %s18, 2
      %p99 = por %p97, %p98
      %p100 = scmp.ne.s32.totalorder %s91, %s92
      %p101 = scmp.eq.s32.totalorder %s18, 0
      %p102 = por %p100, %p101
      %p103 = scmp.ne.s32.totalorder %s91, %s92
      %p104 = scmp.eq.s32.totalorder %s19, 2
      %p105 = por %p103, %p104
      %p107 = scmp.ne.s32.totalorder %s92, %s106
      %p108 = scmp.eq.s32.totalorder %s19, 0
      %p109 = por %p107, %p108
      %s111 = sadd.s32 %s110, 1
      %p114 = scmp.eq.s32.totalorder %s13, 2
      %p115 = scmp.ne.s32.totalorder %s110, %s112
      %p116 = scmp.eq.s32.totalorder %s13, 0
      %p117 = por %p115, %p116
      %p118 = scmp.ne.s32.totalorder %s110, %s112
      %p119 = scmp.eq.s32.totalorder %s18, 2
      %p120 = por %p118, %p119
      %p121 = scmp.ne.s32.totalorder %s112, %s113
      %p122 = scmp.eq.s32.totalorder %s18, 0
      %p123 = por %p121, %p122
      %p124 = scmp.ne.s32.totalorder %s112, %s113
      %p125 = scmp.eq.s32.totalorder %s19, 2
      %p126 = por %p124, %p125
      %p128 = scmp.ne.s32.totalorder %s113, %s127
      %p129 = scmp.eq.s32.totalorder %s19, 0
      %p130 = por %p128, %p129
      %s132 = sadd.s32 %s131, 1
      %p135 = scmp.eq.s32.totalorder %s13, 2
      %p136 = scmp.ne.s32.totalorder %s131, %s133
      %p137 = scmp.eq.s32.totalorder %s13, 0
      %p138 = por %p136, %p137
      %p139 = scmp.ne.s32.totalorder %s131, %s133
      %p140 = scmp.eq.s32.totalorder %s18, 2
      %p141 = por %p139, %p140
      %p142 = scmp.ne.s32.totalorder %s133, %s134
      %p143 = scmp.eq.s32.totalorder %s18, 0
      %p144 = por %p142, %p143
      %p145 = scmp.ne.s32.totalorder %s133, %s134
      %p146 = scmp.eq.s32.totalorder %s19, 2
      %p147 = por %p145, %p146
      %p149 = scmp.ne.s32.totalorder %s134, %s148
      %p150 = scmp.eq.s32.totalorder %s19, 0
      %p151 = por %p149, %p150
      %s153 = sadd.s32 %s152, 1
      %p156 = scmp.eq.s32.totalorder %s13, 2
      %p157 = scmp.ne.s32.totalorder %s152, %s154
      %p158 = scmp.eq.s32.totalorder %s13, 0
      %p159 = por %p157, %p158
      %p160 = scmp.ne.s32.totalorder %s152, %s154
      %p161 = scmp.eq.s32.totalorder %s18, 2
      %p162 = por %p160, %p161
      %p163 = scmp.ne.s32.totalorder %s154, %s155
      %p164 = scmp.eq.s32.totalorder %s18, 0
      %p165 = por %p163, %p164
      %p166 = scmp.ne.s32.totalorder %s154, %s155
      %p167 = scmp.eq.s32.totalorder %s19, 2
      %p168 = por %p166, %p167
      %p170 = scmp.ne.s32.totalorder %s155, %s169
      %p171 = scmp.eq.s32.totalorder %s19, 0
      %p172 = por %p170, %p171
      %s173 = ssub.s32 %s13, %s20
      %p174 = scmp.eq.s32.totalorder %s173, 0
      %s176 = sadd.s32 %s175, 1
      %s177 = scalar_select %p174, %s175, %s176
      %p180 = pneg %p174
      %p181 = scmp.eq.s32.totalorder %s13, 2
      %p182 = por %p180, %p181
      %p183 = scmp.ne.s32.totalorder %s175, %s178
      %p184 = scmp.eq.s32.totalorder %s13, 0
      %p185 = por %p183, %p184
      %p186 = scmp.ne.s32.totalorder %s175, %s178
      %p187 = scmp.eq.s32.totalorder %s18, 2
      %p188 = por %p186, %p187
      %p189 = scmp.ne.s32.totalorder %s178, %s179
      %p190 = scmp.eq.s32.totalorder %s18, 0
      %p191 = por %p189, %p190
      %p192 = scmp.ne.s32.totalorder %s178, %s179
      %p193 = scmp.eq.s32.totalorder %s19, 2
      %p194 = por %p192, %p193
      %p196 = scmp.ne.s32.totalorder %s179, %s195
      %p197 = scmp.eq.s32.totalorder %s19, 0
      %p198 = por %p196, %p197
      %p199 = scmp.le.s32.totalorder 1, %s13
      %p200 = scmp.lt.s32.totalorder %s13, 4
      %p201 = pnand %p199, %p200
      %p202 = pneg %p201
      // Predicated region
      $region9: #{mlp_forward.1} parent=5 // pred_check
        _
      $region10: #{mlp_forward.1} parent=5 // pred_check_branch
        %204 = sbr.rel (%p201) target = $region12
      $region11: #{mlp_forward.1} parent=5 // pred_region
        %s205 = ssub.s32 %s13, 1
        // Predicated region
        $region13: #{mlp_forward.1} parent=11 // pred_check
          %p206 = pneg %p60
        $region14: #{mlp_forward.1} parent=11 // pred_check_branch
          %208 = sbr.rel (%p206) target = $region16
        $region15: #{mlp_forward.1} parent=11 // pred_region
          _
        $region16: #{mlp_forward.1} parent=11 // pred_fallthru
          _
        // Predicated region
        $region17: #{mlp_forward.1} parent=11 // pred_check
          %p209 = pneg %p81
        $region18: #{mlp_forward.1} parent=11 // pred_check_branch
          %211 = sbr.rel (%p209) target = $region20
        $region19: #{mlp_forward.1} parent=11 // pred_region
          _
        $region20: #{mlp_forward.1} parent=11 // pred_fallthru
          _
        // Predicated region
        $region21: #{mlp_forward.1} parent=11 // pred_check
          %p212 = pneg %p102
        $region22: #{mlp_forward.1} parent=11 // pred_check_branch
          %214 = sbr.rel (%p212) target = $region24
        $region23: #{mlp_forward.1} parent=11 // pred_region
          _
        $region24: #{mlp_forward.1} parent=11 // pred_fallthru
          _
        // Predicated region
        $region25: #{mlp_forward.1} parent=11 // pred_check
          %p215 = pneg %p123
        $region26: #{mlp_forward.1} parent=11 // pred_check_branch
          %217 = sbr.rel (%p215) target = $region28
        $region27: #{mlp_forward.1} parent=11 // pred_region
          _
        $region28: #{mlp_forward.1} parent=11 // pred_fallthru
          _
        // Predicated region
        $region29: #{mlp_forward.1} parent=11 // pred_check
          %p218 = pneg %p144
        $region30: #{mlp_forward.1} parent=11 // pred_check_branch
          %220 = sbr.rel (%p218) target = $region32
        $region31: #{mlp_forward.1} parent=11 // pred_region
          _
        $region32: #{mlp_forward.1} parent=11 // pred_fallthru
          _
        // Predicated region
        $region33: #{mlp_forward.1} parent=11 // pred_check
          %p221 = pneg %p165
        $region34: #{mlp_forward.1} parent=11 // pred_check_branch
          %223 = sbr.rel (%p221) target = $region36
        $region35: #{mlp_forward.1} parent=11 // pred_region
          _
        $region36: #{mlp_forward.1} parent=11 // pred_fallthru
          _
      $region12: #{mlp_forward.1} parent=5 // pred_fallthru
        _
      %p224 = scmp.lt.s32.totalorder %s13, 3
      // Predicated region
      $region37: #{mlp_forward.1} parent=5 // pred_check
        %p225 = pneg %p224
      $region38: #{mlp_forward.1} parent=5 // pred_check_branch
        %227 = sbr.rel (%p225) target = $region40
      $region39: #{mlp_forward.1} parent=5 // pred_region
        // Predicated region
        $region41: #{mlp_forward.1} parent=39 // pred_check
          %p228 = pneg %p33
        $region42: #{mlp_forward.1} parent=39 // pred_check_branch
          %230 = sbr.rel (%p228) target = $region44
        $region43: #{mlp_forward.1} parent=39 // pred_region
          %s231 = smul.u32 64, %s13
          %s232 = ssub.s32 150, %s231
          %p233 = scmp.lt.s32.totalorder %s232, 64
          %s234 = scalar_select %p233, %s232, 64
          %s235 = smul.u32 128, %s234
          %p236 = scmp.lt.s32.totalorder %s231, 149
          %s237 = scalar_select %p236, %s231, 149
          %s238 = smul.addr %s237, 8
          %s239 = scalar_lea.vmem %s0, %s238
          %s240 = smul.u32 64, %s13
          %s241 = ssub.s32 150, %s240
          %p242 = scmp.lt.s32.totalorder %s241, 64
          %s243 = scalar_select %p242, %s241, 64
          %s244 = smul.u32 128, %s243
        $region44: #{mlp_forward.1} parent=39 // pred_fallthru
          _
      $region40: #{mlp_forward.1} parent=5 // pred_fallthru
        _
      %p245 = scmp.le.s32.totalorder 1, %s13
      %p246 = scmp.lt.s32.totalorder %s13, 4
      %p247 = pnand %p245, %p246
      %p248 = pneg %p247
      // Predicated region
      $region45: #{mlp_forward.1} parent=5 // pred_check
        _
      $region46: #{mlp_forward.1} parent=5 // pred_check_branch
        %250 = sbr.rel (%p247) target = $region48
      $region47: #{mlp_forward.1} parent=5 // pred_region
        %s251 = ssub.s32 %s13, 1
        %s252 = smul.u32 64, %s18
        %s253 = ssub.s32 150, %s252
        %p254 = scmp.lt.s32.totalorder %s253, 64
        %s255 = scalar_select %p254, %s253, 64
        %s256 = smul.u32 128, %s255
        %p257 = scmp.lt.s32.totalorder %s252, 149
        %s258 = scalar_select %p257, %s252, 149
        %s259 = smul.addr %s258, 8
        %s260 = scalar_lea.vmem %s0, %s259
        %p261 = pneg %p39
        %p262 = pneg %p36
        %p263 = pneg %p60
        %p264 = pneg %p57
        %p265 = pneg %p81
        %p266 = pneg %p78
        %p267 = pneg %p102
        %p268 = pneg %p99
        %p269 = pneg %p123
        %p270 = pneg %p120
        %p271 = pneg %p144
        %p272 = pneg %p141
        %p273 = pneg %p165
        %p274 = pneg %p162
        %p275 = pneg %p191
        %p276 = pneg %p188
        %s277 = sand.u32 %s178, 1
        %s278 = sand.u32 %s178, 1
        %s279 = smul.addr %s278, 512
        %s280 = scalar_lea.vmem [#allocation2], %s279
        %s281 = smul.u32 64, %s18
        %s282 = ssub.s32 150, %s281
        %p283 = scmp.lt.s32.totalorder %s282, 64
        %s284 = scalar_select %p283, %s282, 64
        %s285 = smul.u32 128, %s284
        %p286 = scmp.lt.s32.totalorder %s281, 149
        %s287 = scalar_select %p286, %s281, 149
        %s288 = smul.addr %s287, 8
        %s289 = scalar_lea.vmem %s0, %s288
        %s290 = smul.u32 64, %s18
        %s291 = ssub.s32 150, %s290
        %p292 = scmp.lt.s32.totalorder %s291, 64
        %s293 = scalar_select %p292, %s291, 64
        %s294 = smul.u32 128, %s293
        %s295 = smul.u32 64, %s18
        %s296 = ssub.s32 150, %s295
        %p297 = scmp.lt.s32.totalorder %s296, 64
        %s298 = scalar_select %p297, %s296, 64
        %s299 = smul.u32 128, %s298
        %v301 = vld [vmem:[%s289] sm:$0xff]
        %v302 = vld [vmem:[%s289 + $0x8] sm:$0xff]
        %v303 = vld [vmem:[%s289 + $0x10] sm:$0xff]
        %v304 = vld [vmem:[%s289 + $0x18] sm:$0xff]
        %v305 = vld [vmem:[%s289 + $0x20] sm:$0xff]
        %v306 = vld [vmem:[%s289 + $0x28] sm:$0xff]
        %v307 = vld [vmem:[%s289 + $0x30] sm:$0xff]
        %v308 = vld [vmem:[%s289 + $0x38] sm:$0xff]
        %v309 = vld [vmem:[%s289 + $0x40] sm:$0xff]
        %v310 = vld [vmem:[%s289 + $0x48] sm:$0xff]
        %v311 = vld [vmem:[%s289 + $0x50] sm:$0xff]
        %v312 = vld [vmem:[%s289 + $0x58] sm:$0xff]
        %v313 = vld [vmem:[%s289 + $0x60] sm:$0xff]
        %v314 = vld [vmem:[%s289 + $0x68] sm:$0xff]
        %v315 = vld [vmem:[%s289 + $0x70] sm:$0xff]
        %v316 = vld [vmem:[%s289 + $0x78] sm:$0xff]
        %v317 = vld [vmem:[%s289 + $0x80] sm:$0xff]
        %v318 = vld [vmem:[%s289 + $0x88] sm:$0xff]
        %v319 = vld [vmem:[%s289 + $0x90] sm:$0xff]
        %v320 = vld [vmem:[%s289 + $0x98] sm:$0xff]
        %v321 = vld [vmem:[%s289 + $0xa0] sm:$0xff]
        %v322 = vld [vmem:[%s289 + $0xa8] sm:$0xff]
        %v323 = vld [vmem:[%s289 + $0xb0] sm:$0xff]
        %v324 = vld [vmem:[%s289 + $0xb8] sm:$0xff]
        %v325 = vld [vmem:[%s289 + $0xc0] sm:$0xff]
        %v326 = vld [vmem:[%s289 + $0xc8] sm:$0xff]
        %v327 = vld [vmem:[%s289 + $0xd0] sm:$0xff]
        %v328 = vld [vmem:[%s289 + $0xd8] sm:$0xff]
        %v329 = vld [vmem:[%s289 + $0xe0] sm:$0xff]
        %v330 = vld [vmem:[%s289 + $0xe8] sm:$0xff]
        %v331 = vld [vmem:[%s289 + $0xf0] sm:$0xff]
        %v332 = vld [vmem:[%s289 + $0xf8] sm:$0xff]
        %v333 = vld [vmem:[%s289 + $0x100] sm:$0xff]
        %v334 = vld [vmem:[%s289 + $0x108] sm:$0xff]
        %v335 = vld [vmem:[%s289 + $0x110] sm:$0xff]
        %v336 = vld [vmem:[%s289 + $0x118] sm:$0xff]
        %v337 = vld [vmem:[%s289 + $0x120] sm:$0xff]
        %v338 = vld [vmem:[%s289 + $0x128] sm:$0xff]
        %v339 = vld [vmem:[%s289 + $0x130] sm:$0xff]
        %v340 = vld [vmem:[%s289 + $0x138] sm:$0xff]
        %v341 = vld [vmem:[%s289 + $0x140] sm:$0xff]
        %v342 = vld [vmem:[%s289 + $0x148] sm:$0xff]
        %v343 = vld [vmem:[%s289 + $0x150] sm:$0xff]
        %v344 = vld [vmem:[%s289 + $0x158] sm:$0xff]
        %v345 = vld [vmem:[%s289 + $0x160] sm:$0xff]
        %v346 = vld [vmem:[%s289 + $0x168] sm:$0xff]
        %v347 = vld [vmem:[%s289 + $0x170] sm:$0xff]
        %v348 = vld [vmem:[%s289 + $0x178] sm:$0xff]
        %v349 = vld [vmem:[%s289 + $0x180] sm:$0xff]
        %v350 = vld [vmem:[%s289 + $0x188] sm:$0xff]
        %v351 = vld [vmem:[%s289 + $0x190] sm:$0xff]
        %v352 = vld [vmem:[%s289 + $0x198] sm:$0xff]
        %v353 = vld [vmem:[%s289 + $0x1a0] sm:$0xff]
        %v354 = vld [vmem:[%s289 + $0x1a8] sm:$0xff]
        %v355 = vld [vmem:[%s289 + $0x1b0] sm:$0xff]
        %v356 = vld [vmem:[%s289 + $0x1b8] sm:$0xff]
        %v357 = vld [vmem:[%s289 + $0x1c0] sm:$0xff]
        %v358 = vld [vmem:[%s289 + $0x1c8] sm:$0xff]
        %v359 = vld [vmem:[%s289 + $0x1d0] sm:$0xff]
        %v360 = vld [vmem:[%s289 + $0x1d8] sm:$0xff]
        %v361 = vld [vmem:[%s289 + $0x1e0] sm:$0xff]
        %v362 = vld [vmem:[%s289 + $0x1e8] sm:$0xff]
        %v363 = vld [vmem:[%s289 + $0x1f0] sm:$0xff]
        %v364 = vld [vmem:[%s289 + $0x1f8] sm:$0xff]
        %v365 = vpack.c.bf16 %v302, %v301
        %v366 = vpack.c.bf16 %v304, %v303
        %v367 = vpack.c.bf16 %v306, %v305
        %v368 = vpack.c.bf16 %v308, %v307
        %v369 = vpack.c.bf16 %v310, %v309
        %v370 = vpack.c.bf16 %v312, %v311
        %v371 = vpack.c.bf16 %v314, %v313
        %v372 = vpack.c.bf16 %v316, %v315
        %v373 = vpack.c.bf16 %v318, %v317
        %v374 = vpack.c.bf16 %v320, %v319
        %v375 = vpack.c.bf16 %v322, %v321
        %v376 = vpack.c.bf16 %v324, %v323
        %v377 = vpack.c.bf16 %v326, %v325
        %v378 = vpack.c.bf16 %v328, %v327
        %v379 = vpack.c.bf16 %v330, %v329
        %v380 = vpack.c.bf16 %v332, %v331
        %v381 = vpack.c.bf16 %v334, %v333
        %v382 = vpack.c.bf16 %v336, %v335
        %v383 = vpack.c.bf16 %v338, %v337
        %v384 = vpack.c.bf16 %v340, %v339
        %v385 = vpack.c.bf16 %v342, %v341
        %v386 = vpack.c.bf16 %v344, %v343
        %v387 = vpack.c.bf16 %v346, %v345
        %v388 = vpack.c.bf16 %v348, %v347
        %v389 = vpack.c.bf16 %v350, %v349
        %v390 = vpack.c.bf16 %v352, %v351
        %v391 = vpack.c.bf16 %v354, %v353
        %v392 = vpack.c.bf16 %v356, %v355
        %v393 = vpack.c.bf16 %v358, %v357
        %v394 = vpack.c.bf16 %v360, %v359
        %v395 = vpack.c.bf16 %v362, %v361
        %v396 = vpack.c.bf16 %v364, %v363
        %v397 = vld [vmem:[%s1] sm:$0xf]
        %v398 = vld [vmem:[%s1 + $0x4] sm:$0xf]
        %v399 = vld [vmem:[%s2] sm:$0x1]
        %v401 = vlaneseq
        %v402 = vshrl.u32 %v401, 7
        %v403 = vsub.s32 0, %v402
        %v404 = vrot.slane %v399, %v403
        %v408 = vunpack.c.l.b16 %v397
        %v409 = vunpack.c.l.b16 %v398
        %v410 = vpack.c.b16 %v409, %v408
        %vm412 = vcmask 130048
        %v414 = vsel %vm412, %v365, 0
        %v417 = vsel %vm412, %v366, 0
        %v420 = vsel %vm412, %v367, 0
        %v423 = vsel %vm412, %v368, 0
        %v426 = vsel %vm412, %v369, 0
        %v429 = vsel %vm412, %v370, 0
        %v432 = vsel %vm412, %v371, 0
        %v435 = vsel %vm412, %v372, 0
        %v438 = vsel %vm412, %v373, 0
        %v441 = vsel %vm412, %v374, 0
        %v444 = vsel %vm412, %v375, 0
        %v447 = vsel %vm412, %v376, 0
        %v450 = vsel %vm412, %v377, 0
        %v453 = vsel %vm412, %v378, 0
        %v456 = vsel %vm412, %v379, 0
        %v459 = vsel %vm412, %v380, 0
        %v462 = vsel %vm412, %v381, 0
        %v465 = vsel %vm412, %v382, 0
        %v468 = vsel %vm412, %v383, 0
        %v471 = vsel %vm412, %v384, 0
        %v474 = vsel %vm412, %v385, 0
        %v477 = vsel %vm412, %v386, 0
        %v480 = vsel %vm412, %v387, 0
        %v483 = vsel %vm412, %v388, 0
        %v486 = vsel %vm412, %v389, 0
        %v489 = vsel %vm412, %v390, 0
        %v492 = vsel %vm412, %v391, 0
        %v495 = vsel %vm412, %v392, 0
        %v498 = vsel %vm412, %v393, 0
        %v501 = vsel %vm412, %v394, 0
        %v504 = vsel %vm412, %v395, 0
        %v507 = vsel %vm412, %v396, 0
        %509 = vmatprep.subr.bf16.mxu0 0
        %510 = vmatpush1.bf16.msra.mxu0 0
        %511 = vmatprep.subr.bf16.mxu0 0
        %512 = vmatpush1.bf16.msra.mxu0 0
        %513 = vmatprep.subr.bf16.mxu0 0
        %514 = vmatpush1.bf16.msra.mxu0 0
        %515 = vmatprep.subr.bf16.mxu0 0
        %516 = vmatpush1.bf16.msra.mxu0 0
        %517 = vmatprep.subr.bf16.mxu0 0
        %518 = vmatpush1.bf16.msra.mxu0 0
        %519 = vmatprep.subr.bf16.mxu0 0
        %520 = vmatpush1.bf16.msra.mxu0 0
        %521 = vmatprep.subr.bf16.mxu0 0
        %522 = vmatpush1.bf16.msra.mxu0 0
        %523 = vmatprep.subr.bf16.mxu0 0
        %524 = vmatpush1.bf16.msra.mxu0 %v410
        %525 = vmatprep.subr.bf16.mxu0 0
        %526 = vmatpush2.bf16.msra.mxu0 0
        %527 = vmatprep.subr.bf16.mxu0 0
        %528 = vmatpush2.bf16.msra.mxu0 0
        %529 = vmatprep.subr.bf16.mxu0 0
        %530 = vmatpush2.bf16.msra.mxu0 0
        %531 = vmatprep.subr.bf16.mxu0 0
        %532 = vmatpush2.bf16.msra.mxu0 0
        %533 = vmatprep.subr.bf16.mxu0 0
        %534 = vmatpush2.bf16.msra.mxu0 0
        %535 = vmatprep.subr.bf16.mxu0 0
        %536 = vmatpush2.bf16.msra.mxu0 0
        %537 = vmatprep.subr.bf16.mxu0 0
        %538 = vmatpush2.bf16.msra.mxu0 0
        %539 = vmatprep.subr.bf16.mxu0 0
        %540 = vmatpush2.bf16.msra.mxu0 0
        %541 = vmatprep.mubr.bf16.mxu0 0
        %542 = vmatmul.mubr.bf16.gmra.mxu0 %v414
        %v543 = vpop.f32.mrf.mxu0
        %v544 = vadd.f32 %v404, %v543
        %v545 = vpop.f32.mrf.mxu0
        %v546 = vpop.f32.mrf.mxu0
        %v547 = vadd.f32 %v404, %v546
        %v548 = vpop.f32.mrf.mxu0
        %549 = vmatprep.mubr.bf16.mxu0 0
        %550 = vmatmul.mubr.bf16.gmra.mxu0 %v417
        %v551 = vpop.f32.mrf.mxu0
        %v552 = vadd.f32 %v404, %v551
        %v553 = vpop.f32.mrf.mxu0
        %v554 = vpop.f32.mrf.mxu0
        %v555 = vadd.f32 %v404, %v554
        %v556 = vpop.f32.mrf.mxu0
        %557 = vmatprep.mubr.bf16.mxu0 0
        %558 = vmatmul.mubr.bf16.gmra.mxu0 %v420
        %v559 = vpop.f32.mrf.mxu0
        %v560 = vadd.f32 %v404, %v559
        %v561 = vpop.f32.mrf.mxu0
        %v562 = vpop.f32.mrf.mxu0
        %v563 = vadd.f32 %v404, %v562
        %v564 = vpop.f32.mrf.mxu0
        %565 = vmatprep.mubr.bf16.mxu0 0
        %566 = vmatmul.mubr.bf16.gmra.mxu0 %v423
        %v567 = vpop.f32.mrf.mxu0
        %v568 = vadd.f32 %v404, %v567
        %v569 = vpop.f32.mrf.mxu0
        %v570 = vpop.f32.mrf.mxu0
        %v571 = vadd.f32 %v404, %v570
        %v572 = vpop.f32.mrf.mxu0
        %573 = vmatprep.mubr.bf16.mxu0 0
        %574 = vmatmul.mubr.bf16.gmra.mxu0 %v426
        %v575 = vpop.f32.mrf.mxu0
        %v576 = vadd.f32 %v404, %v575
        %v577 = vpop.f32.mrf.mxu0
        %v578 = vpop.f32.mrf.mxu0
        %v579 = vadd.f32 %v404, %v578
        %v580 = vpop.f32.mrf.mxu0
        %581 = vmatprep.mubr.bf16.mxu0 0
        %582 = vmatmul.mubr.bf16.gmra.mxu0 %v429
        %v583 = vpop.f32.mrf.mxu0
        %v584 = vadd.f32 %v404, %v583
        %v585 = vpop.f32.mrf.mxu0
        %v586 = vpop.f32.mrf.mxu0
        %v587 = vadd.f32 %v404, %v586
        %v588 = vpop.f32.mrf.mxu0
        %589 = vmatprep.mubr.bf16.mxu0 0
        %590 = vmatmul.mubr.bf16.gmra.mxu0 %v432
        %v591 = vpop.f32.mrf.mxu0
        %v592 = vadd.f32 %v404, %v591
        %v593 = vpop.f32.mrf.mxu0
        %v594 = vpop.f32.mrf.mxu0
        %v595 = vadd.f32 %v404, %v594
        %v596 = vpop.f32.mrf.mxu0
        %597 = vmatprep.mubr.bf16.mxu0 0
        %598 = vmatmul.mubr.bf16.gmra.mxu0 %v435
        %v599 = vpop.f32.mrf.mxu0
        %v600 = vadd.f32 %v404, %v599
        %v601 = vpop.f32.mrf.mxu0
        %v602 = vpop.f32.mrf.mxu0
        %v603 = vadd.f32 %v404, %v602
        %v604 = vpop.f32.mrf.mxu0
        %605 = vmatprep.mubr.bf16.mxu0 0
        %606 = vmatmul.mubr.bf16.gmra.mxu0 %v438
        %v607 = vpop.f32.mrf.mxu0
        %v608 = vadd.f32 %v404, %v607
        %v609 = vpop.f32.mrf.mxu0
        %v610 = vpop.f32.mrf.mxu0
        %v611 = vadd.f32 %v404, %v610
        %v612 = vpop.f32.mrf.mxu0
        %613 = vmatprep.mubr.bf16.mxu0 0
        %614 = vmatmul.mubr.bf16.gmra.mxu0 %v441
        %v615 = vpop.f32.mrf.mxu0
        %v616 = vadd.f32 %v404, %v615
        %v617 = vpop.f32.mrf.mxu0
        %v618 = vpop.f32.mrf.mxu0
        %v619 = vadd.f32 %v404, %v618
        %v620 = vpop.f32.mrf.mxu0
        %621 = vmatprep.mubr.bf16.mxu0 0
        %622 = vmatmul.mubr.bf16.gmra.mxu0 %v444
        %v623 = vpop.f32.mrf.mxu0
        %v624 = vadd.f32 %v404, %v623
        %v625 = vpop.f32.mrf.mxu0
        %v626 = vpop.f32.mrf.mxu0
        %v627 = vadd.f32 %v404, %v626
        %v628 = vpop.f32.mrf.mxu0
        %629 = vmatprep.mubr.bf16.mxu0 0
        %630 = vmatmul.mubr.bf16.gmra.mxu0 %v447
        %v631 = vpop.f32.mrf.mxu0
        %v632 = vadd.f32 %v404, %v631
        %v633 = vpop.f32.mrf.mxu0
        %v634 = vpop.f32.mrf.mxu0
        %v635 = vadd.f32 %v404, %v634
        %v636 = vpop.f32.mrf.mxu0
        %637 = vmatprep.mubr.bf16.mxu0 0
        %638 = vmatmul.mubr.bf16.gmra.mxu0 %v450
        %v639 = vpop.f32.mrf.mxu0
        %v640 = vadd.f32 %v404, %v639
        %v641 = vpop.f32.mrf.mxu0
        %v642 = vpop.f32.mrf.mxu0
        %v643 = vadd.f32 %v404, %v642
        %v644 = vpop.f32.mrf.mxu0
        %645 = vmatprep.mubr.bf16.mxu0 0
        %646 = vmatmul.mubr.bf16.gmra.mxu0 %v453
        %v647 = vpop.f32.mrf.mxu0
        %v648 = vadd.f32 %v404, %v647
        %v649 = vpop.f32.mrf.mxu0
        %v650 = vpop.f32.mrf.mxu0
        %v651 = vadd.f32 %v404, %v650
        %v652 = vpop.f32.mrf.mxu0
        %653 = vmatprep.mubr.bf16.mxu0 0
        %654 = vmatmul.mubr.bf16.gmra.mxu0 %v456
        %v655 = vpop.f32.mrf.mxu0
        %v656 = vadd.f32 %v404, %v655
        %v657 = vpop.f32.mrf.mxu0
        %v658 = vpop.f32.mrf.mxu0
        %v659 = vadd.f32 %v404, %v658
        %v660 = vpop.f32.mrf.mxu0
        %661 = vmatprep.mubr.bf16.mxu0 0
        %662 = vmatmul.mubr.bf16.gmra.mxu0 %v459
        %v663 = vpop.f32.mrf.mxu0
        %v664 = vadd.f32 %v404, %v663
        %v665 = vpop.f32.mrf.mxu0
        %v666 = vpop.f32.mrf.mxu0
        %v667 = vadd.f32 %v404, %v666
        %v668 = vpop.f32.mrf.mxu0
        %669 = vmatprep.mubr.bf16.mxu0 0
        %670 = vmatmul.mubr.bf16.gmra.mxu0 %v462
        %v671 = vpop.f32.mrf.mxu0
        %v672 = vadd.f32 %v404, %v671
        %v673 = vpop.f32.mrf.mxu0
        %v674 = vpop.f32.mrf.mxu0
        %v675 = vadd.f32 %v404, %v674
        %v676 = vpop.f32.mrf.mxu0
        %677 = vmatprep.mubr.bf16.mxu0 0
        %678 = vmatmul.mubr.bf16.gmra.mxu0 %v465
        %v679 = vpop.f32.mrf.mxu0
        %v680 = vadd.f32 %v404, %v679
        %v681 = vpop.f32.mrf.mxu0
        %v682 = vpop.f32.mrf.mxu0
        %v683 = vadd.f32 %v404, %v682
        %v684 = vpop.f32.mrf.mxu0
        %685 = vmatprep.mubr.bf16.mxu0 0
        %686 = vmatmul.mubr.bf16.gmra.mxu0 %v468
        %v687 = vpop.f32.mrf.mxu0
        %v688 = vadd.f32 %v404, %v687
        %v689 = vpop.f32.mrf.mxu0
        %v690 = vpop.f32.mrf.mxu0
        %v691 = vadd.f32 %v404, %v690
        %v692 = vpop.f32.mrf.mxu0
        %693 = vmatprep.mubr.bf16.mxu0 0
        %694 = vmatmul.mubr.bf16.gmra.mxu0 %v471
        %v695 = vpop.f32.mrf.mxu0
        %v696 = vadd.f32 %v404, %v695
        %v697 = vpop.f32.mrf.mxu0
        %v698 = vpop.f32.mrf.mxu0
        %v699 = vadd.f32 %v404, %v698
        %v700 = vpop.f32.mrf.mxu0
        %701 = vmatprep.mubr.bf16.mxu0 0
        %702 = vmatmul.mubr.bf16.gmra.mxu0 %v474
        %v703 = vpop.f32.mrf.mxu0
        %v704 = vadd.f32 %v404, %v703
        %v705 = vpop.f32.mrf.mxu0
        %v706 = vpop.f32.mrf.mxu0
        %v707 = vadd.f32 %v404, %v706
        %v708 = vpop.f32.mrf.mxu0
        %709 = vmatprep.mubr.bf16.mxu0 0
        %710 = vmatmul.mubr.bf16.gmra.mxu0 %v477
        %v711 = vpop.f32.mrf.mxu0
        %v712 = vadd.f32 %v404, %v711
        %v713 = vpop.f32.mrf.mxu0
        %v714 = vpop.f32.mrf.mxu0
        %v715 = vadd.f32 %v404, %v714
        %v716 = vpop.f32.mrf.mxu0
        %717 = vmatprep.mubr.bf16.mxu0 0
        %718 = vmatmul.mubr.bf16.gmra.mxu0 %v480
        %v719 = vpop.f32.mrf.mxu0
        %v720 = vadd.f32 %v404, %v719
        %v721 = vpop.f32.mrf.mxu0
        %v722 = vpop.f32.mrf.mxu0
        %v723 = vadd.f32 %v404, %v722
        %v724 = vpop.f32.mrf.mxu0
        %725 = vmatprep.mubr.bf16.mxu0 0
        %726 = vmatmul.mubr.bf16.gmra.mxu0 %v483
        %v727 = vpop.f32.mrf.mxu0
        %v728 = vadd.f32 %v404, %v727
        %v729 = vpop.f32.mrf.mxu0
        %v730 = vpop.f32.mrf.mxu0
        %v731 = vadd.f32 %v404, %v730
        %v732 = vpop.f32.mrf.mxu0
        %733 = vmatprep.mubr.bf16.mxu0 0
        %734 = vmatmul.mubr.bf16.gmra.mxu0 %v486
        %v735 = vpop.f32.mrf.mxu0
        %v736 = vadd.f32 %v404, %v735
        %v737 = vpop.f32.mrf.mxu0
        %v738 = vpop.f32.mrf.mxu0
        %v739 = vadd.f32 %v404, %v738
        %v740 = vpop.f32.mrf.mxu0
        %741 = vmatprep.mubr.bf16.mxu0 0
        %742 = vmatmul.mubr.bf16.gmra.mxu0 %v489
        %v743 = vpop.f32.mrf.mxu0
        %v744 = vadd.f32 %v404, %v743
        %v745 = vpop.f32.mrf.mxu0
        %v746 = vpop.f32.mrf.mxu0
        %v747 = vadd.f32 %v404, %v746
        %v748 = vpop.f32.mrf.mxu0
        %749 = vmatprep.mubr.bf16.mxu0 0
        %750 = vmatmul.mubr.bf16.gmra.mxu0 %v492
        %v751 = vpop.f32.mrf.mxu0
        %v752 = vadd.f32 %v404, %v751
        %v753 = vpop.f32.mrf.mxu0
        %v754 = vpop.f32.mrf.mxu0
        %v755 = vadd.f32 %v404, %v754
        %v756 = vpop.f32.mrf.mxu0
        %757 = vmatprep.mubr.bf16.mxu0 0
        %758 = vmatmul.mubr.bf16.gmra.mxu0 %v495
        %v759 = vpop.f32.mrf.mxu0
        %v760 = vadd.f32 %v404, %v759
        %v761 = vpop.f32.mrf.mxu0
        %v762 = vpop.f32.mrf.mxu0
        %v763 = vadd.f32 %v404, %v762
        %v764 = vpop.f32.mrf.mxu0
        %765 = vmatprep.mubr.bf16.mxu0 0
        %766 = vmatmul.mubr.bf16.gmra.mxu0 %v498
        %v767 = vpop.f32.mrf.mxu0
        %v768 = vadd.f32 %v404, %v767
        %v769 = vpop.f32.mrf.mxu0
        %v770 = vpop.f32.mrf.mxu0
        %v771 = vadd.f32 %v404, %v770
        %v772 = vpop.f32.mrf.mxu0
        %773 = vmatprep.mubr.bf16.mxu0 0
        %774 = vmatmul.mubr.bf16.gmra.mxu0 %v501
        %v775 = vpop.f32.mrf.mxu0
        %v776 = vadd.f32 %v404, %v775
        %v777 = vpop.f32.mrf.mxu0
        %v778 = vpop.f32.mrf.mxu0
        %v779 = vadd.f32 %v404, %v778
        %v780 = vpop.f32.mrf.mxu0
        %781 = vmatprep.mubr.bf16.mxu0 0
        %782 = vmatmul.mubr.bf16.gmra.mxu0 %v504
        %v783 = vpop.f32.mrf.mxu0
        %v784 = vadd.f32 %v404, %v783
        %v785 = vpop.f32.mrf.mxu0
        %v786 = vpop.f32.mrf.mxu0
        %v787 = vadd.f32 %v404, %v786
        %v788 = vpop.f32.mrf.mxu0
        %789 = vmatprep.mubr.bf16.mxu0 0
        %790 = vmatmul.mubr.bf16.gmra.mxu0 %v507
        %v791 = vpop.f32.mrf.mxu0
        %v792 = vadd.f32 %v404, %v791
        %v793 = vpop.f32.mrf.mxu0
        %v794 = vpop.f32.mrf.mxu0
        %v795 = vadd.f32 %v404, %v794
        %v796 = vpop.f32.mrf.mxu0
        %797 = vdwg.mxu0
        %v798 = vmul.f32 %v544, 0.2
        %v799 = vmul.f32 %v547, 0.2
        %v800 = vmul.f32 %v552, 0.2
        %v801 = vmul.f32 %v555, 0.2
        %v802 = vmul.f32 %v560, 0.2
        %v803 = vmul.f32 %v563, 0.2
        %v804 = vmul.f32 %v568, 0.2
        %v805 = vmul.f32 %v571, 0.2
        %v806 = vmul.f32 %v576, 0.2
        %v807 = vmul.f32 %v579, 0.2
        %v808 = vmul.f32 %v584, 0.2
        %v809 = vmul.f32 %v587, 0.2
        %v810 = vmul.f32 %v592, 0.2
        %v811 = vmul.f32 %v595, 0.2
        %v812 = vmul.f32 %v600, 0.2
        %v813 = vmul.f32 %v603, 0.2
        %v814 = vmul.f32 %v608, 0.2
        %v815 = vmul.f32 %v611, 0.2
        %v816 = vmul.f32 %v616, 0.2
        %v817 = vmul.f32 %v619, 0.2
        %v818 = vmul.f32 %v624, 0.2
        %v819 = vmul.f32 %v627, 0.2
        %v820 = vmul.f32 %v632, 0.2
        %v821 = vmul.f32 %v635, 0.2
        %v822 = vmul.f32 %v640, 0.2
        %v823 = vmul.f32 %v643, 0.2
        %v824 = vmul.f32 %v648, 0.2
        %v825 = vmul.f32 %v651, 0.2
        %v826 = vmul.f32 %v656, 0.2
        %v827 = vmul.f32 %v659, 0.2
        %v828 = vmul.f32 %v664, 0.2
        %v829 = vmul.f32 %v667, 0.2
        %v830 = vmul.f32 %v672, 0.2
        %v831 = vmul.f32 %v675, 0.2
        %v832 = vmul.f32 %v680, 0.2
        %v833 = vmul.f32 %v683, 0.2
        %v834 = vmul.f32 %v688, 0.2
        %v835 = vmul.f32 %v691, 0.2
        %v836 = vmul.f32 %v696, 0.2
        %v837 = vmul.f32 %v699, 0.2
        %v838 = vmul.f32 %v704, 0.2
        %v839 = vmul.f32 %v707, 0.2
        %v840 = vmul.f32 %v712, 0.2
        %v841 = vmul.f32 %v715, 0.2
        %v842 = vmul.f32 %v720, 0.2
        %v843 = vmul.f32 %v723, 0.2
        %v844 = vmul.f32 %v728, 0.2
        %v845 = vmul.f32 %v731, 0.2
        %v846 = vmul.f32 %v736, 0.2
        %v847 = vmul.f32 %v739, 0.2
        %v848 = vmul.f32 %v744, 0.2
        %v849 = vmul.f32 %v747, 0.2
        %v850 = vmul.f32 %v752, 0.2
        %v851 = vmul.f32 %v755, 0.2
        %v852 = vmul.f32 %v760, 0.2
        %v853 = vmul.f32 %v763, 0.2
        %v854 = vmul.f32 %v768, 0.2
        %v855 = vmul.f32 %v771, 0.2
        %v856 = vmul.f32 %v776, 0.2
        %v857 = vmul.f32 %v779, 0.2
        %v858 = vmul.f32 %v784, 0.2
        %v859 = vmul.f32 %v787, 0.2
        %v860 = vmul.f32 %v792, 0.2
        %v861 = vmul.f32 %v795, 0.2
        %v862 = vmax.f32 %v544, %v798
        %v863 = vmax.f32 %v547, %v799
        %v864 = vmax.f32 %v552, %v800
        %v865 = vmax.f32 %v555, %v801
        %v866 = vmax.f32 %v560, %v802
        %v867 = vmax.f32 %v563, %v803
        %v868 = vmax.f32 %v568, %v804
        %v869 = vmax.f32 %v571, %v805
        %v870 = vmax.f32 %v576, %v806
        %v871 = vmax.f32 %v579, %v807
        %v872 = vmax.f32 %v584, %v808
        %v873 = vmax.f32 %v587, %v809
        %v874 = vmax.f32 %v592, %v810
        %v875 = vmax.f32 %v595, %v811
        %v876 = vmax.f32 %v600, %v812
        %v877 = vmax.f32 %v603, %v813
        %v878 = vmax.f32 %v608, %v814
        %v879 = vmax.f32 %v611, %v815
        %v880 = vmax.f32 %v616, %v816
        %v881 = vmax.f32 %v619, %v817
        %v882 = vmax.f32 %v624, %v818
        %v883 = vmax.f32 %v627, %v819
        %v884 = vmax.f32 %v632, %v820
        %v885 = vmax.f32 %v635, %v821
        %v886 = vmax.f32 %v640, %v822
        %v887 = vmax.f32 %v643, %v823
        %v888 = vmax.f32 %v648, %v824
        %v889 = vmax.f32 %v651, %v825
        %v890 = vmax.f32 %v656, %v826
        %v891 = vmax.f32 %v659, %v827
        %v892 = vmax.f32 %v664, %v828
        %v893 = vmax.f32 %v667, %v829
        %v894 = vmax.f32 %v672, %v830
        %v895 = vmax.f32 %v675, %v831
        %v896 = vmax.f32 %v680, %v832
        %v897 = vmax.f32 %v683, %v833
        %v898 = vmax.f32 %v688, %v834
        %v899 = vmax.f32 %v691, %v835
        %v900 = vmax.f32 %v696, %v836
        %v901 = vmax.f32 %v699, %v837
        %v902 = vmax.f32 %v704, %v838
        %v903 = vmax.f32 %v707, %v839
        %v904 = vmax.f32 %v712, %v840
        %v905 = vmax.f32 %v715, %v841
        %v906 = vmax.f32 %v720, %v842
        %v907 = vmax.f32 %v723, %v843
        %v908 = vmax.f32 %v728, %v844
        %v909 = vmax.f32 %v731, %v845
        %v910 = vmax.f32 %v736, %v846
        %v911 = vmax.f32 %v739, %v847
        %v912 = vmax.f32 %v744, %v848
        %v913 = vmax.f32 %v747, %v849
        %v914 = vmax.f32 %v752, %v850
        %v915 = vmax.f32 %v755, %v851
        %v916 = vmax.f32 %v760, %v852
        %v917 = vmax.f32 %v763, %v853
        %v918 = vmax.f32 %v768, %v854
        %v919 = vmax.f32 %v771, %v855
        %v920 = vmax.f32 %v776, %v856
        %v921 = vmax.f32 %v779, %v857
        %v922 = vmax.f32 %v784, %v858
        %v923 = vmax.f32 %v787, %v859
        %v924 = vmax.f32 %v792, %v860
        %v925 = vmax.f32 %v795, %v861
        %v926 = vpack.c.bf16 %v863, %v862
        %v927 = vpack.c.bf16 %v865, %v864
        %v928 = vpack.c.bf16 %v867, %v866
        %v929 = vpack.c.bf16 %v869, %v868
        %v930 = vpack.c.bf16 %v871, %v870
        %v931 = vpack.c.bf16 %v873, %v872
        %v932 = vpack.c.bf16 %v875, %v874
        %v933 = vpack.c.bf16 %v877, %v876
        %v934 = vpack.c.bf16 %v879, %v878
        %v935 = vpack.c.bf16 %v881, %v880
        %v936 = vpack.c.bf16 %v883, %v882
        %v937 = vpack.c.bf16 %v885, %v884
        %v938 = vpack.c.bf16 %v887, %v886
        %v939 = vpack.c.bf16 %v889, %v888
        %v940 = vpack.c.bf16 %v891, %v890
        %v941 = vpack.c.bf16 %v893, %v892
        %v942 = vpack.c.bf16 %v895, %v894
        %v943 = vpack.c.bf16 %v897, %v896
        %v944 = vpack.c.bf16 %v899, %v898
        %v945 = vpack.c.bf16 %v901, %v900
        %v946 = vpack.c.bf16 %v903, %v902
        %v947 = vpack.c.bf16 %v905, %v904
        %v948 = vpack.c.bf16 %v907, %v906
        %v949 = vpack.c.bf16 %v909, %v908
        %v950 = vpack.c.bf16 %v911, %v910
        %v951 = vpack.c.bf16 %v913, %v912
        %v952 = vpack.c.bf16 %v915, %v914
        %v953 = vpack.c.bf16 %v917, %v916
        %v954 = vpack.c.bf16 %v919, %v918
        %v955 = vpack.c.bf16 %v921, %v920
        %v956 = vpack.c.bf16 %v923, %v922
        %v957 = vpack.c.bf16 %v925, %v924
        %v958 = vld [vmem:[%s3] sm:$0xf]
        %v959 = vld [vmem:[%s3 + $0x4] sm:$0xf]
        %v960 = vld [vmem:[%s3 + $0x8] sm:$0xf]
        %v961 = vld [vmem:[%s3 + $0xc] sm:$0xf]
        %v962 = vld [vmem:[%s3 + $0x10] sm:$0xf]
        %v963 = vld [vmem:[%s3 + $0x14] sm:$0xf]
        %v964 = vld [vmem:[%s3 + $0x18] sm:$0xf]
        %v965 = vld [vmem:[%s3 + $0x1c] sm:$0xf]
        %v966 = vld [vmem:[%s3 + $0x20] sm:$0xf]
        %v967 = vld [vmem:[%s3 + $0x24] sm:$0xf]
        %v968 = vld [vmem:[%s3 + $0x28] sm:$0xf]
        %v969 = vld [vmem:[%s3 + $0x2c] sm:$0xf]
        %v970 = vld [vmem:[%s3 + $0x30] sm:$0xf]
        %v971 = vld [vmem:[%s3 + $0x34] sm:$0xf]
        %v972 = vld [vmem:[%s3 + $0x38] sm:$0xf]
        %v973 = vld [vmem:[%s3 + $0x3c] sm:$0xf]
        %v974 = vld [vmem:[%s4] sm:$0x1]
        %v976 = vlaneseq
        %v977 = vshrl.u32 %v976, 7
        %v978 = vsub.s32 0, %v977
        %v979 = vrot.slane %v974, %v978
        %v997 = vunpack.c.l.b16 %v958
        %v998 = vunpack.c.l.b16 %v959
        %v999 = vunpack.c.l.b16 %v960
        %v1000 = vunpack.c.l.b16 %v961
        %v1001 = vunpack.c.l.b16 %v962
        %v1002 = vunpack.c.l.b16 %v963
        %v1003 = vunpack.c.l.b16 %v964
        %v1004 = vunpack.c.l.b16 %v965
        %v1005 = vunpack.c.l.b16 %v966
        %v1006 = vunpack.c.l.b16 %v967
        %v1007 = vunpack.c.l.b16 %v968
        %v1008 = vunpack.c.l.b16 %v969
        %v1009 = vunpack.c.l.b16 %v970
        %v1010 = vunpack.c.l.b16 %v971
        %v1011 = vunpack.c.l.b16 %v972
        %v1012 = vunpack.c.l.b16 %v973
        %v1013 = vpack.c.b16 %v998, %v997
        %v1014 = vpack.c.b16 %v1000, %v999
        %v1015 = vpack.c.b16 %v1002, %v1001
        %v1016 = vpack.c.b16 %v1004, %v1003
        %v1017 = vpack.c.b16 %v1006, %v1005
        %v1018 = vpack.c.b16 %v1008, %v1007
        %v1019 = vpack.c.b16 %v1010, %v1009
        %v1020 = vpack.c.b16 %v1012, %v1011
        %1029 = vmatprep.subr.bf16.mxu0 0
        %1030 = vmatpush1.bf16.msra.mxu0 %v1020
        %1031 = vmatprep.subr.bf16.mxu0 0
        %1032 = vmatpush1.bf16.msra.mxu0 %v1019
        %1033 = vmatprep.subr.bf16.mxu0 0
        %1034 = vmatpush1.bf16.msra.mxu0 %v1018
        %1035 = vmatprep.subr.bf16.mxu0 0
        %1036 = vmatpush1.bf16.msra.mxu0 %v1017
        %1037 = vmatprep.subr.bf16.mxu0 0
        %1038 = vmatpush1.bf16.msra.mxu0 %v1016
        %1039 = vmatprep.subr.bf16.mxu0 0
        %1040 = vmatpush1.bf16.msra.mxu0 %v1015
        %1041 = vmatprep.subr.bf16.mxu0 0
        %1042 = vmatpush1.bf16.msra.mxu0 %v1014
        %1043 = vmatprep.subr.bf16.mxu0 0
        %1044 = vmatpush1.bf16.msra.mxu0 %v1013
        %1045 = vmatprep.subr.bf16.mxu0 0
        %1046 = vmatpush2.bf16.msra.mxu0 0
        %1047 = vmatprep.subr.bf16.mxu0 0
        %1048 = vmatpush2.bf16.msra.mxu0 0
        %1049 = vmatprep.subr.bf16.mxu0 0
        %1050 = vmatpush2.bf16.msra.mxu0 0
        %1051 = vmatprep.subr.bf16.mxu0 0
        %1052 = vmatpush2.bf16.msra.mxu0 0
        %1053 = vmatprep.subr.bf16.mxu0 0
        %1054 = vmatpush2.bf16.msra.mxu0 0
        %1055 = vmatprep.subr.bf16.mxu0 0
        %1056 = vmatpush2.bf16.msra.mxu0 0
        %1057 = vmatprep.subr.bf16.mxu0 0
        %1058 = vmatpush2.bf16.msra.mxu0 0
        %1059 = vmatprep.subr.bf16.mxu0 0
        %1060 = vmatpush2.bf16.msra.mxu0 0
        %1061 = vmatprep.mubr.bf16.mxu0 0
        %1062 = vmatmul.mubr.bf16.gmra.mxu0 %v926
        %v1063 = vpop.f32.mrf.mxu0
        %v1064 = vadd.f32 %v979, %v1063
        %v1065 = vpop.f32.mrf.mxu0
        %v1066 = vpop.f32.mrf.mxu0
        %v1067 = vadd.f32 %v979, %v1066
        %v1068 = vpop.f32.mrf.mxu0
        %1069 = vmatprep.mubr.bf16.mxu0 0
        %1070 = vmatmul.mubr.bf16.gmra.mxu0 %v927
        %v1071 = vpop.f32.mrf.mxu0
        %v1072 = vadd.f32 %v979, %v1071
        %v1073 = vpop.f32.mrf.mxu0
        %v1074 = vpop.f32.mrf.mxu0
        %v1075 = vadd.f32 %v979, %v1074
        %v1076 = vpop.f32.mrf.mxu0
        %1077 = vmatprep.mubr.bf16.mxu0 0
        %1078 = vmatmul.mubr.bf16.gmra.mxu0 %v928
        %v1079 = vpop.f32.mrf.mxu0
        %v1080 = vadd.f32 %v979, %v1079
        %v1081 = vpop.f32.mrf.mxu0
        %v1082 = vpop.f32.mrf.mxu0
        %v1083 = vadd.f32 %v979, %v1082
        %v1084 = vpop.f32.mrf.mxu0
        %1085 = vmatprep.mubr.bf16.mxu0 0
        %1086 = vmatmul.mubr.bf16.gmra.mxu0 %v929
        %v1087 = vpop.f32.mrf.mxu0
        %v1088 = vadd.f32 %v979, %v1087
        %v1089 = vpop.f32.mrf.mxu0
        %v1090 = vpop.f32.mrf.mxu0
        %v1091 = vadd.f32 %v979, %v1090
        %v1092 = vpop.f32.mrf.mxu0
        %1093 = vmatprep.mubr.bf16.mxu0 0
        %1094 = vmatmul.mubr.bf16.gmra.mxu0 %v930
        %v1095 = vpop.f32.mrf.mxu0
        %v1096 = vadd.f32 %v979, %v1095
        %v1097 = vpop.f32.mrf.mxu0
        %v1098 = vpop.f32.mrf.mxu0
        %v1099 = vadd.f32 %v979, %v1098
        %v1100 = vpop.f32.mrf.mxu0
        %1101 = vmatprep.mubr.bf16.mxu0 0
        %1102 = vmatmul.mubr.bf16.gmra.mxu0 %v931
        %v1103 = vpop.f32.mrf.mxu0
        %v1104 = vadd.f32 %v979, %v1103
        %v1105 = vpop.f32.mrf.mxu0
        %v1106 = vpop.f32.mrf.mxu0
        %v1107 = vadd.f32 %v979, %v1106
        %v1108 = vpop.f32.mrf.mxu0
        %1109 = vmatprep.mubr.bf16.mxu0 0
        %1110 = vmatmul.mubr.bf16.gmra.mxu0 %v932
        %v1111 = vpop.f32.mrf.mxu0
        %v1112 = vadd.f32 %v979, %v1111
        %v1113 = vpop.f32.mrf.mxu0
        %v1114 = vpop.f32.mrf.mxu0
        %v1115 = vadd.f32 %v979, %v1114
        %v1116 = vpop.f32.mrf.mxu0
        %1117 = vmatprep.mubr.bf16.mxu0 0
        %1118 = vmatmul.mubr.bf16.gmra.mxu0 %v933
        %v1119 = vpop.f32.mrf.mxu0
        %v1120 = vadd.f32 %v979, %v1119
        %v1121 = vpop.f32.mrf.mxu0
        %v1122 = vpop.f32.mrf.mxu0
        %v1123 = vadd.f32 %v979, %v1122
        %v1124 = vpop.f32.mrf.mxu0
        %1125 = vmatprep.mubr.bf16.mxu0 0
        %1126 = vmatmul.mubr.bf16.gmra.mxu0 %v934
        %v1127 = vpop.f32.mrf.mxu0
        %v1128 = vadd.f32 %v979, %v1127
        %v1129 = vpop.f32.mrf.mxu0
        %v1130 = vpop.f32.mrf.mxu0
        %v1131 = vadd.f32 %v979, %v1130
        %v1132 = vpop.f32.mrf.mxu0
        %1133 = vmatprep.mubr.bf16.mxu0 0
        %1134 = vmatmul.mubr.bf16.gmra.mxu0 %v935
        %v1135 = vpop.f32.mrf.mxu0
        %v1136 = vadd.f32 %v979, %v1135
        %v1137 = vpop.f32.mrf.mxu0
        %v1138 = vpop.f32.mrf.mxu0
        %v1139 = vadd.f32 %v979, %v1138
        %v1140 = vpop.f32.mrf.mxu0
        %1141 = vmatprep.mubr.bf16.mxu0 0
        %1142 = vmatmul.mubr.bf16.gmra.mxu0 %v936
        %v1143 = vpop.f32.mrf.mxu0
        %v1144 = vadd.f32 %v979, %v1143
        %v1145 = vpop.f32.mrf.mxu0
        %v1146 = vpop.f32.mrf.mxu0
        %v1147 = vadd.f32 %v979, %v1146
        %v1148 = vpop.f32.mrf.mxu0
        %1149 = vmatprep.mubr.bf16.mxu0 0
        %1150 = vmatmul.mubr.bf16.gmra.mxu0 %v937
        %v1151 = vpop.f32.mrf.mxu0
        %v1152 = vadd.f32 %v979, %v1151
        %v1153 = vpop.f32.mrf.mxu0
        %v1154 = vpop.f32.mrf.mxu0
        %v1155 = vadd.f32 %v979, %v1154
        %v1156 = vpop.f32.mrf.mxu0
        %1157 = vmatprep.mubr.bf16.mxu0 0
        %1158 = vmatmul.mubr.bf16.gmra.mxu0 %v938
        %v1159 = vpop.f32.mrf.mxu0
        %v1160 = vadd.f32 %v979, %v1159
        %v1161 = vpop.f32.mrf.mxu0
        %v1162 = vpop.f32.mrf.mxu0
        %v1163 = vadd.f32 %v979, %v1162
        %v1164 = vpop.f32.mrf.mxu0
        %1165 = vmatprep.mubr.bf16.mxu0 0
        %1166 = vmatmul.mubr.bf16.gmra.mxu0 %v939
        %v1167 = vpop.f32.mrf.mxu0
        %v1168 = vadd.f32 %v979, %v1167
        %v1169 = vpop.f32.mrf.mxu0
        %v1170 = vpop.f32.mrf.mxu0
        %v1171 = vadd.f32 %v979, %v1170
        %v1172 = vpop.f32.mrf.mxu0
        %1173 = vmatprep.mubr.bf16.mxu0 0
        %1174 = vmatmul.mubr.bf16.gmra.mxu0 %v940
        %v1175 = vpop.f32.mrf.mxu0
        %v1176 = vadd.f32 %v979, %v1175
        %v1177 = vpop.f32.mrf.mxu0
        %v1178 = vpop.f32.mrf.mxu0
        %v1179 = vadd.f32 %v979, %v1178
        %v1180 = vpop.f32.mrf.mxu0
        %1181 = vmatprep.mubr.bf16.mxu0 0
        %1182 = vmatmul.mubr.bf16.gmra.mxu0 %v941
        %v1183 = vpop.f32.mrf.mxu0
        %v1184 = vadd.f32 %v979, %v1183
        %v1185 = vpop.f32.mrf.mxu0
        %v1186 = vpop.f32.mrf.mxu0
        %v1187 = vadd.f32 %v979, %v1186
        %v1188 = vpop.f32.mrf.mxu0
        %1189 = vmatprep.mubr.bf16.mxu0 0
        %1190 = vmatmul.mubr.bf16.gmra.mxu0 %v942
        %v1191 = vpop.f32.mrf.mxu0
        %v1192 = vadd.f32 %v979, %v1191
        %v1193 = vpop.f32.mrf.mxu0
        %v1194 = vpop.f32.mrf.mxu0
        %v1195 = vadd.f32 %v979, %v1194
        %v1196 = vpop.f32.mrf.mxu0
        %1197 = vmatprep.mubr.bf16.mxu0 0
        %1198 = vmatmul.mubr.bf16.gmra.mxu0 %v943
        %v1199 = vpop.f32.mrf.mxu0
        %v1200 = vadd.f32 %v979, %v1199
        %v1201 = vpop.f32.mrf.mxu0
        %v1202 = vpop.f32.mrf.mxu0
        %v1203 = vadd.f32 %v979, %v1202
        %v1204 = vpop.f32.mrf.mxu0
        %1205 = vmatprep.mubr.bf16.mxu0 0
        %1206 = vmatmul.mubr.bf16.gmra.mxu0 %v944
        %v1207 = vpop.f32.mrf.mxu0
        %v1208 = vadd.f32 %v979, %v1207
        %v1209 = vpop.f32.mrf.mxu0
        %v1210 = vpop.f32.mrf.mxu0
        %v1211 = vadd.f32 %v979, %v1210
        %v1212 = vpop.f32.mrf.mxu0
        %1213 = vmatprep.mubr.bf16.mxu0 0
        %1214 = vmatmul.mubr.bf16.gmra.mxu0 %v945
        %v1215 = vpop.f32.mrf.mxu0
        %v1216 = vadd.f32 %v979, %v1215
        %v1217 = vpop.f32.mrf.mxu0
        %v1218 = vpop.f32.mrf.mxu0
        %v1219 = vadd.f32 %v979, %v1218
        %v1220 = vpop.f32.mrf.mxu0
        %1221 = vmatprep.mubr.bf16.mxu0 0
        %1222 = vmatmul.mubr.bf16.gmra.mxu0 %v946
        %v1223 = vpop.f32.mrf.mxu0
        %v1224 = vadd.f32 %v979, %v1223
        %v1225 = vpop.f32.mrf.mxu0
        %v1226 = vpop.f32.mrf.mxu0
        %v1227 = vadd.f32 %v979, %v1226
        %v1228 = vpop.f32.mrf.mxu0
        %1229 = vmatprep.mubr.bf16.mxu0 0
        %1230 = vmatmul.mubr.bf16.gmra.mxu0 %v947
        %v1231 = vpop.f32.mrf.mxu0
        %v1232 = vadd.f32 %v979, %v1231
        %v1233 = vpop.f32.mrf.mxu0
        %v1234 = vpop.f32.mrf.mxu0
        %v1235 = vadd.f32 %v979, %v1234
        %v1236 = vpop.f32.mrf.mxu0
        %1237 = vmatprep.mubr.bf16.mxu0 0
        %1238 = vmatmul.mubr.bf16.gmra.mxu0 %v948
        %v1239 = vpop.f32.mrf.mxu0
        %v1240 = vadd.f32 %v979, %v1239
        %v1241 = vpop.f32.mrf.mxu0
        %v1242 = vpop.f32.mrf.mxu0
        %v1243 = vadd.f32 %v979, %v1242
        %v1244 = vpop.f32.mrf.mxu0
        %1245 = vmatprep.mubr.bf16.mxu0 0
        %1246 = vmatmul.mubr.bf16.gmra.mxu0 %v949
        %v1247 = vpop.f32.mrf.mxu0
        %v1248 = vadd.f32 %v979, %v1247
        %v1249 = vpop.f32.mrf.mxu0
        %v1250 = vpop.f32.mrf.mxu0
        %v1251 = vadd.f32 %v979, %v1250
        %v1252 = vpop.f32.mrf.mxu0
        %1253 = vmatprep.mubr.bf16.mxu0 0
        %1254 = vmatmul.mubr.bf16.gmra.mxu0 %v950
        %v1255 = vpop.f32.mrf.mxu0
        %v1256 = vadd.f32 %v979, %v1255
        %v1257 = vpop.f32.mrf.mxu0
        %v1258 = vpop.f32.mrf.mxu0
        %v1259 = vadd.f32 %v979, %v1258
        %v1260 = vpop.f32.mrf.mxu0
        %1261 = vmatprep.mubr.bf16.mxu0 0
        %1262 = vmatmul.mubr.bf16.gmra.mxu0 %v951
        %v1263 = vpop.f32.mrf.mxu0
        %v1264 = vadd.f32 %v979, %v1263
        %v1265 = vpop.f32.mrf.mxu0
        %v1266 = vpop.f32.mrf.mxu0
        %v1267 = vadd.f32 %v979, %v1266
        %v1268 = vpop.f32.mrf.mxu0
        %1269 = vmatprep.mubr.bf16.mxu0 0
        %1270 = vmatmul.mubr.bf16.gmra.mxu0 %v952
        %v1271 = vpop.f32.mrf.mxu0
        %v1272 = vadd.f32 %v979, %v1271
        %v1273 = vpop.f32.mrf.mxu0
        %v1274 = vpop.f32.mrf.mxu0
        %v1275 = vadd.f32 %v979, %v1274
        %v1276 = vpop.f32.mrf.mxu0
        %1277 = vmatprep.mubr.bf16.mxu0 0
        %1278 = vmatmul.mubr.bf16.gmra.mxu0 %v953
        %v1279 = vpop.f32.mrf.mxu0
        %v1280 = vadd.f32 %v979, %v1279
        %v1281 = vpop.f32.mrf.mxu0
        %v1282 = vpop.f32.mrf.mxu0
        %v1283 = vadd.f32 %v979, %v1282
        %v1284 = vpop.f32.mrf.mxu0
        %1285 = vmatprep.mubr.bf16.mxu0 0
        %1286 = vmatmul.mubr.bf16.gmra.mxu0 %v954
        %v1287 = vpop.f32.mrf.mxu0
        %v1288 = vadd.f32 %v979, %v1287
        %v1289 = vpop.f32.mrf.mxu0
        %v1290 = vpop.f32.mrf.mxu0
        %v1291 = vadd.f32 %v979, %v1290
        %v1292 = vpop.f32.mrf.mxu0
        %1293 = vmatprep.mubr.bf16.mxu0 0
        %1294 = vmatmul.mubr.bf16.gmra.mxu0 %v955
        %v1295 = vpop.f32.mrf.mxu0
        %v1296 = vadd.f32 %v979, %v1295
        %v1297 = vpop.f32.mrf.mxu0
        %v1298 = vpop.f32.mrf.mxu0
        %v1299 = vadd.f32 %v979, %v1298
        %v1300 = vpop.f32.mrf.mxu0
        %1301 = vmatprep.mubr.bf16.mxu0 0
        %1302 = vmatmul.mubr.bf16.gmra.mxu0 %v956
        %v1303 = vpop.f32.mrf.mxu0
        %v1304 = vadd.f32 %v979, %v1303
        %v1305 = vpop.f32.mrf.mxu0
        %v1306 = vpop.f32.mrf.mxu0
        %v1307 = vadd.f32 %v979, %v1306
        %v1308 = vpop.f32.mrf.mxu0
        %1309 = vmatprep.mubr.bf16.mxu0 0
        %1310 = vmatmul.mubr.bf16.gmra.mxu0 %v957
        %v1311 = vpop.f32.mrf.mxu0
        %v1312 = vadd.f32 %v979, %v1311
        %v1313 = vpop.f32.mrf.mxu0
        %v1314 = vpop.f32.mrf.mxu0
        %v1315 = vadd.f32 %v979, %v1314
        %v1316 = vpop.f32.mrf.mxu0
        %1317 = vdwg.mxu0
        %v1318 = vmul.f32 %v1064, 0.2
        %v1319 = vmul.f32 %v1067, 0.2
        %v1320 = vmul.f32 %v1072, 0.2
        %v1321 = vmul.f32 %v1075, 0.2
        %v1322 = vmul.f32 %v1080, 0.2
        %v1323 = vmul.f32 %v1083, 0.2
        %v1324 = vmul.f32 %v1088, 0.2
        %v1325 = vmul.f32 %v1091, 0.2
        %v1326 = vmul.f32 %v1096, 0.2
        %v1327 = vmul.f32 %v1099, 0.2
        %v1328 = vmul.f32 %v1104, 0.2
        %v1329 = vmul.f32 %v1107, 0.2
        %v1330 = vmul.f32 %v1112, 0.2
        %v1331 = vmul.f32 %v1115, 0.2
        %v1332 = vmul.f32 %v1120, 0.2
        %v1333 = vmul.f32 %v1123, 0.2
        %v1334 = vmul.f32 %v1128, 0.2
        %v1335 = vmul.f32 %v1131, 0.2
        %v1336 = vmul.f32 %v1136, 0.2
        %v1337 = vmul.f32 %v1139, 0.2
        %v1338 = vmul.f32 %v1144, 0.2
        %v1339 = vmul.f32 %v1147, 0.2
        %v1340 = vmul.f32 %v1152, 0.2
        %v1341 = vmul.f32 %v1155, 0.2
        %v1342 = vmul.f32 %v1160, 0.2
        %v1343 = vmul.f32 %v1163, 0.2
        %v1344 = vmul.f32 %v1168, 0.2
        %v1345 = vmul.f32 %v1171, 0.2
        %v1346 = vmul.f32 %v1176, 0.2
        %v1347 = vmul.f32 %v1179, 0.2
        %v1348 = vmul.f32 %v1184, 0.2
        %v1349 = vmul.f32 %v1187, 0.2
        %v1350 = vmul.f32 %v1192, 0.2
        %v1351 = vmul.f32 %v1195, 0.2
        %v1352 = vmul.f32 %v1200, 0.2
        %v1353 = vmul.f32 %v1203, 0.2
        %v1354 = vmul.f32 %v1208, 0.2
        %v1355 = vmul.f32 %v1211, 0.2
        %v1356 = vmul.f32 %v1216, 0.2
        %v1357 = vmul.f32 %v1219, 0.2
        %v1358 = vmul.f32 %v1224, 0.2
        %v1359 = vmul.f32 %v1227, 0.2
        %v1360 = vmul.f32 %v1232, 0.2
        %v1361 = vmul.f32 %v1235, 0.2
        %v1362 = vmul.f32 %v1240, 0.2
        %v1363 = vmul.f32 %v1243, 0.2
        %v1364 = vmul.f32 %v1248, 0.2
        %v1365 = vmul.f32 %v1251, 0.2
        %v1366 = vmul.f32 %v1256, 0.2
        %v1367 = vmul.f32 %v1259, 0.2
        %v1368 = vmul.f32 %v1264, 0.2
        %v1369 = vmul.f32 %v1267, 0.2
        %v1370 = vmul.f32 %v1272, 0.2
        %v1371 = vmul.f32 %v1275, 0.2
        %v1372 = vmul.f32 %v1280, 0.2
        %v1373 = vmul.f32 %v1283, 0.2
        %v1374 = vmul.f32 %v1288, 0.2
        %v1375 = vmul.f32 %v1291, 0.2
        %v1376 = vmul.f32 %v1296, 0.2
        %v1377 = vmul.f32 %v1299, 0.2
        %v1378 = vmul.f32 %v1304, 0.2
        %v1379 = vmul.f32 %v1307, 0.2
        %v1380 = vmul.f32 %v1312, 0.2
        %v1381 = vmul.f32 %v1315, 0.2
        %v1382 = vmax.f32 %v1064, %v1318
        %v1383 = vmax.f32 %v1067, %v1319
        %v1384 = vmax.f32 %v1072, %v1320
        %v1385 = vmax.f32 %v1075, %v1321
        %v1386 = vmax.f32 %v1080, %v1322
        %v1387 = vmax.f32 %v1083, %v1323
        %v1388 = vmax.f32 %v1088, %v1324
        %v1389 = vmax.f32 %v1091, %v1325
        %v1390 = vmax.f32 %v1096, %v1326
        %v1391 = vmax.f32 %v1099, %v1327
        %v1392 = vmax.f32 %v1104, %v1328
        %v1393 = vmax.f32 %v1107, %v1329
        %v1394 = vmax.f32 %v1112, %v1330
        %v1395 = vmax.f32 %v1115, %v1331
        %v1396 = vmax.f32 %v1120, %v1332
        %v1397 = vmax.f32 %v1123, %v1333
        %v1398 = vmax.f32 %v1128, %v1334
        %v1399 = vmax.f32 %v1131, %v1335
        %v1400 = vmax.f32 %v1136, %v1336
        %v1401 = vmax.f32 %v1139, %v1337
        %v1402 = vmax.f32 %v1144, %v1338
        %v1403 = vmax.f32 %v1147, %v1339
        %v1404 = vmax.f32 %v1152, %v1340
        %v1405 = vmax.f32 %v1155, %v1341
        %v1406 = vmax.f32 %v1160, %v1342
        %v1407 = vmax.f32 %v1163, %v1343
        %v1408 = vmax.f32 %v1168, %v1344
        %v1409 = vmax.f32 %v1171, %v1345
        %v1410 = vmax.f32 %v1176, %v1346
        %v1411 = vmax.f32 %v1179, %v1347
        %v1412 = vmax.f32 %v1184, %v1348
        %v1413 = vmax.f32 %v1187, %v1349
        %v1414 = vmax.f32 %v1192, %v1350
        %v1415 = vmax.f32 %v1195, %v1351
        %v1416 = vmax.f32 %v1200, %v1352
        %v1417 = vmax.f32 %v1203, %v1353
        %v1418 = vmax.f32 %v1208, %v1354
        %v1419 = vmax.f32 %v1211, %v1355
        %v1420 = vmax.f32 %v1216, %v1356
        %v1421 = vmax.f32 %v1219, %v1357
        %v1422 = vmax.f32 %v1224, %v1358
        %v1423 = vmax.f32 %v1227, %v1359
        %v1424 = vmax.f32 %v1232, %v1360
        %v1425 = vmax.f32 %v1235, %v1361
        %v1426 = vmax.f32 %v1240, %v1362
        %v1427 = vmax.f32 %v1243, %v1363
        %v1428 = vmax.f32 %v1248, %v1364
        %v1429 = vmax.f32 %v1251, %v1365
        %v1430 = vmax.f32 %v1256, %v1366
        %v1431 = vmax.f32 %v1259, %v1367
        %v1432 = vmax.f32 %v1264, %v1368
        %v1433 = vmax.f32 %v1267, %v1369
        %v1434 = vmax.f32 %v1272, %v1370
        %v1435 = vmax.f32 %v1275, %v1371
        %v1436 = vmax.f32 %v1280, %v1372
        %v1437 = vmax.f32 %v1283, %v1373
        %v1438 = vmax.f32 %v1288, %v1374
        %v1439 = vmax.f32 %v1291, %v1375
        %v1440 = vmax.f32 %v1296, %v1376
        %v1441 = vmax.f32 %v1299, %v1377
        %v1442 = vmax.f32 %v1304, %v1378
        %v1443 = vmax.f32 %v1307, %v1379
        %v1444 = vmax.f32 %v1312, %v1380
        %v1445 = vmax.f32 %v1315, %v1381
        %v1446 = vpack.c.bf16 %v1383, %v1382
        %v1447 = vpack.c.bf16 %v1385, %v1384
        %v1448 = vpack.c.bf16 %v1387, %v1386
        %v1449 = vpack.c.bf16 %v1389, %v1388
        %v1450 = vpack.c.bf16 %v1391, %v1390
        %v1451 = vpack.c.bf16 %v1393, %v1392
        %v1452 = vpack.c.bf16 %v1395, %v1394
        %v1453 = vpack.c.bf16 %v1397, %v1396
        %v1454 = vpack.c.bf16 %v1399, %v1398
        %v1455 = vpack.c.bf16 %v1401, %v1400
        %v1456 = vpack.c.bf16 %v1403, %v1402
        %v1457 = vpack.c.bf16 %v1405, %v1404
        %v1458 = vpack.c.bf16 %v1407, %v1406
        %v1459 = vpack.c.bf16 %v1409, %v1408
        %v1460 = vpack.c.bf16 %v1411, %v1410
        %v1461 = vpack.c.bf16 %v1413, %v1412
        %v1462 = vpack.c.bf16 %v1415, %v1414
        %v1463 = vpack.c.bf16 %v1417, %v1416
        %v1464 = vpack.c.bf16 %v1419, %v1418
        %v1465 = vpack.c.bf16 %v1421, %v1420
        %v1466 = vpack.c.bf16 %v1423, %v1422
        %v1467 = vpack.c.bf16 %v1425, %v1424
        %v1468 = vpack.c.bf16 %v1427, %v1426
        %v1469 = vpack.c.bf16 %v1429, %v1428
        %v1470 = vpack.c.bf16 %v1431, %v1430
        %v1471 = vpack.c.bf16 %v1433, %v1432
        %v1472 = vpack.c.bf16 %v1435, %v1434
        %v1473 = vpack.c.bf16 %v1437, %v1436
        %v1474 = vpack.c.bf16 %v1439, %v1438
        %v1475 = vpack.c.bf16 %v1441, %v1440
        %v1476 = vpack.c.bf16 %v1443, %v1442
        %v1477 = vpack.c.bf16 %v1445, %v1444
        %v1478 = vld [vmem:[%s5] sm:$0xf]
        %v1479 = vld [vmem:[%s5 + $0x4] sm:$0xf]
        %v1480 = vld [vmem:[%s5 + $0x8] sm:$0xf]
        %v1481 = vld [vmem:[%s5 + $0xc] sm:$0xf]
        %v1482 = vld [vmem:[%s5 + $0x10] sm:$0xf]
        %v1483 = vld [vmem:[%s5 + $0x14] sm:$0xf]
        %v1484 = vld [vmem:[%s5 + $0x18] sm:$0xf]
        %v1485 = vld [vmem:[%s5 + $0x1c] sm:$0xf]
        %v1486 = vld [vmem:[%s5 + $0x20] sm:$0xf]
        %v1487 = vld [vmem:[%s5 + $0x24] sm:$0xf]
        %v1488 = vld [vmem:[%s5 + $0x28] sm:$0xf]
        %v1489 = vld [vmem:[%s5 + $0x2c] sm:$0xf]
        %v1490 = vld [vmem:[%s5 + $0x30] sm:$0xf]
        %v1491 = vld [vmem:[%s5 + $0x34] sm:$0xf]
        %v1492 = vld [vmem:[%s5 + $0x38] sm:$0xf]
        %v1493 = vld [vmem:[%s5 + $0x3c] sm:$0xf]
        %v1494 = vld [vmem:[%s6] sm:$0x1]
        %v1496 = vlaneseq
        %v1497 = vshrl.u32 %v1496, 7
        %v1498 = vsub.s32 0, %v1497
        %v1499 = vrot.slane %v1494, %v1498
        %v1517 = vunpack.c.l.b16 %v1478
        %v1518 = vunpack.c.l.b16 %v1479
        %v1519 = vunpack.c.l.b16 %v1480
        %v1520 = vunpack.c.l.b16 %v1481
        %v1521 = vunpack.c.l.b16 %v1482
        %v1522 = vunpack.c.l.b16 %v1483
        %v1523 = vunpack.c.l.b16 %v1484
        %v1524 = vunpack.c.l.b16 %v1485
        %v1525 = vunpack.c.l.b16 %v1486
        %v1526 = vunpack.c.l.b16 %v1487
        %v1527 = vunpack.c.l.b16 %v1488
        %v1528 = vunpack.c.l.b16 %v1489
        %v1529 = vunpack.c.l.b16 %v1490
        %v1530 = vunpack.c.l.b16 %v1491
        %v1531 = vunpack.c.l.b16 %v1492
        %v1532 = vunpack.c.l.b16 %v1493
        %v1533 = vpack.c.b16 %v1518, %v1517
        %v1534 = vpack.c.b16 %v1520, %v1519
        %v1535 = vpack.c.b16 %v1522, %v1521
        %v1536 = vpack.c.b16 %v1524, %v1523
        %v1537 = vpack.c.b16 %v1526, %v1525
        %v1538 = vpack.c.b16 %v1528, %v1527
        %v1539 = vpack.c.b16 %v1530, %v1529
        %v1540 = vpack.c.b16 %v1532, %v1531
        %1549 = vmatprep.subr.bf16.mxu0 0
        %1550 = vmatpush1.bf16.msra.mxu0 %v1540
        %1551 = vmatprep.subr.bf16.mxu0 0
        %1552 = vmatpush1.bf16.msra.mxu0 %v1539
        %1553 = vmatprep.subr.bf16.mxu0 0
        %1554 = vmatpush1.bf16.msra.mxu0 %v1538
        %1555 = vmatprep.subr.bf16.mxu0 0
        %1556 = vmatpush1.bf16.msra.mxu0 %v1537
        %1557 = vmatprep.subr.bf16.mxu0 0
        %1558 = vmatpush1.bf16.msra.mxu0 %v1536
        %1559 = vmatprep.subr.bf16.mxu0 0
        %1560 = vmatpush1.bf16.msra.mxu0 %v1535
        %1561 = vmatprep.subr.bf16.mxu0 0
        %1562 = vmatpush1.bf16.msra.mxu0 %v1534
        %1563 = vmatprep.subr.bf16.mxu0 0
        %1564 = vmatpush1.bf16.msra.mxu0 %v1533
        %1565 = vmatprep.subr.bf16.mxu0 0
        %1566 = vmatpush2.bf16.msra.mxu0 0
        %1567 = vmatprep.subr.bf16.mxu0 0
        %1568 = vmatpush2.bf16.msra.mxu0 0
        %1569 = vmatprep.subr.bf16.mxu0 0
        %1570 = vmatpush2.bf16.msra.mxu0 0
        %1571 = vmatprep.subr.bf16.mxu0 0
        %1572 = vmatpush2.bf16.msra.mxu0 0
        %1573 = vmatprep.subr.bf16.mxu0 0
        %1574 = vmatpush2.bf16.msra.mxu0 0
        %1575 = vmatprep.subr.bf16.mxu0 0
        %1576 = vmatpush2.bf16.msra.mxu0 0
        %1577 = vmatprep.subr.bf16.mxu0 0
        %1578 = vmatpush2.bf16.msra.mxu0 0
        %1579 = vmatprep.subr.bf16.mxu0 0
        %1580 = vmatpush2.bf16.msra.mxu0 0
        %1581 = vmatprep.mubr.bf16.mxu0 0
        %1582 = vmatmul.mubr.bf16.gmra.mxu0 %v1446
        %v1583 = vpop.f32.mrf.mxu0
        %v1584 = vadd.f32 %v1499, %v1583
        %v1585 = vpop.f32.mrf.mxu0
        %v1586 = vpop.f32.mrf.mxu0
        %v1587 = vadd.f32 %v1499, %v1586
        %v1588 = vpop.f32.mrf.mxu0
        %1589 = vmatprep.mubr.bf16.mxu0 0
        %1590 = vmatmul.mubr.bf16.gmra.mxu0 %v1447
        %v1591 = vpop.f32.mrf.mxu0
        %v1592 = vadd.f32 %v1499, %v1591
        %v1593 = vpop.f32.mrf.mxu0
        %v1594 = vpop.f32.mrf.mxu0
        %v1595 = vadd.f32 %v1499, %v1594
        %v1596 = vpop.f32.mrf.mxu0
        %1597 = vmatprep.mubr.bf16.mxu0 0
        %1598 = vmatmul.mubr.bf16.gmra.mxu0 %v1448
        %v1599 = vpop.f32.mrf.mxu0
        %v1600 = vadd.f32 %v1499, %v1599
        %v1601 = vpop.f32.mrf.mxu0
        %v1602 = vpop.f32.mrf.mxu0
        %v1603 = vadd.f32 %v1499, %v1602
        %v1604 = vpop.f32.mrf.mxu0
        %1605 = vmatprep.mubr.bf16.mxu0 0
        %1606 = vmatmul.mubr.bf16.gmra.mxu0 %v1449
        %v1607 = vpop.f32.mrf.mxu0
        %v1608 = vadd.f32 %v1499, %v1607
        %v1609 = vpop.f32.mrf.mxu0
        %v1610 = vpop.f32.mrf.mxu0
        %v1611 = vadd.f32 %v1499, %v1610
        %v1612 = vpop.f32.mrf.mxu0
        %1613 = vmatprep.mubr.bf16.mxu0 0
        %1614 = vmatmul.mubr.bf16.gmra.mxu0 %v1450
        %v1615 = vpop.f32.mrf.mxu0
        %v1616 = vadd.f32 %v1499, %v1615
        %v1617 = vpop.f32.mrf.mxu0
        %v1618 = vpop.f32.mrf.mxu0
        %v1619 = vadd.f32 %v1499, %v1618
        %v1620 = vpop.f32.mrf.mxu0
        %1621 = vmatprep.mubr.bf16.mxu0 0
        %1622 = vmatmul.mubr.bf16.gmra.mxu0 %v1451
        %v1623 = vpop.f32.mrf.mxu0
        %v1624 = vadd.f32 %v1499, %v1623
        %v1625 = vpop.f32.mrf.mxu0
        %v1626 = vpop.f32.mrf.mxu0
        %v1627 = vadd.f32 %v1499, %v1626
        %v1628 = vpop.f32.mrf.mxu0
        %1629 = vmatprep.mubr.bf16.mxu0 0
        %1630 = vmatmul.mubr.bf16.gmra.mxu0 %v1452
        %v1631 = vpop.f32.mrf.mxu0
        %v1632 = vadd.f32 %v1499, %v1631
        %v1633 = vpop.f32.mrf.mxu0
        %v1634 = vpop.f32.mrf.mxu0
        %v1635 = vadd.f32 %v1499, %v1634
        %v1636 = vpop.f32.mrf.mxu0
        %1637 = vmatprep.mubr.bf16.mxu0 0
        %1638 = vmatmul.mubr.bf16.gmra.mxu0 %v1453
        %v1639 = vpop.f32.mrf.mxu0
        %v1640 = vadd.f32 %v1499, %v1639
        %v1641 = vpop.f32.mrf.mxu0
        %v1642 = vpop.f32.mrf.mxu0
        %v1643 = vadd.f32 %v1499, %v1642
        %v1644 = vpop.f32.mrf.mxu0
        %1645 = vmatprep.mubr.bf16.mxu0 0
        %1646 = vmatmul.mubr.bf16.gmra.mxu0 %v1454
        %v1647 = vpop.f32.mrf.mxu0
        %v1648 = vadd.f32 %v1499, %v1647
        %v1649 = vpop.f32.mrf.mxu0
        %v1650 = vpop.f32.mrf.mxu0
        %v1651 = vadd.f32 %v1499, %v1650
        %v1652 = vpop.f32.mrf.mxu0
        %1653 = vmatprep.mubr.bf16.mxu0 0
        %1654 = vmatmul.mubr.bf16.gmra.mxu0 %v1455
        %v1655 = vpop.f32.mrf.mxu0
        %v1656 = vadd.f32 %v1499, %v1655
        %v1657 = vpop.f32.mrf.mxu0
        %v1658 = vpop.f32.mrf.mxu0
        %v1659 = vadd.f32 %v1499, %v1658
        %v1660 = vpop.f32.mrf.mxu0
        %1661 = vmatprep.mubr.bf16.mxu0 0
        %1662 = vmatmul.mubr.bf16.gmra.mxu0 %v1456
        %v1663 = vpop.f32.mrf.mxu0
        %v1664 = vadd.f32 %v1499, %v1663
        %v1665 = vpop.f32.mrf.mxu0
        %v1666 = vpop.f32.mrf.mxu0
        %v1667 = vadd.f32 %v1499, %v1666
        %v1668 = vpop.f32.mrf.mxu0
        %1669 = vmatprep.mubr.bf16.mxu0 0
        %1670 = vmatmul.mubr.bf16.gmra.mxu0 %v1457
        %v1671 = vpop.f32.mrf.mxu0
        %v1672 = vadd.f32 %v1499, %v1671
        %v1673 = vpop.f32.mrf.mxu0
        %v1674 = vpop.f32.mrf.mxu0
        %v1675 = vadd.f32 %v1499, %v1674
        %v1676 = vpop.f32.mrf.mxu0
        %1677 = vmatprep.mubr.bf16.mxu0 0
        %1678 = vmatmul.mubr.bf16.gmra.mxu0 %v1458
        %v1679 = vpop.f32.mrf.mxu0
        %v1680 = vadd.f32 %v1499, %v1679
        %v1681 = vpop.f32.mrf.mxu0
        %v1682 = vpop.f32.mrf.mxu0
        %v1683 = vadd.f32 %v1499, %v1682
        %v1684 = vpop.f32.mrf.mxu0
        %1685 = vmatprep.mubr.bf16.mxu0 0
        %1686 = vmatmul.mubr.bf16.gmra.mxu0 %v1459
        %v1687 = vpop.f32.mrf.mxu0
        %v1688 = vadd.f32 %v1499, %v1687
        %v1689 = vpop.f32.mrf.mxu0
        %v1690 = vpop.f32.mrf.mxu0
        %v1691 = vadd.f32 %v1499, %v1690
        %v1692 = vpop.f32.mrf.mxu0
        %1693 = vmatprep.mubr.bf16.mxu0 0
        %1694 = vmatmul.mubr.bf16.gmra.mxu0 %v1460
        %v1695 = vpop.f32.mrf.mxu0
        %v1696 = vadd.f32 %v1499, %v1695
        %v1697 = vpop.f32.mrf.mxu0
        %v1698 = vpop.f32.mrf.mxu0
        %v1699 = vadd.f32 %v1499, %v1698
        %v1700 = vpop.f32.mrf.mxu0
        %1701 = vmatprep.mubr.bf16.mxu0 0
        %1702 = vmatmul.mubr.bf16.gmra.mxu0 %v1461
        %v1703 = vpop.f32.mrf.mxu0
        %v1704 = vadd.f32 %v1499, %v1703
        %v1705 = vpop.f32.mrf.mxu0
        %v1706 = vpop.f32.mrf.mxu0
        %v1707 = vadd.f32 %v1499, %v1706
        %v1708 = vpop.f32.mrf.mxu0
        %1709 = vmatprep.mubr.bf16.mxu0 0
        %1710 = vmatmul.mubr.bf16.gmra.mxu0 %v1462
        %v1711 = vpop.f32.mrf.mxu0
        %v1712 = vadd.f32 %v1499, %v1711
        %v1713 = vpop.f32.mrf.mxu0
        %v1714 = vpop.f32.mrf.mxu0
        %v1715 = vadd.f32 %v1499, %v1714
        %v1716 = vpop.f32.mrf.mxu0
        %1717 = vmatprep.mubr.bf16.mxu0 0
        %1718 = vmatmul.mubr.bf16.gmra.mxu0 %v1463
        %v1719 = vpop.f32.mrf.mxu0
        %v1720 = vadd.f32 %v1499, %v1719
        %v1721 = vpop.f32.mrf.mxu0
        %v1722 = vpop.f32.mrf.mxu0
        %v1723 = vadd.f32 %v1499, %v1722
        %v1724 = vpop.f32.mrf.mxu0
        %1725 = vmatprep.mubr.bf16.mxu0 0
        %1726 = vmatmul.mubr.bf16.gmra.mxu0 %v1464
        %v1727 = vpop.f32.mrf.mxu0
        %v1728 = vadd.f32 %v1499, %v1727
        %v1729 = vpop.f32.mrf.mxu0
        %v1730 = vpop.f32.mrf.mxu0
        %v1731 = vadd.f32 %v1499, %v1730
        %v1732 = vpop.f32.mrf.mxu0
        %1733 = vmatprep.mubr.bf16.mxu0 0
        %1734 = vmatmul.mubr.bf16.gmra.mxu0 %v1465
        %v1735 = vpop.f32.mrf.mxu0
        %v1736 = vadd.f32 %v1499, %v1735
        %v1737 = vpop.f32.mrf.mxu0
        %v1738 = vpop.f32.mrf.mxu0
        %v1739 = vadd.f32 %v1499, %v1738
        %v1740 = vpop.f32.mrf.mxu0
        %1741 = vmatprep.mubr.bf16.mxu0 0
        %1742 = vmatmul.mubr.bf16.gmra.mxu0 %v1466
        %v1743 = vpop.f32.mrf.mxu0
        %v1744 = vadd.f32 %v1499, %v1743
        %v1745 = vpop.f32.mrf.mxu0
        %v1746 = vpop.f32.mrf.mxu0
        %v1747 = vadd.f32 %v1499, %v1746
        %v1748 = vpop.f32.mrf.mxu0
        %1749 = vmatprep.mubr.bf16.mxu0 0
        %1750 = vmatmul.mubr.bf16.gmra.mxu0 %v1467
        %v1751 = vpop.f32.mrf.mxu0
        %v1752 = vadd.f32 %v1499, %v1751
        %v1753 = vpop.f32.mrf.mxu0
        %v1754 = vpop.f32.mrf.mxu0
        %v1755 = vadd.f32 %v1499, %v1754
        %v1756 = vpop.f32.mrf.mxu0
        %1757 = vmatprep.mubr.bf16.mxu0 0
        %1758 = vmatmul.mubr.bf16.gmra.mxu0 %v1468
        %v1759 = vpop.f32.mrf.mxu0
        %v1760 = vadd.f32 %v1499, %v1759
        %v1761 = vpop.f32.mrf.mxu0
        %v1762 = vpop.f32.mrf.mxu0
        %v1763 = vadd.f32 %v1499, %v1762
        %v1764 = vpop.f32.mrf.mxu0
        %1765 = vmatprep.mubr.bf16.mxu0 0
        %1766 = vmatmul.mubr.bf16.gmra.mxu0 %v1469
        %v1767 = vpop.f32.mrf.mxu0
        %v1768 = vadd.f32 %v1499, %v1767
        %v1769 = vpop.f32.mrf.mxu0
        %v1770 = vpop.f32.mrf.mxu0
        %v1771 = vadd.f32 %v1499, %v1770
        %v1772 = vpop.f32.mrf.mxu0
        %1773 = vmatprep.mubr.bf16.mxu0 0
        %1774 = vmatmul.mubr.bf16.gmra.mxu0 %v1470
        %v1775 = vpop.f32.mrf.mxu0
        %v1776 = vadd.f32 %v1499, %v1775
        %v1777 = vpop.f32.mrf.mxu0
        %v1778 = vpop.f32.mrf.mxu0
        %v1779 = vadd.f32 %v1499, %v1778
        %v1780 = vpop.f32.mrf.mxu0
        %1781 = vmatprep.mubr.bf16.mxu0 0
        %1782 = vmatmul.mubr.bf16.gmra.mxu0 %v1471
        %v1783 = vpop.f32.mrf.mxu0
        %v1784 = vadd.f32 %v1499, %v1783
        %v1785 = vpop.f32.mrf.mxu0
        %v1786 = vpop.f32.mrf.mxu0
        %v1787 = vadd.f32 %v1499, %v1786
        %v1788 = vpop.f32.mrf.mxu0
        %1789 = vmatprep.mubr.bf16.mxu0 0
        %1790 = vmatmul.mubr.bf16.gmra.mxu0 %v1472
        %v1791 = vpop.f32.mrf.mxu0
        %v1792 = vadd.f32 %v1499, %v1791
        %v1793 = vpop.f32.mrf.mxu0
        %v1794 = vpop.f32.mrf.mxu0
        %v1795 = vadd.f32 %v1499, %v1794
        %v1796 = vpop.f32.mrf.mxu0
        %1797 = vmatprep.mubr.bf16.mxu0 0
        %1798 = vmatmul.mubr.bf16.gmra.mxu0 %v1473
        %v1799 = vpop.f32.mrf.mxu0
        %v1800 = vadd.f32 %v1499, %v1799
        %v1801 = vpop.f32.mrf.mxu0
        %v1802 = vpop.f32.mrf.mxu0
        %v1803 = vadd.f32 %v1499, %v1802
        %v1804 = vpop.f32.mrf.mxu0
        %1805 = vmatprep.mubr.bf16.mxu0 0
        %1806 = vmatmul.mubr.bf16.gmra.mxu0 %v1474
        %v1807 = vpop.f32.mrf.mxu0
        %v1808 = vadd.f32 %v1499, %v1807
        %v1809 = vpop.f32.mrf.mxu0
        %v1810 = vpop.f32.mrf.mxu0
        %v1811 = vadd.f32 %v1499, %v1810
        %v1812 = vpop.f32.mrf.mxu0
        %1813 = vmatprep.mubr.bf16.mxu0 0
        %1814 = vmatmul.mubr.bf16.gmra.mxu0 %v1475
        %v1815 = vpop.f32.mrf.mxu0
        %v1816 = vadd.f32 %v1499, %v1815
        %v1817 = vpop.f32.mrf.mxu0
        %v1818 = vpop.f32.mrf.mxu0
        %v1819 = vadd.f32 %v1499, %v1818
        %v1820 = vpop.f32.mrf.mxu0
        %1821 = vmatprep.mubr.bf16.mxu0 0
        %1822 = vmatmul.mubr.bf16.gmra.mxu0 %v1476
        %v1823 = vpop.f32.mrf.mxu0
        %v1824 = vadd.f32 %v1499, %v1823
        %v1825 = vpop.f32.mrf.mxu0
        %v1826 = vpop.f32.mrf.mxu0
        %v1827 = vadd.f32 %v1499, %v1826
        %v1828 = vpop.f32.mrf.mxu0
        %1829 = vmatprep.mubr.bf16.mxu0 0
        %1830 = vmatmul.mubr.bf16.gmra.mxu0 %v1477
        %v1831 = vpop.f32.mrf.mxu0
        %v1832 = vadd.f32 %v1499, %v1831
        %v1833 = vpop.f32.mrf.mxu0
        %v1834 = vpop.f32.mrf.mxu0
        %v1835 = vadd.f32 %v1499, %v1834
        %v1836 = vpop.f32.mrf.mxu0
        %1837 = vdwg.mxu0
        %1838 = vst [vmem:[%s280] sm:$0xff] %v1584
        %1839 = vst [vmem:[%s280 + $0x8] sm:$0xff] %v1587
        %1840 = vst [vmem:[%s280 + $0x10] sm:$0xff] %v1592
        %1841 = vst [vmem:[%s280 + $0x18] sm:$0xff] %v1595
        %1842 = vst [vmem:[%s280 + $0x20] sm:$0xff] %v1600
        %1843 = vst [vmem:[%s280 + $0x28] sm:$0xff] %v1603
        %1844 = vst [vmem:[%s280 + $0x30] sm:$0xff] %v1608
        %1845 = vst [vmem:[%s280 + $0x38] sm:$0xff] %v1611
        %1846 = vst [vmem:[%s280 + $0x40] sm:$0xff] %v1616
        %1847 = vst [vmem:[%s280 + $0x48] sm:$0xff] %v1619
        %1848 = vst [vmem:[%s280 + $0x50] sm:$0xff] %v1624
        %1849 = vst [vmem:[%s280 + $0x58] sm:$0xff] %v1627
        %1850 = vst [vmem:[%s280 + $0x60] sm:$0xff] %v1632
        %1851 = vst [vmem:[%s280 + $0x68] sm:$0xff] %v1635
        %1852 = vst [vmem:[%s280 + $0x70] sm:$0xff] %v1640
        %1853 = vst [vmem:[%s280 + $0x78] sm:$0xff] %v1643
        %1854 = vst [vmem:[%s280 + $0x80] sm:$0xff] %v1648
        %1855 = vst [vmem:[%s280 + $0x88] sm:$0xff] %v1651
        %1856 = vst [vmem:[%s280 + $0x90] sm:$0xff] %v1656
        %1857 = vst [vmem:[%s280 + $0x98] sm:$0xff] %v1659
        %1858 = vst [vmem:[%s280 + $0xa0] sm:$0xff] %v1664
        %1859 = vst [vmem:[%s280 + $0xa8] sm:$0xff] %v1667
        %1860 = vst [vmem:[%s280 + $0xb0] sm:$0xff] %v1672
        %1861 = vst [vmem:[%s280 + $0xb8] sm:$0xff] %v1675
        %1862 = vst [vmem:[%s280 + $0xc0] sm:$0xff] %v1680
        %1863 = vst [vmem:[%s280 + $0xc8] sm:$0xff] %v1683
        %1864 = vst [vmem:[%s280 + $0xd0] sm:$0xff] %v1688
        %1865 = vst [vmem:[%s280 + $0xd8] sm:$0xff] %v1691
        %1866 = vst [vmem:[%s280 + $0xe0] sm:$0xff] %v1696
        %1867 = vst [vmem:[%s280 + $0xe8] sm:$0xff] %v1699
        %1868 = vst [vmem:[%s280 + $0xf0] sm:$0xff] %v1704
        %1869 = vst [vmem:[%s280 + $0xf8] sm:$0xff] %v1707
        %1870 = vst [vmem:[%s280 + $0x100] sm:$0xff] %v1712
        %1871 = vst [vmem:[%s280 + $0x108] sm:$0xff] %v1715
        %1872 = vst [vmem:[%s280 + $0x110] sm:$0xff] %v1720
        %1873 = vst [vmem:[%s280 + $0x118] sm:$0xff] %v1723
        %1874 = vst [vmem:[%s280 + $0x120] sm:$0xff] %v1728
        %1875 = vst [vmem:[%s280 + $0x128] sm:$0xff] %v1731
        %1876 = vst [vmem:[%s280 + $0x130] sm:$0xff] %v1736
        %1877 = vst [vmem:[%s280 + $0x138] sm:$0xff] %v1739
        %1878 = vst [vmem:[%s280 + $0x140] sm:$0xff] %v1744
        %1879 = vst [vmem:[%s280 + $0x148] sm:$0xff] %v1747
        %1880 = vst [vmem:[%s280 + $0x150] sm:$0xff] %v1752
        %1881 = vst [vmem:[%s280 + $0x158] sm:$0xff] %v1755
        %1882 = vst [vmem:[%s280 + $0x160] sm:$0xff] %v1760
        %1883 = vst [vmem:[%s280 + $0x168] sm:$0xff] %v1763
        %1884 = vst [vmem:[%s280 + $0x170] sm:$0xff] %v1768
        %1885 = vst [vmem:[%s280 + $0x178] sm:$0xff] %v1771
        %1886 = vst [vmem:[%s280 + $0x180] sm:$0xff] %v1776
        %1887 = vst [vmem:[%s280 + $0x188] sm:$0xff] %v1779
        %1888 = vst [vmem:[%s280 + $0x190] sm:$0xff] %v1784
        %1889 = vst [vmem:[%s280 + $0x198] sm:$0xff] %v1787
        %1890 = vst [vmem:[%s280 + $0x1a0] sm:$0xff] %v1792
        %1891 = vst [vmem:[%s280 + $0x1a8] sm:$0xff] %v1795
        %1892 = vst [vmem:[%s280 + $0x1b0] sm:$0xff] %v1800
        %1893 = vst [vmem:[%s280 + $0x1b8] sm:$0xff] %v1803
        %1894 = vst [vmem:[%s280 + $0x1c0] sm:$0xff] %v1808
        %1895 = vst [vmem:[%s280 + $0x1c8] sm:$0xff] %v1811
        %1896 = vst [vmem:[%s280 + $0x1d0] sm:$0xff] %v1816
        %1897 = vst [vmem:[%s280 + $0x1d8] sm:$0xff] %v1819
        %1898 = vst [vmem:[%s280 + $0x1e0] sm:$0xff] %v1824
        %1899 = vst [vmem:[%s280 + $0x1e8] sm:$0xff] %v1827
        %1900 = vst [vmem:[%s280 + $0x1f0] sm:$0xff] %v1832
        %1901 = vst [vmem:[%s280 + $0x1f8] sm:$0xff] %v1835
        %s1902 = sand.u32 %s178, 1
        %s1903 = sand.u32 %s178, 1
        %s1904 = smul.addr %s1903, 512
        %s1905 = scalar_lea.vmem [#allocation2], %s1904
        // Predicated region
        $region49: #{mlp_forward.1} parent=47 // pred_check
          %p1906 = pneg %p188
        $region50: #{mlp_forward.1} parent=47 // pred_check_branch
          %1908 = sbr.rel (%p1906) target = $region52
        $region51: #{mlp_forward.1} parent=47 // pred_region
          %s1909 = smul.u32 64, %s18
          %s1910 = ssub.s32 150, %s1909
          %p1911 = scmp.lt.s32.totalorder %s1910, 64
          %s1912 = scalar_select %p1911, %s1910, 64
          %s1913 = smul.u32 128, %s1912
          %p1914 = scmp.ne.s32.totalorder 0, %s1913
          %s1915 = smul.addr %s1909, 8
          %s1916 = scalar_lea.vmem %s7, %s1915
          // Predicated region
          $region53: #{mlp_forward.1} parent=51 // pred_check
            %p1917 = pneg %p1914
          $region54: #{mlp_forward.1} parent=51 // pred_check_branch
            %1919 = sbr.rel (%p1917) target = $region56
          $region55: #{mlp_forward.1} parent=51 // pred_region
            // Predicated region
            $region57: #{mlp_forward.1} parent=55 // pred_check
              _
            $region58: #{mlp_forward.1} parent=55 // pred_check_branch
              %1921 = sbr.rel (0) target = $region60
            $region59: #{mlp_forward.1} parent=55 // pred_region
              // Predicated region
              $region79: #{mlp_forward.1} parent=59 // pred_check
                _
              $region80: #{mlp_forward.1} parent=59 // pred_check_branch
                %2097 = sbr.rel (0) target = $region82
              $region81: #{mlp_forward.1} parent=59 // pred_region
                %s2098 = sshrl.u32 %s1912, 6
                // While loop
                $region83: #{mlp_forward.1} parent=81 // loop_pre_header
                  _
                $region84: #{mlp_forward.1} parent=81 // loop_header
                  %s2100 = sphi 0, %s2102
                  %p2101 = scmp.ge.s32.totalorder %s2100, %s2098
                  %s2105 = sphi 0, %s2238
                  %s2106 = sphi %s1905, %s2241
                  %s2107 = sphi %s1916, %s2242
                $region85: #{mlp_forward.1} parent=81 // loop_header_branch
                  %2104 = sbr.rel (%p2101) target = $region89
                $region86: #{mlp_forward.1} parent=81 // loop_body
                  %v2108 = vld [vmem:[%s2106] sm:$0xff]
                  %2109 = vst [vmem:[%s2107] sm:$0xff] %v2108
                  %v2110 = vld [vmem:[%s2106 + $0x8] sm:$0xff]
                  %2111 = vst [vmem:[%s2107 + $0x8] sm:$0xff] %v2110
                  %v2112 = vld [vmem:[%s2106 + $0x10] sm:$0xff]
                  %2113 = vst [vmem:[%s2107 + $0x10] sm:$0xff] %v2112
                  %v2114 = vld [vmem:[%s2106 + $0x18] sm:$0xff]
                  %2115 = vst [vmem:[%s2107 + $0x18] sm:$0xff] %v2114
                  %v2116 = vld [vmem:[%s2106 + $0x20] sm:$0xff]
                  %2117 = vst [vmem:[%s2107 + $0x20] sm:$0xff] %v2116
                  %v2118 = vld [vmem:[%s2106 + $0x28] sm:$0xff]
                  %2119 = vst [vmem:[%s2107 + $0x28] sm:$0xff] %v2118
                  %v2120 = vld [vmem:[%s2106 + $0x30] sm:$0xff]
                  %2121 = vst [vmem:[%s2107 + $0x30] sm:$0xff] %v2120
                  %v2122 = vld [vmem:[%s2106 + $0x38] sm:$0xff]
                  %2123 = vst [vmem:[%s2107 + $0x38] sm:$0xff] %v2122
                  %v2124 = vld [vmem:[%s2106 + $0x40] sm:$0xff]
                  %2125 = vst [vmem:[%s2107 + $0x40] sm:$0xff] %v2124
                  %v2126 = vld [vmem:[%s2106 + $0x48] sm:$0xff]
                  %2127 = vst [vmem:[%s2107 + $0x48] sm:$0xff] %v2126
                  %v2128 = vld [vmem:[%s2106 + $0x50] sm:$0xff]
                  %2129 = vst [vmem:[%s2107 + $0x50] sm:$0xff] %v2128
                  %v2130 = vld [vmem:[%s2106 + $0x58] sm:$0xff]
                  %2131 = vst [vmem:[%s2107 + $0x58] sm:$0xff] %v2130
                  %v2132 = vld [vmem:[%s2106 + $0x60] sm:$0xff]
                  %2133 = vst [vmem:[%s2107 + $0x60] sm:$0xff] %v2132
                  %v2134 = vld [vmem:[%s2106 + $0x68] sm:$0xff]
                  %2135 = vst [vmem:[%s2107 + $0x68] sm:$0xff] %v2134
                  %v2136 = vld [vmem:[%s2106 + $0x70] sm:$0xff]
                  %2137 = vst [vmem:[%s2107 + $0x70] sm:$0xff] %v2136
                  %v2138 = vld [vmem:[%s2106 + $0x78] sm:$0xff]
                  %2139 = vst [vmem:[%s2107 + $0x78] sm:$0xff] %v2138
                  %v2140 = vld [vmem:[%s2106 + $0x80] sm:$0xff]
                  %2141 = vst [vmem:[%s2107 + $0x80] sm:$0xff] %v2140
                  %v2142 = vld [vmem:[%s2106 + $0x88] sm:$0xff]
                  %2143 = vst [vmem:[%s2107 + $0x88] sm:$0xff] %v2142
                  %v2144 = vld [vmem:[%s2106 + $0x90] sm:$0xff]
                  %2145 = vst [vmem:[%s2107 + $0x90] sm:$0xff] %v2144
                  %v2146 = vld [vmem:[%s2106 + $0x98] sm:$0xff]
                  %2147 = vst [vmem:[%s2107 + $0x98] sm:$0xff] %v2146
                  %v2148 = vld [vmem:[%s2106 + $0xa0] sm:$0xff]
                  %2149 = vst [vmem:[%s2107 + $0xa0] sm:$0xff] %v2148
                  %v2150 = vld [vmem:[%s2106 + $0xa8] sm:$0xff]
                  %2151 = vst [vmem:[%s2107 + $0xa8] sm:$0xff] %v2150
                  %v2152 = vld [vmem:[%s2106 + $0xb0] sm:$0xff]
                  %2153 = vst [vmem:[%s2107 + $0xb0] sm:$0xff] %v2152
                  %v2154 = vld [vmem:[%s2106 + $0xb8] sm:$0xff]
                  %2155 = vst [vmem:[%s2107 + $0xb8] sm:$0xff] %v2154
                  %v2156 = vld [vmem:[%s2106 + $0xc0] sm:$0xff]
                  %2157 = vst [vmem:[%s2107 + $0xc0] sm:$0xff] %v2156
                  %v2158 = vld [vmem:[%s2106 + $0xc8] sm:$0xff]
                  %2159 = vst [vmem:[%s2107 + $0xc8] sm:$0xff] %v2158
                  %v2160 = vld [vmem:[%s2106 + $0xd0] sm:$0xff]
                  %2161 = vst [vmem:[%s2107 + $0xd0] sm:$0xff] %v2160
                  %v2162 = vld [vmem:[%s2106 + $0xd8] sm:$0xff]
                  %2163 = vst [vmem:[%s2107 + $0xd8] sm:$0xff] %v2162
                  %v2164 = vld [vmem:[%s2106 + $0xe0] sm:$0xff]
                  %2165 = vst [vmem:[%s2107 + $0xe0] sm:$0xff] %v2164
                  %v2166 = vld [vmem:[%s2106 + $0xe8] sm:$0xff]
                  %2167 = vst [vmem:[%s2107 + $0xe8] sm:$0xff] %v2166
                  %v2168 = vld [vmem:[%s2106 + $0xf0] sm:$0xff]
                  %2169 = vst [vmem:[%s2107 + $0xf0] sm:$0xff] %v2168
                  %v2170 = vld [vmem:[%s2106 + $0xf8] sm:$0xff]
                  %2171 = vst [vmem:[%s2107 + $0xf8] sm:$0xff] %v2170
                  %v2172 = vld [vmem:[%s2106 + $0x100] sm:$0xff]
                  %2173 = vst [vmem:[%s2107 + $0x100] sm:$0xff] %v2172
                  %v2174 = vld [vmem:[%s2106 + $0x108] sm:$0xff]
                  %2175 = vst [vmem:[%s2107 + $0x108] sm:$0xff] %v2174
                  %v2176 = vld [vmem:[%s2106 + $0x110] sm:$0xff]
                  %2177 = vst [vmem:[%s2107 + $0x110] sm:$0xff] %v2176
                  %v2178 = vld [vmem:[%s2106 + $0x118] sm:$0xff]
                  %2179 = vst [vmem:[%s2107 + $0x118] sm:$0xff] %v2178
                  %v2180 = vld [vmem:[%s2106 + $0x120] sm:$0xff]
                  %2181 = vst [vmem:[%s2107 + $0x120] sm:$0xff] %v2180
                  %v2182 = vld [vmem:[%s2106 + $0x128] sm:$0xff]
                  %2183 = vst [vmem:[%s2107 + $0x128] sm:$0xff] %v2182
                  %v2184 = vld [vmem:[%s2106 + $0x130] sm:$0xff]
                  %2185 = vst [vmem:[%s2107 + $0x130] sm:$0xff] %v2184
                  %v2186 = vld [vmem:[%s2106 + $0x138] sm:$0xff]
                  %2187 = vst [vmem:[%s2107 + $0x138] sm:$0xff] %v2186
                  %v2188 = vld [vmem:[%s2106 + $0x140] sm:$0xff]
                  %2189 = vst [vmem:[%s2107 + $0x140] sm:$0xff] %v2188
                  %v2190 = vld [vmem:[%s2106 + $0x148] sm:$0xff]
                  %2191 = vst [vmem:[%s2107 + $0x148] sm:$0xff] %v2190
                  %v2192 = vld [vmem:[%s2106 + $0x150] sm:$0xff]
                  %2193 = vst [vmem:[%s2107 + $0x150] sm:$0xff] %v2192
                  %v2194 = vld [vmem:[%s2106 + $0x158] sm:$0xff]
                  %2195 = vst [vmem:[%s2107 + $0x158] sm:$0xff] %v2194
                  %v2196 = vld [vmem:[%s2106 + $0x160] sm:$0xff]
                  %2197 = vst [vmem:[%s2107 + $0x160] sm:$0xff] %v2196
                  %v2198 = vld [vmem:[%s2106 + $0x168] sm:$0xff]
                  %2199 = vst [vmem:[%s2107 + $0x168] sm:$0xff] %v2198
                  %v2200 = vld [vmem:[%s2106 + $0x170] sm:$0xff]
                  %2201 = vst [vmem:[%s2107 + $0x170] sm:$0xff] %v2200
                  %v2202 = vld [vmem:[%s2106 + $0x178] sm:$0xff]
                  %2203 = vst [vmem:[%s2107 + $0x178] sm:$0xff] %v2202
                  %v2204 = vld [vmem:[%s2106 + $0x180] sm:$0xff]
                  %2205 = vst [vmem:[%s2107 + $0x180] sm:$0xff] %v2204
                  %v2206 = vld [vmem:[%s2106 + $0x188] sm:$0xff]
                  %2207 = vst [vmem:[%s2107 + $0x188] sm:$0xff] %v2206
                  %v2208 = vld [vmem:[%s2106 + $0x190] sm:$0xff]
                  %2209 = vst [vmem:[%s2107 + $0x190] sm:$0xff] %v2208
                  %v2210 = vld [vmem:[%s2106 + $0x198] sm:$0xff]
                  %2211 = vst [vmem:[%s2107 + $0x198] sm:$0xff] %v2210
                  %v2212 = vld [vmem:[%s2106 + $0x1a0] sm:$0xff]
                  %2213 = vst [vmem:[%s2107 + $0x1a0] sm:$0xff] %v2212
                  %v2214 = vld [vmem:[%s2106 + $0x1a8] sm:$0xff]
                  %2215 = vst [vmem:[%s2107 + $0x1a8] sm:$0xff] %v2214
                  %v2216 = vld [vmem:[%s2106 + $0x1b0] sm:$0xff]
                  %2217 = vst [vmem:[%s2107 + $0x1b0] sm:$0xff] %v2216
                  %v2218 = vld [vmem:[%s2106 + $0x1b8] sm:$0xff]
                  %2219 = vst [vmem:[%s2107 + $0x1b8] sm:$0xff] %v2218
                  %v2220 = vld [vmem:[%s2106 + $0x1c0] sm:$0xff]
                  %2221 = vst [vmem:[%s2107 + $0x1c0] sm:$0xff] %v2220
                  %v2222 = vld [vmem:[%s2106 + $0x1c8] sm:$0xff]
                  %2223 = vst [vmem:[%s2107 + $0x1c8] sm:$0xff] %v2222
                  %v2224 = vld [vmem:[%s2106 + $0x1d0] sm:$0xff]
                  %2225 = vst [vmem:[%s2107 + $0x1d0] sm:$0xff] %v2224
                  %v2226 = vld [vmem:[%s2106 + $0x1d8] sm:$0xff]
                  %2227 = vst [vmem:[%s2107 + $0x1d8] sm:$0xff] %v2226
                  %v2228 = vld [vmem:[%s2106 + $0x1e0] sm:$0xff]
                  %2229 = vst [vmem:[%s2107 + $0x1e0] sm:$0xff] %v2228
                  %v2230 = vld [vmem:[%s2106 + $0x1e8] sm:$0xff]
                  %2231 = vst [vmem:[%s2107 + $0x1e8] sm:$0xff] %v2230
                  %v2232 = vld [vmem:[%s2106 + $0x1f0] sm:$0xff]
                  %2233 = vst [vmem:[%s2107 + $0x1f0] sm:$0xff] %v2232
                  %v2234 = vld [vmem:[%s2106 + $0x1f8] sm:$0xff]
                  %2235 = vst [vmem:[%s2107 + $0x1f8] sm:$0xff] %v2234
                  %s2236 = sadd.s32 1, %s2105
                  %p2237 = scmp.ge.s32.totalorder %s2236, %s2098
                  %s2238 = scalar_select %p2237, 0, %s2236
                  %s2239 = smul.u32 %s2238, 512
                  %s2240 = smul.u32 %s2238, 512
                  %s2241 = scalar_lea.vmem %s1905, %s2239 [#allocation2]
                  %s2242 = scalar_lea.vmem %s1916, %s2240
                $region87: #{mlp_forward.1} parent=81 // loop_footer
                  %s2102 = sadd.s32 %s2100, 1
                $region88: #{mlp_forward.1} parent=81 // loop_footer_branch
                  %2099 = sbr.rel target = $region84
                $region89: #{mlp_forward.1} parent=81 // loop_exit
                  _
                %s2243 = sshrl.u32 %s1912, 6
                %s2244 = sand.u32 %s1912, 63
                %s2245 = smul.u32 %s2243, 64
                %s2246 = smul.u32 8, %s2245
                %s2247 = scalar_lea.vmem %s1905, %s2246 [#allocation2]
                %s2248 = smul.u32 8, %s2245
                %s2249 = scalar_lea.vmem %s1916, %s2248
                // While loop
                $region90: #{mlp_forward.1} parent=81 // loop_pre_header
                  _
                $region91: #{mlp_forward.1} parent=81 // loop_header
                  %s2251 = sphi 0, %s2253
                  %p2252 = scmp.ge.s32.totalorder %s2251, %s2244
                  %s2256 = sphi 0, %s2263
                  %s2257 = sphi %s2247, %s2266
                  %s2258 = sphi %s2249, %s2267
                $region92: #{mlp_forward.1} parent=81 // loop_header_branch
                  %2255 = sbr.rel (%p2252) target = $region96
                $region93: #{mlp_forward.1} parent=81 // loop_body
                  %v2259 = vld [vmem:[%s2257] sm:$0xff]
                  %2260 = vst [vmem:[%s2258] sm:$0xff] %v2259
                  %s2261 = sadd.s32 1, %s2256
                  %p2262 = scmp.ge.s32.totalorder %s2261, %s2244
                  %s2263 = scalar_select %p2262, 0, %s2261
                  %s2264 = smul.u32 %s2263, 8
                  %s2265 = smul.u32 %s2263, 8
                  %s2266 = scalar_lea.vmem %s2247, %s2264 [#allocation2]
                  %s2267 = scalar_lea.vmem %s2249, %s2265
                $region94: #{mlp_forward.1} parent=81 // loop_footer
                  %s2253 = sadd.s32 %s2251, 1
                $region95: #{mlp_forward.1} parent=81 // loop_footer_branch
                  %2250 = sbr.rel target = $region91
                $region96: #{mlp_forward.1} parent=81 // loop_exit
                  _
              $region82: #{mlp_forward.1} parent=59 // pred_fallthru
                _
              // Predicated region
              $region97: #{mlp_forward.1} parent=59 // pred_check
                _
              $region98: #{mlp_forward.1} parent=59 // pred_check_branch
                %2269 = sbr.rel target = $region100
              $region99: #{mlp_forward.1} parent=59 // pred_region
                _
              $region100: #{mlp_forward.1} parent=59 // pred_fallthru
                _
            $region60: #{mlp_forward.1} parent=55 // pred_fallthru
              _
            // Predicated region
            $region61: #{mlp_forward.1} parent=55 // pred_check
              _
            $region62: #{mlp_forward.1} parent=55 // pred_check_branch
              %1923 = sbr.rel target = $region64
            $region63: #{mlp_forward.1} parent=55 // pred_region
              %s1925 = ssub.s32 256, 1
              %s1926 = sshrl.u32 %s1912, 6
              // While loop
              $region65: #{mlp_forward.1} parent=63 // loop_pre_header
                _
              $region66: #{mlp_forward.1} parent=63 // loop_header
                %s1928 = sphi 0, %s1930
                %p1929 = scmp.ge.s32.totalorder %s1928, %s1926
                %s1933 = sphi 0, %s2066
                %s1934 = sphi %s1905, %s2069
                %s1935 = sphi %s1916, %s2070
              $region67: #{mlp_forward.1} parent=63 // loop_header_branch
                %1932 = sbr.rel (%p1929) target = $region71
              $region68: #{mlp_forward.1} parent=63 // loop_body
                %v1936 = vld [vmem:[%s1934] sm:%s1925]
                %1937 = vst [vmem:[%s1935] sm:%s1925] %v1936
                %v1938 = vld [vmem:[%s1934 + $0x8] sm:%s1925]
                %1939 = vst [vmem:[%s1935 + $0x8] sm:%s1925] %v1938
                %v1940 = vld [vmem:[%s1934 + $0x10] sm:%s1925]
                %1941 = vst [vmem:[%s1935 + $0x10] sm:%s1925] %v1940
                %v1942 = vld [vmem:[%s1934 + $0x18] sm:%s1925]
                %1943 = vst [vmem:[%s1935 + $0x18] sm:%s1925] %v1942
                %v1944 = vld [vmem:[%s1934 + $0x20] sm:%s1925]
                %1945 = vst [vmem:[%s1935 + $0x20] sm:%s1925] %v1944
                %v1946 = vld [vmem:[%s1934 + $0x28] sm:%s1925]
                %1947 = vst [vmem:[%s1935 + $0x28] sm:%s1925] %v1946
                %v1948 = vld [vmem:[%s1934 + $0x30] sm:%s1925]
                %1949 = vst [vmem:[%s1935 + $0x30] sm:%s1925] %v1948
                %v1950 = vld [vmem:[%s1934 + $0x38] sm:%s1925]
                %1951 = vst [vmem:[%s1935 + $0x38] sm:%s1925] %v1950
                %v1952 = vld [vmem:[%s1934 + $0x40] sm:%s1925]
                %1953 = vst [vmem:[%s1935 + $0x40] sm:%s1925] %v1952
                %v1954 = vld [vmem:[%s1934 + $0x48] sm:%s1925]
                %1955 = vst [vmem:[%s1935 + $0x48] sm:%s1925] %v1954
                %v1956 = vld [vmem:[%s1934 + $0x50] sm:%s1925]
                %1957 = vst [vmem:[%s1935 + $0x50] sm:%s1925] %v1956
                %v1958 = vld [vmem:[%s1934 + $0x58] sm:%s1925]
                %1959 = vst [vmem:[%s1935 + $0x58] sm:%s1925] %v1958
                %v1960 = vld [vmem:[%s1934 + $0x60] sm:%s1925]
                %1961 = vst [vmem:[%s1935 + $0x60] sm:%s1925] %v1960
                %v1962 = vld [vmem:[%s1934 + $0x68] sm:%s1925]
                %1963 = vst [vmem:[%s1935 + $0x68] sm:%s1925] %v1962
                %v1964 = vld [vmem:[%s1934 + $0x70] sm:%s1925]
                %1965 = vst [vmem:[%s1935 + $0x70] sm:%s1925] %v1964
                %v1966 = vld [vmem:[%s1934 + $0x78] sm:%s1925]
                %1967 = vst [vmem:[%s1935 + $0x78] sm:%s1925] %v1966
                %v1968 = vld [vmem:[%s1934 + $0x80] sm:%s1925]
                %1969 = vst [vmem:[%s1935 + $0x80] sm:%s1925] %v1968
                %v1970 = vld [vmem:[%s1934 + $0x88] sm:%s1925]
                %1971 = vst [vmem:[%s1935 + $0x88] sm:%s1925] %v1970
                %v1972 = vld [vmem:[%s1934 + $0x90] sm:%s1925]
                %1973 = vst [vmem:[%s1935 + $0x90] sm:%s1925] %v1972
                %v1974 = vld [vmem:[%s1934 + $0x98] sm:%s1925]
                %1975 = vst [vmem:[%s1935 + $0x98] sm:%s1925] %v1974
                %v1976 = vld [vmem:[%s1934 + $0xa0] sm:%s1925]
                %1977 = vst [vmem:[%s1935 + $0xa0] sm:%s1925] %v1976
                %v1978 = vld [vmem:[%s1934 + $0xa8] sm:%s1925]
                %1979 = vst [vmem:[%s1935 + $0xa8] sm:%s1925] %v1978
                %v1980 = vld [vmem:[%s1934 + $0xb0] sm:%s1925]
                %1981 = vst [vmem:[%s1935 + $0xb0] sm:%s1925] %v1980
                %v1982 = vld [vmem:[%s1934 + $0xb8] sm:%s1925]
                %1983 = vst [vmem:[%s1935 + $0xb8] sm:%s1925] %v1982
                %v1984 = vld [vmem:[%s1934 + $0xc0] sm:%s1925]
                %1985 = vst [vmem:[%s1935 + $0xc0] sm:%s1925] %v1984
                %v1986 = vld [vmem:[%s1934 + $0xc8] sm:%s1925]
                %1987 = vst [vmem:[%s1935 + $0xc8] sm:%s1925] %v1986
                %v1988 = vld [vmem:[%s1934 + $0xd0] sm:%s1925]
                %1989 = vst [vmem:[%s1935 + $0xd0] sm:%s1925] %v1988
                %v1990 = vld [vmem:[%s1934 + $0xd8] sm:%s1925]
                %1991 = vst [vmem:[%s1935 + $0xd8] sm:%s1925] %v1990
                %v1992 = vld [vmem:[%s1934 + $0xe0] sm:%s1925]
                %1993 = vst [vmem:[%s1935 + $0xe0] sm:%s1925] %v1992
                %v1994 = vld [vmem:[%s1934 + $0xe8] sm:%s1925]
                %1995 = vst [vmem:[%s1935 + $0xe8] sm:%s1925] %v1994
                %v1996 = vld [vmem:[%s1934 + $0xf0] sm:%s1925]
                %1997 = vst [vmem:[%s1935 + $0xf0] sm:%s1925] %v1996
                %v1998 = vld [vmem:[%s1934 + $0xf8] sm:%s1925]
                %1999 = vst [vmem:[%s1935 + $0xf8] sm:%s1925] %v1998
                %v2000 = vld [vmem:[%s1934 + $0x100] sm:%s1925]
                %2001 = vst [vmem:[%s1935 + $0x100] sm:%s1925] %v2000
                %v2002 = vld [vmem:[%s1934 + $0x108] sm:%s1925]
                %2003 = vst [vmem:[%s1935 + $0x108] sm:%s1925] %v2002
                %v2004 = vld [vmem:[%s1934 + $0x110] sm:%s1925]
                %2005 = vst [vmem:[%s1935 + $0x110] sm:%s1925] %v2004
                %v2006 = vld [vmem:[%s1934 + $0x118] sm:%s1925]
                %2007 = vst [vmem:[%s1935 + $0x118] sm:%s1925] %v2006
                %v2008 = vld [vmem:[%s1934 + $0x120] sm:%s1925]
                %2009 = vst [vmem:[%s1935 + $0x120] sm:%s1925] %v2008
                %v2010 = vld [vmem:[%s1934 + $0x128] sm:%s1925]
                %2011 = vst [vmem:[%s1935 + $0x128] sm:%s1925] %v2010
                %v2012 = vld [vmem:[%s1934 + $0x130] sm:%s1925]
                %2013 = vst [vmem:[%s1935 + $0x130] sm:%s1925] %v2012
                %v2014 = vld [vmem:[%s1934 + $0x138] sm:%s1925]
                %2015 = vst [vmem:[%s1935 + $0x138] sm:%s1925] %v2014
                %v2016 = vld [vmem:[%s1934 + $0x140] sm:%s1925]
                %2017 = vst [vmem:[%s1935 + $0x140] sm:%s1925] %v2016
                %v2018 = vld [vmem:[%s1934 + $0x148] sm:%s1925]
                %2019 = vst [vmem:[%s1935 + $0x148] sm:%s1925] %v2018
                %v2020 = vld [vmem:[%s1934 + $0x150] sm:%s1925]
                %2021 = vst [vmem:[%s1935 + $0x150] sm:%s1925] %v2020
                %v2022 = vld [vmem:[%s1934 + $0x158] sm:%s1925]
                %2023 = vst [vmem:[%s1935 + $0x158] sm:%s1925] %v2022
                %v2024 = vld [vmem:[%s1934 + $0x160] sm:%s1925]
                %2025 = vst [vmem:[%s1935 + $0x160] sm:%s1925] %v2024
                %v2026 = vld [vmem:[%s1934 + $0x168] sm:%s1925]
                %2027 = vst [vmem:[%s1935 + $0x168] sm:%s1925] %v2026
                %v2028 = vld [vmem:[%s1934 + $0x170] sm:%s1925]
                %2029 = vst [vmem:[%s1935 + $0x170] sm:%s1925] %v2028
                %v2030 = vld [vmem:[%s1934 + $0x178] sm:%s1925]
                %2031 = vst [vmem:[%s1935 + $0x178] sm:%s1925] %v2030
                %v2032 = vld [vmem:[%s1934 + $0x180] sm:%s1925]
                %2033 = vst [vmem:[%s1935 + $0x180] sm:%s1925] %v2032
                %v2034 = vld [vmem:[%s1934 + $0x188] sm:%s1925]
                %2035 = vst [vmem:[%s1935 + $0x188] sm:%s1925] %v2034
                %v2036 = vld [vmem:[%s1934 + $0x190] sm:%s1925]
                %2037 = vst [vmem:[%s1935 + $0x190] sm:%s1925] %v2036
                %v2038 = vld [vmem:[%s1934 + $0x198] sm:%s1925]
                %2039 = vst [vmem:[%s1935 + $0x198] sm:%s1925] %v2038
                %v2040 = vld [vmem:[%s1934 + $0x1a0] sm:%s1925]
                %2041 = vst [vmem:[%s1935 + $0x1a0] sm:%s1925] %v2040
                %v2042 = vld [vmem:[%s1934 + $0x1a8] sm:%s1925]
                %2043 = vst [vmem:[%s1935 + $0x1a8] sm:%s1925] %v2042
                %v2044 = vld [vmem:[%s1934 + $0x1b0] sm:%s1925]
                %2045 = vst [vmem:[%s1935 + $0x1b0] sm:%s1925] %v2044
                %v2046 = vld [vmem:[%s1934 + $0x1b8] sm:%s1925]
                %2047 = vst [vmem:[%s1935 + $0x1b8] sm:%s1925] %v2046
                %v2048 = vld [vmem:[%s1934 + $0x1c0] sm:%s1925]
                %2049 = vst [vmem:[%s1935 + $0x1c0] sm:%s1925] %v2048
                %v2050 = vld [vmem:[%s1934 + $0x1c8] sm:%s1925]
                %2051 = vst [vmem:[%s1935 + $0x1c8] sm:%s1925] %v2050
                %v2052 = vld [vmem:[%s1934 + $0x1d0] sm:%s1925]
                %2053 = vst [vmem:[%s1935 + $0x1d0] sm:%s1925] %v2052
                %v2054 = vld [vmem:[%s1934 + $0x1d8] sm:%s1925]
                %2055 = vst [vmem:[%s1935 + $0x1d8] sm:%s1925] %v2054
                %v2056 = vld [vmem:[%s1934 + $0x1e0] sm:%s1925]
                %2057 = vst [vmem:[%s1935 + $0x1e0] sm:%s1925] %v2056
                %v2058 = vld [vmem:[%s1934 + $0x1e8] sm:%s1925]
                %2059 = vst [vmem:[%s1935 + $0x1e8] sm:%s1925] %v2058
                %v2060 = vld [vmem:[%s1934 + $0x1f0] sm:%s1925]
                %2061 = vst [vmem:[%s1935 + $0x1f0] sm:%s1925] %v2060
                %v2062 = vld [vmem:[%s1934 + $0x1f8] sm:%s1925]
                %2063 = vst [vmem:[%s1935 + $0x1f8] sm:%s1925] %v2062
                %s2064 = sadd.s32 1, %s1933
                %p2065 = scmp.ge.s32.totalorder %s2064, %s1926
                %s2066 = scalar_select %p2065, 0, %s2064
                %s2067 = smul.u32 %s2066, 512
                %s2068 = smul.u32 %s2066, 512
                %s2069 = scalar_lea.vmem %s1905, %s2067 [#allocation2]
                %s2070 = scalar_lea.vmem %s1916, %s2068
              $region69: #{mlp_forward.1} parent=63 // loop_footer
                %s1930 = sadd.s32 %s1928, 1
              $region70: #{mlp_forward.1} parent=63 // loop_footer_branch
                %1927 = sbr.rel target = $region66
              $region71: #{mlp_forward.1} parent=63 // loop_exit
                _
              %s2071 = sshrl.u32 %s1912, 6
              %s2072 = sand.u32 %s1912, 63
              %s2073 = smul.u32 %s2071, 64
              %s2074 = smul.u32 8, %s2073
              %s2075 = scalar_lea.vmem %s1905, %s2074 [#allocation2]
              %s2076 = smul.u32 8, %s2073
              %s2077 = scalar_lea.vmem %s1916, %s2076
              // While loop
              $region72: #{mlp_forward.1} parent=63 // loop_pre_header
                _
              $region73: #{mlp_forward.1} parent=63 // loop_header
                %s2079 = sphi 0, %s2081
                %p2080 = scmp.ge.s32.totalorder %s2079, %s2072
                %s2084 = sphi 0, %s2091
                %s2085 = sphi %s2075, %s2094
                %s2086 = sphi %s2077, %s2095
              $region74: #{mlp_forward.1} parent=63 // loop_header_branch
                %2083 = sbr.rel (%p2080) target = $region78
              $region75: #{mlp_forward.1} parent=63 // loop_body
                %v2087 = vld [vmem:[%s2085] sm:%s1925]
                %2088 = vst [vmem:[%s2086] sm:%s1925] %v2087
                %s2089 = sadd.s32 1, %s2084
                %p2090 = scmp.ge.s32.totalorder %s2089, %s2072
                %s2091 = scalar_select %p2090, 0, %s2089
                %s2092 = smul.u32 %s2091, 8
                %s2093 = smul.u32 %s2091, 8
                %s2094 = scalar_lea.vmem %s2075, %s2092 [#allocation2]
                %s2095 = scalar_lea.vmem %s2077, %s2093
              $region76: #{mlp_forward.1} parent=63 // loop_footer
                %s2081 = sadd.s32 %s2079, 1
              $region77: #{mlp_forward.1} parent=63 // loop_footer_branch
                %2078 = sbr.rel target = $region73
              $region78: #{mlp_forward.1} parent=63 // loop_exit
                _
            $region64: #{mlp_forward.1} parent=55 // pred_fallthru
              _
          $region56: #{mlp_forward.1} parent=51 // pred_fallthru
            _
          %2270 = vnop
        $region52: #{mlp_forward.1} parent=47 // pred_fallthru
          _
      $region48: #{mlp_forward.1} parent=5 // pred_fallthru
        _
      %p2271 = scmp.le.s32.totalorder 2, %s13
      // Predicated region
      $region101: #{mlp_forward.1} parent=5 // pred_check
        %p2272 = pneg %p2271
      $region102: #{mlp_forward.1} parent=5 // pred_check_branch
        %2274 = sbr.rel (%p2272) target = $region104
      $region103: #{mlp_forward.1} parent=5 // pred_region
        %s2275 = ssub.s32 %s13, 2
        // Predicated region
        $region105: #{mlp_forward.1} parent=103 // pred_check
          %p2276 = pneg %p194
        $region106: #{mlp_forward.1} parent=103 // pred_check_branch
          %2278 = sbr.rel (%p2276) target = $region108
        $region107: #{mlp_forward.1} parent=103 // pred_region
          %s2279 = sand.u32 %s179, 1
          %s2280 = sand.u32 %s179, 1
          %s2281 = smul.addr %s2280, 512
          %s2282 = scalar_lea.vmem [#allocation2], %s2281
        $region108: #{mlp_forward.1} parent=103 // pred_fallthru
          _
      $region104: #{mlp_forward.1} parent=5 // pred_fallthru
        _
    $region6: #{mlp_forward.1} parent=1 // loop_footer
      %s17 = sadd.s32 1, %s13
    $region7: #{mlp_forward.1} parent=1 // loop_footer_branch
      %12 = sbr.rel target = $region3
    $region8: #{mlp_forward.1} parent=1 // loop_exit
      _

</llo_original>
